<compile_context>
chip_gen: v7x
topology: tpu7x:2x2x1
jax: 0.10.0
libtpu: 0.0.40
codegen_flags: <defaults>
</compile_context>

<pallas_src>
import jax
import jax.numpy as jnp
import numpy as np
from jax.experimental import pallas as pl
from jax.experimental.pallas import tpu as pltpu

_EPS = 1e-5  # nn.GroupNorm default eps


# ----------------------------------------------------------------------------
# Layer bookkeeping (compile-time constants)
# ----------------------------------------------------------------------------
def _layer_dims(n_feat):
    """(C_out, C_in) per conv layer, with aggre conv_2 already split."""
    C = n_feat
    return (
        (C, C), (C, C), (C, C),   # aggre_1: conv_1, conv_2 (main half), conv_3
        (8, C),                   # conv_1
        (8, 8), (8, 8), (8, 8),   # aggre_2: conv_1, conv_2 (main half), conv_3
        (4, 8),                   # conv_2
        (1, 4),                   # conv_3
    )


def _num_tensorcores():
    """TensorCores a 'parallel' grid axis can shard across (megacore chips: 2)."""
    try:
        kind = jax.devices()[0].device_kind.lower()
    except Exception:
        return 1
    return 2 if any(t in kind for t in ("v4", "v5p", "v7")) else 1


def _pick_block_b(B, n_cores, max_bt=2):
    """Samples per grid step.

    Multi-TC chips: give the parallel grid at least `n_cores` steps so both
    TensorCores run.  Single-TC chips: keep the whole batch in one step (no
    ~0.35 us per-step overhead), bounded by `max_bt` so the in-kernel unroll
    does not blow the 64-vreg file.
    """
    if n_cores > 1:
        bt = max(1, min(B // n_cores, max_bt))
    else:
        bt = min(B, max_bt)
    while B % bt:
        bt -= 1
    return bt


# ----------------------------------------------------------------------------
# Parameter packing (done once in the wrapper, plain numpy — model-load time)
# ----------------------------------------------------------------------------
def _pack_params(params, n_feat):
    """Pack 9 (w, gamma, beta) triples into two slabs.

    weight slab : (n_layers, C, C)     — slot i holds W_i (top-left padded);
                  aggre conv_2 weights are split, only the main half is stored.
    vector slab : (2*n_layers + 2, C, 1) — gammas, betas, then the two
                  rowsum(W2b) vectors replacing the concat/max-branch matmul.
    """
    C = n_feat
    dims = _layer_dims(C)
    nl = len(dims)
    wslab = np.zeros((nl, C, C), np.float32)
    vslab = np.zeros((2 * nl + 2, C, 1), np.float32)

    for i, ((w, g, b), (co, ci)) in enumerate(zip(params, dims)):
        w = np.asarray(w, np.float32)
        if i in (1, 5):                       # aggre conv_2: (co, 2*co) weight
            w_main, w_max = w[:, :co], w[:, co:]
            wslab[i, :co, :ci] = w_main
            vslab[2 * nl + (0 if i == 1 else 1), :co, 0] = w_max.sum(axis=1)
        else:
            wslab[i, :co, :ci] = w
        vslab[i, :co, 0] = np.asarray(g, np.float32).reshape(-1)
        vslab[nl + i, :co, 0] = np.asarray(b, np.float32).reshape(-1)

    return jnp.asarray(wslab), jnp.asarray(vslab)


# ----------------------------------------------------------------------------
# Pallas kernel
# ----------------------------------------------------------------------------
def _make_kernel(n_feat, n_real, n_pad):
    dims = _layer_dims(n_feat)
    nl = len(dims)
    padded = n_pad > n_real

    def kernel(feat_ref, coord_ref, w_ref, v_ref, goal_ref, wts_ref):
        # ---- slice the packed parameter slabs once (static, shared by all b) --
        Ws, Gs, Bs = [], [], []
        for i, (co, ci) in enumerate(dims):
            Ws.append(w_ref[i, 0:co, 0:ci])            # (co, ci)
            Gs.append(v_ref[i, 0:co, :])               # (co, 1) gamma
            Bs.append(v_ref[nl + i, 0:co, :])          # (co, 1) beta
        msum1 = v_ref[2 * nl, 0:dims[1][0], :]         # (C, 1) rowsum of aggre_1 W2b
        msum2 = v_ref[2 * nl + 1, 0:dims[5][0], :]     # (8, 1) rowsum of aggre_2 W2b

        if padded:
            lane = jax.lax.broadcasted_iota(jnp.int32, (1, n_pad), 1)
            valid = lane < n_real                       # (1, Np) bool
            maskf = valid.astype(jnp.float32)           # (1, Np)
            neg_big = jnp.float32(-1e30)

        def conv(i, x):
            # x: (C_in, N) channels-first; 1x1 conv == matmul.
            co, ci = dims[i]
            if co * ci <= 64:
                # Tiny layer: explicit VPU FMAs (column of W times row of x),
                # skipping the MXU push + result-FIFO drain on the serial chain.
                acc = Ws[i][:, 0:1] * x[0:1, :]
                for j in range(1, ci):
                    acc = acc + Ws[i][:, j:j + 1] * x[j:j + 1, :]
                return acc
            return jnp.dot(Ws[i], x, preferred_element_type=jnp.float32)

        def gn(y, i, relu):
            # GroupNorm(ng=1): single-pass stats over the real (C_out, N) map,
            # folded into one scale/shift FMA.  Padded lanes are zero on entry
            # (so they do not pollute the sums) and re-zeroed after the shift.
            co = y.shape[0]
            inv_cnt = 1.0 / float(co * n_real)
            s1 = jnp.sum(y)                             # independent reductions
            s2 = jnp.sum(y * y)
            mu = s1 * inv_cnt
            var = jnp.maximum(s2 * inv_cnt - mu * mu, 0.0)
            rstd = jax.lax.rsqrt(var + _EPS)
            scale = Gs[i] * rstd                        # (co, 1)
            shift = Bs[i] - scale * mu                  # (co, 1)
            y = scale * y + shift
            if padded:
                y = y * maskf                           # keep padded lanes at 0
            return jnp.maximum(y, 0.0) if relu else y

        def conv_gn(x, i, relu):
            return gn(conv(i, x), i, relu)

        def aggre_tail(f1, res, i0, msum):
            # Conv1dAggreBlock after its conv_1:
            #   conv_2(concat([f1, repeat(max_c f1)])) rewritten as
            #   W2a @ f1 + rowsum(W2b) * max_c(f1)   (no concat / broadcast_to).
            m = jnp.max(f1, axis=0, keepdims=True)      # (1, N)
            y2 = conv(i0 + 1, f1) + msum * m            # (C, N)
            f = gn(y2, i0 + 1, True)
            # dropout: identity (inference mode)
            f = conv_gn(f, i0 + 2, False)               # conv_3
            return jnp.maximum(f + res, 0.0)            # + res, ReLU

        bt = feat_ref.shape[0]
        for b in range(bt):                 # unrolled; samples are independent
            x = feat_ref[b]                 # (C, N) channels-first, lane-dense
            c2n = coord_ref[b]              # (2, N) lane-dense coordinates

            f = aggre_tail(conv_gn(x, 0, True), x, 0, msum1)        # aggre_1
            f = conv_gn(f, 3, True)                                 # conv_1 (C->8)
            f = aggre_tail(conv_gn(f, 4, True), f, 4, msum2)        # aggre_2 (8->8)
            f = conv_gn(f, 7, True)                                 # conv_2 (8->4)
            logits = conv_gn(f, 8, False)                           # conv_3 -> (1, N)

            # softmax over the (real) point dimension
            if padded:
                logits = jnp.where(valid, logits, neg_big)
            mx = jnp.max(logits, axis=-1, keepdims=True)
            e = jnp.exp(logits - mx)
            wts = e / jnp.sum(e, axis=-1, keepdims=True)            # exact divide

            wts_ref[b] = wts                                        # (1, N) lane-dense
            goal_ref[b] = jnp.sum(c2n * wts, axis=-1, keepdims=True)  # (2, 1)

    return kernel


# ----------------------------------------------------------------------------
# Wrapper
# ----------------------------------------------------------------------------
def goal_decoder(feat, coord, params):
    """feat: (B, N, n_feat), coord: (B, N, 2). Returns (goal (B,1,2), weights (B,N,1))."""
    B, N, C = feat.shape
    wslab, vslab = _pack_params(params, C)

    # Lane-dense layouts: channels on sublanes, points on lanes; pad points to a
    # full 128-lane multiple so every map / the weights store is unmasked.
    Np = ((N + 127) // 128) * 128
    feat_cn = jnp.transpose(feat, (0, 2, 1))            # (B, C, N)
    coord_t = jnp.transpose(coord, (0, 2, 1))           # (B, 2, N)
    if Np != N:
        pad = ((0, 0), (0, 0), (0, Np - N))
        feat_cn = jnp.pad(feat_cn, pad)
        coord_t = jnp.pad(coord_t, pad)

    n_cores = _num_tensorcores()
    Bt = _pick_block_b(B, n_cores)
    grid = (B // Bt,)

    in_specs = [
        pl.BlockSpec((Bt, C, Np), lambda i: (i, 0, 0)),        # feat, lane-dense
        pl.BlockSpec((Bt, 2, Np), lambda i: (i, 0, 0)),        # coord, lane-dense
        pl.BlockSpec(wslab.shape, lambda i: (0, 0, 0)),        # packed weights (grid-invariant)
        pl.BlockSpec(vslab.shape, lambda i: (0, 0, 0)),        # packed gammas/betas/rowsums
    ]
    out_specs = [
        pl.BlockSpec((Bt, 2, 1), lambda i: (i, 0, 0)),         # goal (per-sample (2,1))
        pl.BlockSpec((Bt, 1, Np), lambda i: (i, 0, 0)),        # weights, lane-dense
    ]
    out_shape = [
        jax.ShapeDtypeStruct((B, 2, 1), jnp.float32),
        jax.ShapeDtypeStruct((B, 1, Np), jnp.float32),
    ]

    goal21, wts = pl.pallas_call(
        _make_kernel(C, N, Np),
        grid=grid,
        in_specs=in_specs,
        out_specs=out_specs,
        out_shape=out_shape,
        compiler_params=pltpu.CompilerParams(dimension_semantics=("parallel",)),
    )(feat_cn, coord_t, wslab, vslab)

    # (B,2,1) -> (B,1,2) is a pure reshape (same element order); weights follow
    # the module contract softmax(...).transpose(1,2) -> (B, N, 1).
    goal = goal21.reshape(B, 1, 2)
    weights = jnp.transpose(wts[:, :, :N], (0, 2, 1))
    return goal, weights


# ----------------------------------------------------------------------------
# Deterministic parameter construction (synthetic; matches module __init__ shapes)
# ----------------------------------------------------------------------------
def make_params(key, n_feat=32):
    dims = [
        (n_feat, n_feat), (n_feat, 2 * n_feat), (n_feat, n_feat),   # aggre_1
        (8, n_feat),                                                # conv_1
        (8, 8), (8, 16), (8, 8),                                    # aggre_2
        (4, 8),                                                     # conv_2
        (1, 4),                                                     # conv_3
    ]
    params = []
    for (co, ci) in dims:
        key, kw, kg, kb = jax.random.split(key, 4)
        w = jax.random.normal(kw, (co, ci), jnp.float32) / np.sqrt(ci)
        g = 1.0 + 0.1 * jax.random.normal(kg, (co, 1), jnp.float32)
        b = 0.1 * jax.random.normal(kb, (co, 1), jnp.float32)
        params.append((w, g, b))
    return params


# ----------------------------------------------------------------------------
# Pure-JAX reference (original, un-rewritten math) for a correctness check.
# ----------------------------------------------------------------------------
def reference(feat, coord, params):
    def conv_gn(x, w, g, b, relu):
        y = jnp.dot(w, x, preferred_element_type=jnp.float32)
        mu = jnp.mean(y)
        var = jnp.mean((y - mu) ** 2)
        y = g * ((y - mu) / jnp.sqrt(var + _EPS)) + b
        return jnp.maximum(y, 0.0) if relu else y

    def aggre(x, p1, p2, p3):
        res = x
        f = conv_gn(x, *p1, True)
        m = jnp.broadcast_to(jnp.max(f, axis=0, keepdims=True), f.shape)
        f = jnp.concatenate([f, m], axis=0)
        f = conv_gn(f, *p2, True)
        f = conv_gn(f, *p3, False)
        return jnp.maximum(f + res, 0.0)

    def one(feat_nc, coord_n2):
        x = feat_nc.T
        f = aggre(x, params[0], params[1], params[2])
        f = conv_gn(f, *params[3], True)
        f = aggre(f, params[4], params[5], params[6])
        f = conv_gn(f, *params[7], True)
        logits = conv_gn(f, *params[8], False)          # (1, N)
        w = jax.nn.softmax(logits, axis=-1)             # (1, N)
        goal = jnp.dot(w, coord_n2)                     # (1, 2)
        return goal, w.T                                # (1,2), (N,1)

    return jax.vmap(one)(feat, coord)


if __name__ == "__main__":
    B, N, C = 2, 200, 32                       # n_feat=32, n_pts=200 (module defaults)
    key = jax.random.PRNGKey(0)
    kf, kc, kp = jax.random.split(key, 3)
    feat = jax.random.normal(kf, (B, N, C), jnp.float32)
    coord = 10.0 * jax.random.normal(kc, (B, N, 2), jnp.float32)
    params = make_params(kp, n_feat=C)

    goal, weights = goal_decoder(feat, coord, params)
    jax.block_until_ready((goal, weights))

    assert goal.shape == (B, 1, 2), goal.shape
    assert weights.shape == (B, N, 1), weights.shape

    g_ref, w_ref = reference(feat, coord, params)
    np.testing.assert_allclose(np.asarray(goal), np.asarray(g_ref), rtol=2e-2, atol=2e-3)
    np.testing.assert_allclose(np.asarray(weights), np.asarray(w_ref), rtol=2e-2, atol=1e-4)

    print("KERNEL_OK")
</pallas_src>

<mosaic_0001>
module attributes {stable_mosaic.version = 11 : i64} {
  func.func @kernel(%arg0: i32, %arg1: memref<2x32x256xf32, #tpu.memory_space<vmem>>, %arg2: memref<2x2x256xf32, #tpu.memory_space<vmem>>, %arg3: memref<9x32x32xf32, #tpu.memory_space<vmem>>, %arg4: memref<20x32x1xf32, #tpu.memory_space<vmem>>, %arg5: memref<2x2x1xf32, #tpu.memory_space<vmem>>, %arg6: memref<2x1x256xf32, #tpu.memory_space<vmem>>) attributes {dimension_semantics = [#tpu.dimension_semantics<parallel>], iteration_bounds = array<i64: 1>, scalar_prefetch = 0 : i64, scratch_operands = 0 : i64, tpu.core_type = #tpu.core_type<tc>, window_params = [{transform_indices = @transform_0, window_bounds = array<i64: 2, 32, 256>}, {transform_indices = @transform_1, window_bounds = array<i64: 2, 2, 256>}, {pipeline_mode = #tpu.pipeline_mode<synchronous>, transform_indices = @transform_2, window_bounds = array<i64: 9, 32, 32>}, {pipeline_mode = #tpu.pipeline_mode<synchronous>, transform_indices = @transform_3, window_bounds = array<i64: 20, 32, 1>}, {transform_indices = @transform_4, window_bounds = array<i64: 2, 2, 1>}, {transform_indices = @transform_5, window_bounds = array<i64: 2, 1, 256>}]} {
    %c0 = arith.constant 0 : index
    %c0_0 = arith.constant 0 : index
    %c0_1 = arith.constant 0 : index
    %0 = vector.load %arg3[%c0, %c0_0, %c0_1] : memref<9x32x32xf32, #tpu.memory_space<vmem>>, vector<1x32x32xf32>
    %1 = vector.shape_cast %0 : vector<1x32x32xf32> to vector<32x32xf32>
    %c0_2 = arith.constant 0 : index
    %c0_3 = arith.constant 0 : index
    %c0_4 = arith.constant 0 : index
    %2 = vector.load %arg4[%c0_2, %c0_3, %c0_4] : memref<20x32x1xf32, #tpu.memory_space<vmem>>, vector<1x32x1xf32>
    %3 = vector.shape_cast %2 : vector<1x32x1xf32> to vector<32x1xf32>
    %c9 = arith.constant 9 : index
    %c0_5 = arith.constant 0 : index
    %c0_6 = arith.constant 0 : index
    %4 = vector.load %arg4[%c9, %c0_5, %c0_6] : memref<20x32x1xf32, #tpu.memory_space<vmem>>, vector<1x32x1xf32>
    %5 = vector.shape_cast %4 : vector<1x32x1xf32> to vector<32x1xf32>
    %c1 = arith.constant 1 : index
    %c0_7 = arith.constant 0 : index
    %c0_8 = arith.constant 0 : index
    %6 = vector.load %arg3[%c1, %c0_7, %c0_8] : memref<9x32x32xf32, #tpu.memory_space<vmem>>, vector<1x32x32xf32>
    %7 = vector.shape_cast %6 : vector<1x32x32xf32> to vector<32x32xf32>
    %c1_9 = arith.constant 1 : index
    %c0_10 = arith.constant 0 : index
    %c0_11 = arith.constant 0 : index
    %8 = vector.load %arg4[%c1_9, %c0_10, %c0_11] : memref<20x32x1xf32, #tpu.memory_space<vmem>>, vector<1x32x1xf32>
    %9 = vector.shape_cast %8 : vector<1x32x1xf32> to vector<32x1xf32>
    %c10 = arith.constant 10 : index
    %c0_12 = arith.constant 0 : index
    %c0_13 = arith.constant 0 : index
    %10 = vector.load %arg4[%c10, %c0_12, %c0_13] : memref<20x32x1xf32, #tpu.memory_space<vmem>>, vector<1x32x1xf32>
    %11 = vector.shape_cast %10 : vector<1x32x1xf32> to vector<32x1xf32>
    %c2 = arith.constant 2 : index
    %c0_14 = arith.constant 0 : index
    %c0_15 = arith.constant 0 : index
    %12 = vector.load %arg3[%c2, %c0_14, %c0_15] : memref<9x32x32xf32, #tpu.memory_space<vmem>>, vector<1x32x32xf32>
    %13 = vector.shape_cast %12 : vector<1x32x32xf32> to vector<32x32xf32>
    %c2_16 = arith.constant 2 : index
    %c0_17 = arith.constant 0 : index
    %c0_18 = arith.constant 0 : index
    %14 = vector.load %arg4[%c2_16, %c0_17, %c0_18] : memref<20x32x1xf32, #tpu.memory_space<vmem>>, vector<1x32x1xf32>
    %15 = vector.shape_cast %14 : vector<1x32x1xf32> to vector<32x1xf32>
    %c11 = arith.constant 11 : index
    %c0_19 = arith.constant 0 : index
    %c0_20 = arith.constant 0 : index
    %16 = vector.load %arg4[%c11, %c0_19, %c0_20] : memref<20x32x1xf32, #tpu.memory_space<vmem>>, vector<1x32x1xf32>
    %17 = vector.shape_cast %16 : vector<1x32x1xf32> to vector<32x1xf32>
    %c3 = arith.constant 3 : index
    %c0_21 = arith.constant 0 : index
    %c0_22 = arith.constant 0 : index
    %18 = vector.load %arg3[%c3, %c0_21, %c0_22] : memref<9x32x32xf32, #tpu.memory_space<vmem>>, vector<1x8x32xf32>
    %19 = vector.shape_cast %18 : vector<1x8x32xf32> to vector<8x32xf32>
    %c3_23 = arith.constant 3 : index
    %c0_24 = arith.constant 0 : index
    %c0_25 = arith.constant 0 : index
    %20 = vector.load %arg4[%c3_23, %c0_24, %c0_25] : memref<20x32x1xf32, #tpu.memory_space<vmem>>, vector<1x8x1xf32>
    %21 = vector.shape_cast %20 : vector<1x8x1xf32> to vector<8x1xf32>
    %c12 = arith.constant 12 : index
    %c0_26 = arith.constant 0 : index
    %c0_27 = arith.constant 0 : index
    %22 = vector.load %arg4[%c12, %c0_26, %c0_27] : memref<20x32x1xf32, #tpu.memory_space<vmem>>, vector<1x8x1xf32>
    %23 = vector.shape_cast %22 : vector<1x8x1xf32> to vector<8x1xf32>
    %c4 = arith.constant 4 : index
    %c0_28 = arith.constant 0 : index
    %c0_29 = arith.constant 0 : index
    %24 = vector.load %arg3[%c4, %c0_28, %c0_29] : memref<9x32x32xf32, #tpu.memory_space<vmem>>, vector<1x8x8xf32>
    %25 = vector.shape_cast %24 : vector<1x8x8xf32> to vector<8x8xf32>
    %c4_30 = arith.constant 4 : index
    %c0_31 = arith.constant 0 : index
    %c0_32 = arith.constant 0 : index
    %26 = vector.load %arg4[%c4_30, %c0_31, %c0_32] : memref<20x32x1xf32, #tpu.memory_space<vmem>>, vector<1x8x1xf32>
    %27 = vector.shape_cast %26 : vector<1x8x1xf32> to vector<8x1xf32>
    %c13 = arith.constant 13 : index
    %c0_33 = arith.constant 0 : index
    %c0_34 = arith.constant 0 : index
    %28 = vector.load %arg4[%c13, %c0_33, %c0_34] : memref<20x32x1xf32, #tpu.memory_space<vmem>>, vector<1x8x1xf32>
    %29 = vector.shape_cast %28 : vector<1x8x1xf32> to vector<8x1xf32>
    %c5 = arith.constant 5 : index
    %c0_35 = arith.constant 0 : index
    %c0_36 = arith.constant 0 : index
    %30 = vector.load %arg3[%c5, %c0_35, %c0_36] : memref<9x32x32xf32, #tpu.memory_space<vmem>>, vector<1x8x8xf32>
    %31 = vector.shape_cast %30 : vector<1x8x8xf32> to vector<8x8xf32>
    %c5_37 = arith.constant 5 : index
    %c0_38 = arith.constant 0 : index
    %c0_39 = arith.constant 0 : index
    %32 = vector.load %arg4[%c5_37, %c0_38, %c0_39] : memref<20x32x1xf32, #tpu.memory_space<vmem>>, vector<1x8x1xf32>
    %33 = vector.shape_cast %32 : vector<1x8x1xf32> to vector<8x1xf32>
    %c14 = arith.constant 14 : index
    %c0_40 = arith.constant 0 : index
    %c0_41 = arith.constant 0 : index
    %34 = vector.load %arg4[%c14, %c0_40, %c0_41] : memref<20x32x1xf32, #tpu.memory_space<vmem>>, vector<1x8x1xf32>
    %35 = vector.shape_cast %34 : vector<1x8x1xf32> to vector<8x1xf32>
    %c6 = arith.constant 6 : index
    %c0_42 = arith.constant 0 : index
    %c0_43 = arith.constant 0 : index
    %36 = vector.load %arg3[%c6, %c0_42, %c0_43] : memref<9x32x32xf32, #tpu.memory_space<vmem>>, vector<1x8x8xf32>
    %37 = vector.shape_cast %36 : vector<1x8x8xf32> to vector<8x8xf32>
    %c6_44 = arith.constant 6 : index
    %c0_45 = arith.constant 0 : index
    %c0_46 = arith.constant 0 : index
    %38 = vector.load %arg4[%c6_44, %c0_45, %c0_46] : memref<20x32x1xf32, #tpu.memory_space<vmem>>, vector<1x8x1xf32>
    %39 = vector.shape_cast %38 : vector<1x8x1xf32> to vector<8x1xf32>
    %c15 = arith.constant 15 : index
    %c0_47 = arith.constant 0 : index
    %c0_48 = arith.constant 0 : index
    %40 = vector.load %arg4[%c15, %c0_47, %c0_48] : memref<20x32x1xf32, #tpu.memory_space<vmem>>, vector<1x8x1xf32>
    %41 = vector.shape_cast %40 : vector<1x8x1xf32> to vector<8x1xf32>
    %c7 = arith.constant 7 : index
    %c0_49 = arith.constant 0 : index
    %c0_50 = arith.constant 0 : index
    %42 = vector.load %arg3[%c7, %c0_49, %c0_50] : memref<9x32x32xf32, #tpu.memory_space<vmem>>, vector<1x4x8xf32>
    %43 = vector.shape_cast %42 : vector<1x4x8xf32> to vector<4x8xf32>
    %c7_51 = arith.constant 7 : index
    %c0_52 = arith.constant 0 : index
    %c0_53 = arith.constant 0 : index
    %44 = vector.load %arg4[%c7_51, %c0_52, %c0_53] : memref<20x32x1xf32, #tpu.memory_space<vmem>>, vector<1x4x1xf32>
    %45 = vector.shape_cast %44 : vector<1x4x1xf32> to vector<4x1xf32>
    %c16 = arith.constant 16 : index
    %c0_54 = arith.constant 0 : index
    %c0_55 = arith.constant 0 : index
    %46 = vector.load %arg4[%c16, %c0_54, %c0_55] : memref<20x32x1xf32, #tpu.memory_space<vmem>>, vector<1x4x1xf32>
    %47 = vector.shape_cast %46 : vector<1x4x1xf32> to vector<4x1xf32>
    %c8 = arith.constant 8 : index
    %c0_56 = arith.constant 0 : index
    %c0_57 = arith.constant 0 : index
    %48 = vector.load %arg3[%c8, %c0_56, %c0_57] : memref<9x32x32xf32, #tpu.memory_space<vmem>>, vector<1x1x4xf32>
    %49 = vector.shape_cast %48 : vector<1x1x4xf32> to vector<1x4xf32>
    %c8_58 = arith.constant 8 : index
    %c0_59 = arith.constant 0 : index
    %c0_60 = arith.constant 0 : index
    %50 = vector.load %arg4[%c8_58, %c0_59, %c0_60] : memref<20x32x1xf32, #tpu.memory_space<vmem>>, vector<1x1x1xf32>
    %51 = vector.shape_cast %50 : vector<1x1x1xf32> to vector<1x1xf32>
    %c17 = arith.constant 17 : index
    %c0_61 = arith.constant 0 : index
    %c0_62 = arith.constant 0 : index
    %52 = vector.load %arg4[%c17, %c0_61, %c0_62] : memref<20x32x1xf32, #tpu.memory_space<vmem>>, vector<1x1x1xf32>
    %53 = vector.shape_cast %52 : vector<1x1x1xf32> to vector<1x1xf32>
    %c18 = arith.constant 18 : index
    %c0_63 = arith.constant 0 : index
    %c0_64 = arith.constant 0 : index
    %54 = vector.load %arg4[%c18, %c0_63, %c0_64] : memref<20x32x1xf32, #tpu.memory_space<vmem>>, vector<1x32x1xf32>
    %55 = vector.shape_cast %54 : vector<1x32x1xf32> to vector<32x1xf32>
    %c19 = arith.constant 19 : index
    %c0_65 = arith.constant 0 : index
    %c0_66 = arith.constant 0 : index
    %56 = vector.load %arg4[%c19, %c0_65, %c0_66] : memref<20x32x1xf32, #tpu.memory_space<vmem>>, vector<1x8x1xf32>
    %57 = vector.shape_cast %56 : vector<1x8x1xf32> to vector<8x1xf32>
    %58 = tpu.iota {dimensions = array<i32: 1>} : vector<1x256xi32>
    %c200_i32 = arith.constant 200 : i32
    %59 = vector.broadcast %c200_i32 : i32 to vector<1x256xi32>
    %60 = arith.cmpi slt, %58, %59 : vector<1x256xi32>
    %61 = arith.extui %60 : vector<1x256xi1> to vector<1x256xi32>
    %62 = arith.sitofp %61 : vector<1x256xi32> to vector<1x256xf32>
    %c0_67 = arith.constant 0 : index
    %c0_68 = arith.constant 0 : index
    %c0_69 = arith.constant 0 : index
    %63 = vector.load %arg1[%c0_67, %c0_68, %c0_69] : memref<2x32x256xf32, #tpu.memory_space<vmem>>, vector<1x32x256xf32>
    %64 = vector.shape_cast %63 : vector<1x32x256xf32> to vector<32x256xf32>
    %c0_70 = arith.constant 0 : index
    %c0_71 = arith.constant 0 : index
    %c0_72 = arith.constant 0 : index
    %65 = vector.load %arg2[%c0_70, %c0_71, %c0_72] : memref<2x2x256xf32, #tpu.memory_space<vmem>>, vector<1x2x256xf32>
    %66 = vector.shape_cast %65 : vector<1x2x256xf32> to vector<2x256xf32>
    %cst = arith.constant dense<0.000000e+00> : vector<32x256xf32>
    %67 = tpu.matmul %1, %64, %cst {dimension_numbers = #tpu.dot_dimension_numbers<[1], [0], [0], [1], [0, 0, 1, 1], [], []>} : vector<32x32xf32>, vector<32x256xf32>, vector<32x256xf32> -> vector<32x256xf32>
    %68 = vector.shape_cast %67 : vector<32x256xf32> to vector<1x32x256xf32>
    %cst_73 = arith.constant dense<0.000000e+00> : vector<1xf32>
    %69 = vector.multi_reduction <add>, %68, %cst_73 [1, 2] : vector<1x32x256xf32> to vector<1xf32>
    %70 = vector.shape_cast %69 : vector<1xf32> to vector<1x1x1xf32>
    %71 = vector.extract %70[0, 0, 0] : f32 from vector<1x1x1xf32>
    %72 = arith.mulf %67, %67 : vector<32x256xf32>
    %73 = vector.shape_cast %72 : vector<32x256xf32> to vector<1x32x256xf32>
    %cst_74 = arith.constant dense<0.000000e+00> : vector<1xf32>
    %74 = vector.multi_reduction <add>, %73, %cst_74 [1, 2] : vector<1x32x256xf32> to vector<1xf32>
    %75 = vector.shape_cast %74 : vector<1xf32> to vector<1x1x1xf32>
    %76 = vector.extract %75[0, 0, 0] : f32 from vector<1x1x1xf32>
    %cst_75 = arith.constant 1.562500e-04 : f32
    %77 = arith.mulf %71, %cst_75 : f32
    %cst_76 = arith.constant 1.562500e-04 : f32
    %78 = arith.mulf %76, %cst_76 : f32
    %79 = arith.mulf %77, %77 : f32
    %80 = arith.subf %78, %79 : f32
    %cst_77 = arith.constant 0.000000e+00 : f32
    %81 = arith.maximumf %80, %cst_77 : f32
    %cst_78 = arith.constant 9.99999974E-6 : f32
    %82 = arith.addf %81, %cst_78 : f32
    %83 = math.rsqrt %82 : f32
    %84 = vector.broadcast %83 : f32 to vector<32x1xf32>
    %85 = arith.mulf %3, %84 : vector<32x1xf32>
    %86 = vector.broadcast %77 : f32 to vector<32x1xf32>
    %87 = arith.mulf %85, %86 : vector<32x1xf32>
    %88 = arith.subf %5, %87 : vector<32x1xf32>
    %89 = vector.broadcast %85 : vector<32x1xf32> to vector<32x256xf32>
    %90 = arith.mulf %89, %67 : vector<32x256xf32>
    %91 = vector.broadcast %88 : vector<32x1xf32> to vector<32x256xf32>
    %92 = arith.addf %90, %91 : vector<32x256xf32>
    %93 = vector.broadcast %62 : vector<1x256xf32> to vector<32x256xf32>
    %94 = arith.mulf %92, %93 : vector<32x256xf32>
    %cst_79 = arith.constant 0.000000e+00 : f32
    %95 = vector.broadcast %cst_79 : f32 to vector<32x256xf32>
    %96 = arith.maximumf %94, %95 : vector<32x256xf32>
    %cst_80 = arith.constant dense<0xFF800000> : vector<256xf32>
    %97 = vector.multi_reduction <maximumf>, %96, %cst_80 [0] : vector<32x256xf32> to vector<256xf32>
    %98 = vector.shape_cast %97 : vector<256xf32> to vector<1x256xf32>
    %cst_81 = arith.constant dense<0.000000e+00> : vector<32x256xf32>
    %99 = tpu.matmul %7, %96, %cst_81 {dimension_numbers = #tpu.dot_dimension_numbers<[1], [0], [0], [1], [0, 0, 1, 1], [], []>} : vector<32x32xf32>, vector<32x256xf32>, vector<32x256xf32> -> vector<32x256xf32>
    %100 = vector.broadcast %55 : vector<32x1xf32> to vector<32x256xf32>
    %101 = vector.broadcast %98 : vector<1x256xf32> to vector<32x256xf32>
    %102 = arith.mulf %100, %101 : vector<32x256xf32>
    %103 = arith.addf %99, %102 : vector<32x256xf32>
    %104 = vector.shape_cast %103 : vector<32x256xf32> to vector<1x32x256xf32>
    %cst_82 = arith.constant dense<0.000000e+00> : vector<1xf32>
    %105 = vector.multi_reduction <add>, %104, %cst_82 [1, 2] : vector<1x32x256xf32> to vector<1xf32>
    %106 = vector.shape_cast %105 : vector<1xf32> to vector<1x1x1xf32>
    %107 = vector.extract %106[0, 0, 0] : f32 from vector<1x1x1xf32>
    %108 = arith.mulf %103, %103 : vector<32x256xf32>
    %109 = vector.shape_cast %108 : vector<32x256xf32> to vector<1x32x256xf32>
    %cst_83 = arith.constant dense<0.000000e+00> : vector<1xf32>
    %110 = vector.multi_reduction <add>, %109, %cst_83 [1, 2] : vector<1x32x256xf32> to vector<1xf32>
    %111 = vector.shape_cast %110 : vector<1xf32> to vector<1x1x1xf32>
    %112 = vector.extract %111[0, 0, 0] : f32 from vector<1x1x1xf32>
    %cst_84 = arith.constant 1.562500e-04 : f32
    %113 = arith.mulf %107, %cst_84 : f32
    %cst_85 = arith.constant 1.562500e-04 : f32
    %114 = arith.mulf %112, %cst_85 : f32
    %115 = arith.mulf %113, %113 : f32
    %116 = arith.subf %114, %115 : f32
    %cst_86 = arith.constant 0.000000e+00 : f32
    %117 = arith.maximumf %116, %cst_86 : f32
    %cst_87 = arith.constant 9.99999974E-6 : f32
    %118 = arith.addf %117, %cst_87 : f32
    %119 = math.rsqrt %118 : f32
    %120 = vector.broadcast %119 : f32 to vector<32x1xf32>
    %121 = arith.mulf %9, %120 : vector<32x1xf32>
    %122 = vector.broadcast %113 : f32 to vector<32x1xf32>
    %123 = arith.mulf %121, %122 : vector<32x1xf32>
    %124 = arith.subf %11, %123 : vector<32x1xf32>
    %125 = vector.broadcast %121 : vector<32x1xf32> to vector<32x256xf32>
    %126 = arith.mulf %125, %103 : vector<32x256xf32>
    %127 = vector.broadcast %124 : vector<32x1xf32> to vector<32x256xf32>
    %128 = arith.addf %126, %127 : vector<32x256xf32>
    %129 = vector.broadcast %62 : vector<1x256xf32> to vector<32x256xf32>
    %130 = arith.mulf %128, %129 : vector<32x256xf32>
    %cst_88 = arith.constant 0.000000e+00 : f32
    %131 = vector.broadcast %cst_88 : f32 to vector<32x256xf32>
    %132 = arith.maximumf %130, %131 : vector<32x256xf32>
    %cst_89 = arith.constant dense<0.000000e+00> : vector<32x256xf32>
    %133 = tpu.matmul %13, %132, %cst_89 {dimension_numbers = #tpu.dot_dimension_numbers<[1], [0], [0], [1], [0, 0, 1, 1], [], []>} : vector<32x32xf32>, vector<32x256xf32>, vector<32x256xf32> -> vector<32x256xf32>
    %134 = vector.shape_cast %133 : vector<32x256xf32> to vector<1x32x256xf32>
    %cst_90 = arith.constant dense<0.000000e+00> : vector<1xf32>
    %135 = vector.multi_reduction <add>, %134, %cst_90 [1, 2] : vector<1x32x256xf32> to vector<1xf32>
    %136 = vector.shape_cast %135 : vector<1xf32> to vector<1x1x1xf32>
    %137 = vector.extract %136[0, 0, 0] : f32 from vector<1x1x1xf32>
    %138 = arith.mulf %133, %133 : vector<32x256xf32>
    %139 = vector.shape_cast %138 : vector<32x256xf32> to vector<1x32x256xf32>
    %cst_91 = arith.constant dense<0.000000e+00> : vector<1xf32>
    %140 = vector.multi_reduction <add>, %139, %cst_91 [1, 2] : vector<1x32x256xf32> to vector<1xf32>
    %141 = vector.shape_cast %140 : vector<1xf32> to vector<1x1x1xf32>
    %142 = vector.extract %141[0, 0, 0] : f32 from vector<1x1x1xf32>
    %cst_92 = arith.constant 1.562500e-04 : f32
    %143 = arith.mulf %137, %cst_92 : f32
    %cst_93 = arith.constant 1.562500e-04 : f32
    %144 = arith.mulf %142, %cst_93 : f32
    %145 = arith.mulf %143, %143 : f32
    %146 = arith.subf %144, %145 : f32
    %cst_94 = arith.constant 0.000000e+00 : f32
    %147 = arith.maximumf %146, %cst_94 : f32
    %cst_95 = arith.constant 9.99999974E-6 : f32
    %148 = arith.addf %147, %cst_95 : f32
    %149 = math.rsqrt %148 : f32
    %150 = vector.broadcast %149 : f32 to vector<32x1xf32>
    %151 = arith.mulf %15, %150 : vector<32x1xf32>
    %152 = vector.broadcast %143 : f32 to vector<32x1xf32>
    %153 = arith.mulf %151, %152 : vector<32x1xf32>
    %154 = arith.subf %17, %153 : vector<32x1xf32>
    %155 = vector.broadcast %151 : vector<32x1xf32> to vector<32x256xf32>
    %156 = arith.mulf %155, %133 : vector<32x256xf32>
    %157 = vector.broadcast %154 : vector<32x1xf32> to vector<32x256xf32>
    %158 = arith.addf %156, %157 : vector<32x256xf32>
    %159 = vector.broadcast %62 : vector<1x256xf32> to vector<32x256xf32>
    %160 = arith.mulf %158, %159 : vector<32x256xf32>
    %161 = arith.addf %160, %64 : vector<32x256xf32>
    %cst_96 = arith.constant 0.000000e+00 : f32
    %162 = vector.broadcast %cst_96 : f32 to vector<32x256xf32>
    %163 = arith.maximumf %161, %162 : vector<32x256xf32>
    %cst_97 = arith.constant dense<0.000000e+00> : vector<8x256xf32>
    %164 = tpu.matmul %19, %163, %cst_97 {dimension_numbers = #tpu.dot_dimension_numbers<[1], [0], [0], [1], [0, 0, 1, 1], [], []>} : vector<8x32xf32>, vector<32x256xf32>, vector<8x256xf32> -> vector<8x256xf32>
    %165 = vector.shape_cast %164 : vector<8x256xf32> to vector<1x8x256xf32>
    %cst_98 = arith.constant dense<0.000000e+00> : vector<1xf32>
    %166 = vector.multi_reduction <add>, %165, %cst_98 [1, 2] : vector<1x8x256xf32> to vector<1xf32>
    %167 = vector.shape_cast %166 : vector<1xf32> to vector<1x1x1xf32>
    %168 = vector.extract %167[0, 0, 0] : f32 from vector<1x1x1xf32>
    %169 = arith.mulf %164, %164 : vector<8x256xf32>
    %170 = vector.shape_cast %169 : vector<8x256xf32> to vector<1x8x256xf32>
    %cst_99 = arith.constant dense<0.000000e+00> : vector<1xf32>
    %171 = vector.multi_reduction <add>, %170, %cst_99 [1, 2] : vector<1x8x256xf32> to vector<1xf32>
    %172 = vector.shape_cast %171 : vector<1xf32> to vector<1x1x1xf32>
    %173 = vector.extract %172[0, 0, 0] : f32 from vector<1x1x1xf32>
    %cst_100 = arith.constant 6.250000e-04 : f32
    %174 = arith.mulf %168, %cst_100 : f32
    %cst_101 = arith.constant 6.250000e-04 : f32
    %175 = arith.mulf %173, %cst_101 : f32
    %176 = arith.mulf %174, %174 : f32
    %177 = arith.subf %175, %176 : f32
    %cst_102 = arith.constant 0.000000e+00 : f32
    %178 = arith.maximumf %177, %cst_102 : f32
    %cst_103 = arith.constant 9.99999974E-6 : f32
    %179 = arith.addf %178, %cst_103 : f32
    %180 = math.rsqrt %179 : f32
    %181 = vector.broadcast %180 : f32 to vector<8x1xf32>
    %182 = arith.mulf %21, %181 : vector<8x1xf32>
    %183 = vector.broadcast %174 : f32 to vector<8x1xf32>
    %184 = arith.mulf %182, %183 : vector<8x1xf32>
    %185 = arith.subf %23, %184 : vector<8x1xf32>
    %186 = vector.broadcast %182 : vector<8x1xf32> to vector<8x256xf32>
    %187 = arith.mulf %186, %164 : vector<8x256xf32>
    %188 = vector.broadcast %185 : vector<8x1xf32> to vector<8x256xf32>
    %189 = arith.addf %187, %188 : vector<8x256xf32>
    %190 = vector.broadcast %62 : vector<1x256xf32> to vector<8x256xf32>
    %191 = arith.mulf %189, %190 : vector<8x256xf32>
    %cst_104 = arith.constant 0.000000e+00 : f32
    %192 = vector.broadcast %cst_104 : f32 to vector<8x256xf32>
    %193 = arith.maximumf %191, %192 : vector<8x256xf32>
    %194 = vector.extract_strided_slice %25 {offsets = [0, 0], sizes = [8, 1], strides = [1, 1]} : vector<8x8xf32> to vector<8x1xf32>
    %195 = vector.extract_strided_slice %193 {offsets = [0, 0], sizes = [1, 256], strides = [1, 1]} : vector<8x256xf32> to vector<1x256xf32>
    %196 = vector.broadcast %194 : vector<8x1xf32> to vector<8x256xf32>
    %197 = vector.broadcast %195 : vector<1x256xf32> to vector<8x256xf32>
    %198 = arith.mulf %196, %197 : vector<8x256xf32>
    %199 = vector.extract_strided_slice %25 {offsets = [0, 1], sizes = [8, 1], strides = [1, 1]} : vector<8x8xf32> to vector<8x1xf32>
    %200 = vector.extract_strided_slice %193 {offsets = [1, 0], sizes = [1, 256], strides = [1, 1]} : vector<8x256xf32> to vector<1x256xf32>
    %201 = vector.broadcast %199 : vector<8x1xf32> to vector<8x256xf32>
    %202 = vector.broadcast %200 : vector<1x256xf32> to vector<8x256xf32>
    %203 = arith.mulf %201, %202 : vector<8x256xf32>
    %204 = arith.addf %198, %203 : vector<8x256xf32>
    %205 = vector.extract_strided_slice %25 {offsets = [0, 2], sizes = [8, 1], strides = [1, 1]} : vector<8x8xf32> to vector<8x1xf32>
    %206 = vector.extract_strided_slice %193 {offsets = [2, 0], sizes = [1, 256], strides = [1, 1]} : vector<8x256xf32> to vector<1x256xf32>
    %207 = vector.broadcast %205 : vector<8x1xf32> to vector<8x256xf32>
    %208 = vector.broadcast %206 : vector<1x256xf32> to vector<8x256xf32>
    %209 = arith.mulf %207, %208 : vector<8x256xf32>
    %210 = arith.addf %204, %209 : vector<8x256xf32>
    %211 = vector.extract_strided_slice %25 {offsets = [0, 3], sizes = [8, 1], strides = [1, 1]} : vector<8x8xf32> to vector<8x1xf32>
    %212 = vector.extract_strided_slice %193 {offsets = [3, 0], sizes = [1, 256], strides = [1, 1]} : vector<8x256xf32> to vector<1x256xf32>
    %213 = vector.broadcast %211 : vector<8x1xf32> to vector<8x256xf32>
    %214 = vector.broadcast %212 : vector<1x256xf32> to vector<8x256xf32>
    %215 = arith.mulf %213, %214 : vector<8x256xf32>
    %216 = arith.addf %210, %215 : vector<8x256xf32>
    %217 = vector.extract_strided_slice %25 {offsets = [0, 4], sizes = [8, 1], strides = [1, 1]} : vector<8x8xf32> to vector<8x1xf32>
    %218 = vector.extract_strided_slice %193 {offsets = [4, 0], sizes = [1, 256], strides = [1, 1]} : vector<8x256xf32> to vector<1x256xf32>
    %219 = vector.broadcast %217 : vector<8x1xf32> to vector<8x256xf32>
    %220 = vector.broadcast %218 : vector<1x256xf32> to vector<8x256xf32>
    %221 = arith.mulf %219, %220 : vector<8x256xf32>
    %222 = arith.addf %216, %221 : vector<8x256xf32>
    %223 = vector.extract_strided_slice %25 {offsets = [0, 5], sizes = [8, 1], strides = [1, 1]} : vector<8x8xf32> to vector<8x1xf32>
    %224 = vector.extract_strided_slice %193 {offsets = [5, 0], sizes = [1, 256], strides = [1, 1]} : vector<8x256xf32> to vector<1x256xf32>
    %225 = vector.broadcast %223 : vector<8x1xf32> to vector<8x256xf32>
    %226 = vector.broadcast %224 : vector<1x256xf32> to vector<8x256xf32>
    %227 = arith.mulf %225, %226 : vector<8x256xf32>
    %228 = arith.addf %222, %227 : vector<8x256xf32>
    %229 = vector.extract_strided_slice %25 {offsets = [0, 6], sizes = [8, 1], strides = [1, 1]} : vector<8x8xf32> to vector<8x1xf32>
    %230 = vector.extract_strided_slice %193 {offsets = [6, 0], sizes = [1, 256], strides = [1, 1]} : vector<8x256xf32> to vector<1x256xf32>
    %231 = vector.broadcast %229 : vector<8x1xf32> to vector<8x256xf32>
    %232 = vector.broadcast %230 : vector<1x256xf32> to vector<8x256xf32>
    %233 = arith.mulf %231, %232 : vector<8x256xf32>
    %234 = arith.addf %228, %233 : vector<8x256xf32>
    %235 = vector.extract_strided_slice %25 {offsets = [0, 7], sizes = [8, 1], strides = [1, 1]} : vector<8x8xf32> to vector<8x1xf32>
    %236 = vector.extract_strided_slice %193 {offsets = [7, 0], sizes = [1, 256], strides = [1, 1]} : vector<8x256xf32> to vector<1x256xf32>
    %237 = vector.broadcast %235 : vector<8x1xf32> to vector<8x256xf32>
    %238 = vector.broadcast %236 : vector<1x256xf32> to vector<8x256xf32>
    %239 = arith.mulf %237, %238 : vector<8x256xf32>
    %240 = arith.addf %234, %239 : vector<8x256xf32>
    %241 = vector.shape_cast %240 : vector<8x256xf32> to vector<1x8x256xf32>
    %cst_105 = arith.constant dense<0.000000e+00> : vector<1xf32>
    %242 = vector.multi_reduction <add>, %241, %cst_105 [1, 2] : vector<1x8x256xf32> to vector<1xf32>
    %243 = vector.shape_cast %242 : vector<1xf32> to vector<1x1x1xf32>
    %244 = vector.extract %243[0, 0, 0] : f32 from vector<1x1x1xf32>
    %245 = arith.mulf %240, %240 : vector<8x256xf32>
    %246 = vector.shape_cast %245 : vector<8x256xf32> to vector<1x8x256xf32>
    %cst_106 = arith.constant dense<0.000000e+00> : vector<1xf32>
    %247 = vector.multi_reduction <add>, %246, %cst_106 [1, 2] : vector<1x8x256xf32> to vector<1xf32>
    %248 = vector.shape_cast %247 : vector<1xf32> to vector<1x1x1xf32>
    %249 = vector.extract %248[0, 0, 0] : f32 from vector<1x1x1xf32>
    %cst_107 = arith.constant 6.250000e-04 : f32
    %250 = arith.mulf %244, %cst_107 : f32
    %cst_108 = arith.constant 6.250000e-04 : f32
    %251 = arith.mulf %249, %cst_108 : f32
    %252 = arith.mulf %250, %250 : f32
    %253 = arith.subf %251, %252 : f32
    %cst_109 = arith.constant 0.000000e+00 : f32
    %254 = arith.maximumf %253, %cst_109 : f32
    %cst_110 = arith.constant 9.99999974E-6 : f32
    %255 = arith.addf %254, %cst_110 : f32
    %256 = math.rsqrt %255 : f32
    %257 = vector.broadcast %256 : f32 to vector<8x1xf32>
    %258 = arith.mulf %27, %257 : vector<8x1xf32>
    %259 = vector.broadcast %250 : f32 to vector<8x1xf32>
    %260 = arith.mulf %258, %259 : vector<8x1xf32>
    %261 = arith.subf %29, %260 : vector<8x1xf32>
    %262 = vector.broadcast %258 : vector<8x1xf32> to vector<8x256xf32>
    %263 = arith.mulf %262, %240 : vector<8x256xf32>
    %264 = vector.broadcast %261 : vector<8x1xf32> to vector<8x256xf32>
    %265 = arith.addf %263, %264 : vector<8x256xf32>
    %266 = vector.broadcast %62 : vector<1x256xf32> to vector<8x256xf32>
    %267 = arith.mulf %265, %266 : vector<8x256xf32>
    %cst_111 = arith.constant 0.000000e+00 : f32
    %268 = vector.broadcast %cst_111 : f32 to vector<8x256xf32>
    %269 = arith.maximumf %267, %268 : vector<8x256xf32>
    %cst_112 = arith.constant dense<0xFF800000> : vector<256xf32>
    %270 = vector.multi_reduction <maximumf>, %269, %cst_112 [0] : vector<8x256xf32> to vector<256xf32>
    %271 = vector.shape_cast %270 : vector<256xf32> to vector<1x256xf32>
    %272 = vector.extract_strided_slice %31 {offsets = [0, 0], sizes = [8, 1], strides = [1, 1]} : vector<8x8xf32> to vector<8x1xf32>
    %273 = vector.extract_strided_slice %269 {offsets = [0, 0], sizes = [1, 256], strides = [1, 1]} : vector<8x256xf32> to vector<1x256xf32>
    %274 = vector.broadcast %272 : vector<8x1xf32> to vector<8x256xf32>
    %275 = vector.broadcast %273 : vector<1x256xf32> to vector<8x256xf32>
    %276 = arith.mulf %274, %275 : vector<8x256xf32>
    %277 = vector.extract_strided_slice %31 {offsets = [0, 1], sizes = [8, 1], strides = [1, 1]} : vector<8x8xf32> to vector<8x1xf32>
    %278 = vector.extract_strided_slice %269 {offsets = [1, 0], sizes = [1, 256], strides = [1, 1]} : vector<8x256xf32> to vector<1x256xf32>
    %279 = vector.broadcast %277 : vector<8x1xf32> to vector<8x256xf32>
    %280 = vector.broadcast %278 : vector<1x256xf32> to vector<8x256xf32>
    %281 = arith.mulf %279, %280 : vector<8x256xf32>
    %282 = arith.addf %276, %281 : vector<8x256xf32>
    %283 = vector.extract_strided_slice %31 {offsets = [0, 2], sizes = [8, 1], strides = [1, 1]} : vector<8x8xf32> to vector<8x1xf32>
    %284 = vector.extract_strided_slice %269 {offsets = [2, 0], sizes = [1, 256], strides = [1, 1]} : vector<8x256xf32> to vector<1x256xf32>
    %285 = vector.broadcast %283 : vector<8x1xf32> to vector<8x256xf32>
    %286 = vector.broadcast %284 : vector<1x256xf32> to vector<8x256xf32>
    %287 = arith.mulf %285, %286 : vector<8x256xf32>
    %288 = arith.addf %282, %287 : vector<8x256xf32>
    %289 = vector.extract_strided_slice %31 {offsets = [0, 3], sizes = [8, 1], strides = [1, 1]} : vector<8x8xf32> to vector<8x1xf32>
    %290 = vector.extract_strided_slice %269 {offsets = [3, 0], sizes = [1, 256], strides = [1, 1]} : vector<8x256xf32> to vector<1x256xf32>
    %291 = vector.broadcast %289 : vector<8x1xf32> to vector<8x256xf32>
    %292 = vector.broadcast %290 : vector<1x256xf32> to vector<8x256xf32>
    %293 = arith.mulf %291, %292 : vector<8x256xf32>
    %294 = arith.addf %288, %293 : vector<8x256xf32>
    %295 = vector.extract_strided_slice %31 {offsets = [0, 4], sizes = [8, 1], strides = [1, 1]} : vector<8x8xf32> to vector<8x1xf32>
    %296 = vector.extract_strided_slice %269 {offsets = [4, 0], sizes = [1, 256], strides = [1, 1]} : vector<8x256xf32> to vector<1x256xf32>
    %297 = vector.broadcast %295 : vector<8x1xf32> to vector<8x256xf32>
    %298 = vector.broadcast %296 : vector<1x256xf32> to vector<8x256xf32>
    %299 = arith.mulf %297, %298 : vector<8x256xf32>
    %300 = arith.addf %294, %299 : vector<8x256xf32>
    %301 = vector.extract_strided_slice %31 {offsets = [0, 5], sizes = [8, 1], strides = [1, 1]} : vector<8x8xf32> to vector<8x1xf32>
    %302 = vector.extract_strided_slice %269 {offsets = [5, 0], sizes = [1, 256], strides = [1, 1]} : vector<8x256xf32> to vector<1x256xf32>
    %303 = vector.broadcast %301 : vector<8x1xf32> to vector<8x256xf32>
    %304 = vector.broadcast %302 : vector<1x256xf32> to vector<8x256xf32>
    %305 = arith.mulf %303, %304 : vector<8x256xf32>
    %306 = arith.addf %300, %305 : vector<8x256xf32>
    %307 = vector.extract_strided_slice %31 {offsets = [0, 6], sizes = [8, 1], strides = [1, 1]} : vector<8x8xf32> to vector<8x1xf32>
    %308 = vector.extract_strided_slice %269 {offsets = [6, 0], sizes = [1, 256], strides = [1, 1]} : vector<8x256xf32> to vector<1x256xf32>
    %309 = vector.broadcast %307 : vector<8x1xf32> to vector<8x256xf32>
    %310 = vector.broadcast %308 : vector<1x256xf32> to vector<8x256xf32>
    %311 = arith.mulf %309, %310 : vector<8x256xf32>
    %312 = arith.addf %306, %311 : vector<8x256xf32>
    %313 = vector.extract_strided_slice %31 {offsets = [0, 7], sizes = [8, 1], strides = [1, 1]} : vector<8x8xf32> to vector<8x1xf32>
    %314 = vector.extract_strided_slice %269 {offsets = [7, 0], sizes = [1, 256], strides = [1, 1]} : vector<8x256xf32> to vector<1x256xf32>
    %315 = vector.broadcast %313 : vector<8x1xf32> to vector<8x256xf32>
    %316 = vector.broadcast %314 : vector<1x256xf32> to vector<8x256xf32>
    %317 = arith.mulf %315, %316 : vector<8x256xf32>
    %318 = arith.addf %312, %317 : vector<8x256xf32>
    %319 = vector.broadcast %57 : vector<8x1xf32> to vector<8x256xf32>
    %320 = vector.broadcast %271 : vector<1x256xf32> to vector<8x256xf32>
    %321 = arith.mulf %319, %320 : vector<8x256xf32>
    %322 = arith.addf %318, %321 : vector<8x256xf32>
    %323 = vector.shape_cast %322 : vector<8x256xf32> to vector<1x8x256xf32>
    %cst_113 = arith.constant dense<0.000000e+00> : vector<1xf32>
    %324 = vector.multi_reduction <add>, %323, %cst_113 [1, 2] : vector<1x8x256xf32> to vector<1xf32>
    %325 = vector.shape_cast %324 : vector<1xf32> to vector<1x1x1xf32>
    %326 = vector.extract %325[0, 0, 0] : f32 from vector<1x1x1xf32>
    %327 = arith.mulf %322, %322 : vector<8x256xf32>
    %328 = vector.shape_cast %327 : vector<8x256xf32> to vector<1x8x256xf32>
    %cst_114 = arith.constant dense<0.000000e+00> : vector<1xf32>
    %329 = vector.multi_reduction <add>, %328, %cst_114 [1, 2] : vector<1x8x256xf32> to vector<1xf32>
    %330 = vector.shape_cast %329 : vector<1xf32> to vector<1x1x1xf32>
    %331 = vector.extract %330[0, 0, 0] : f32 from vector<1x1x1xf32>
    %cst_115 = arith.constant 6.250000e-04 : f32
    %332 = arith.mulf %326, %cst_115 : f32
    %cst_116 = arith.constant 6.250000e-04 : f32
    %333 = arith.mulf %331, %cst_116 : f32
    %334 = arith.mulf %332, %332 : f32
    %335 = arith.subf %333, %334 : f32
    %cst_117 = arith.constant 0.000000e+00 : f32
    %336 = arith.maximumf %335, %cst_117 : f32
    %cst_118 = arith.constant 9.99999974E-6 : f32
    %337 = arith.addf %336, %cst_118 : f32
    %338 = math.rsqrt %337 : f32
    %339 = vector.broadcast %338 : f32 to vector<8x1xf32>
    %340 = arith.mulf %33, %339 : vector<8x1xf32>
    %341 = vector.broadcast %332 : f32 to vector<8x1xf32>
    %342 = arith.mulf %340, %341 : vector<8x1xf32>
    %343 = arith.subf %35, %342 : vector<8x1xf32>
    %344 = vector.broadcast %340 : vector<8x1xf32> to vector<8x256xf32>
    %345 = arith.mulf %344, %322 : vector<8x256xf32>
    %346 = vector.broadcast %343 : vector<8x1xf32> to vector<8x256xf32>
    %347 = arith.addf %345, %346 : vector<8x256xf32>
    %348 = vector.broadcast %62 : vector<1x256xf32> to vector<8x256xf32>
    %349 = arith.mulf %347, %348 : vector<8x256xf32>
    %cst_119 = arith.constant 0.000000e+00 : f32
    %350 = vector.broadcast %cst_119 : f32 to vector<8x256xf32>
    %351 = arith.maximumf %349, %350 : vector<8x256xf32>
    %352 = vector.extract_strided_slice %37 {offsets = [0, 0], sizes = [8, 1], strides = [1, 1]} : vector<8x8xf32> to vector<8x1xf32>
    %353 = vector.extract_strided_slice %351 {offsets = [0, 0], sizes = [1, 256], strides = [1, 1]} : vector<8x256xf32> to vector<1x256xf32>
    %354 = vector.broadcast %352 : vector<8x1xf32> to vector<8x256xf32>
    %355 = vector.broadcast %353 : vector<1x256xf32> to vector<8x256xf32>
    %356 = arith.mulf %354, %355 : vector<8x256xf32>
    %357 = vector.extract_strided_slice %37 {offsets = [0, 1], sizes = [8, 1], strides = [1, 1]} : vector<8x8xf32> to vector<8x1xf32>
    %358 = vector.extract_strided_slice %351 {offsets = [1, 0], sizes = [1, 256], strides = [1, 1]} : vector<8x256xf32> to vector<1x256xf32>
    %359 = vector.broadcast %357 : vector<8x1xf32> to vector<8x256xf32>
    %360 = vector.broadcast %358 : vector<1x256xf32> to vector<8x256xf32>
    %361 = arith.mulf %359, %360 : vector<8x256xf32>
    %362 = arith.addf %356, %361 : vector<8x256xf32>
    %363 = vector.extract_strided_slice %37 {offsets = [0, 2], sizes = [8, 1], strides = [1, 1]} : vector<8x8xf32> to vector<8x1xf32>
    %364 = vector.extract_strided_slice %351 {offsets = [2, 0], sizes = [1, 256], strides = [1, 1]} : vector<8x256xf32> to vector<1x256xf32>
    %365 = vector.broadcast %363 : vector<8x1xf32> to vector<8x256xf32>
    %366 = vector.broadcast %364 : vector<1x256xf32> to vector<8x256xf32>
    %367 = arith.mulf %365, %366 : vector<8x256xf32>
    %368 = arith.addf %362, %367 : vector<8x256xf32>
    %369 = vector.extract_strided_slice %37 {offsets = [0, 3], sizes = [8, 1], strides = [1, 1]} : vector<8x8xf32> to vector<8x1xf32>
    %370 = vector.extract_strided_slice %351 {offsets = [3, 0], sizes = [1, 256], strides = [1, 1]} : vector<8x256xf32> to vector<1x256xf32>
    %371 = vector.broadcast %369 : vector<8x1xf32> to vector<8x256xf32>
    %372 = vector.broadcast %370 : vector<1x256xf32> to vector<8x256xf32>
    %373 = arith.mulf %371, %372 : vector<8x256xf32>
    %374 = arith.addf %368, %373 : vector<8x256xf32>
    %375 = vector.extract_strided_slice %37 {offsets = [0, 4], sizes = [8, 1], strides = [1, 1]} : vector<8x8xf32> to vector<8x1xf32>
    %376 = vector.extract_strided_slice %351 {offsets = [4, 0], sizes = [1, 256], strides = [1, 1]} : vector<8x256xf32> to vector<1x256xf32>
    %377 = vector.broadcast %375 : vector<8x1xf32> to vector<8x256xf32>
    %378 = vector.broadcast %376 : vector<1x256xf32> to vector<8x256xf32>
    %379 = arith.mulf %377, %378 : vector<8x256xf32>
    %380 = arith.addf %374, %379 : vector<8x256xf32>
    %381 = vector.extract_strided_slice %37 {offsets = [0, 5], sizes = [8, 1], strides = [1, 1]} : vector<8x8xf32> to vector<8x1xf32>
    %382 = vector.extract_strided_slice %351 {offsets = [5, 0], sizes = [1, 256], strides = [1, 1]} : vector<8x256xf32> to vector<1x256xf32>
    %383 = vector.broadcast %381 : vector<8x1xf32> to vector<8x256xf32>
    %384 = vector.broadcast %382 : vector<1x256xf32> to vector<8x256xf32>
    %385 = arith.mulf %383, %384 : vector<8x256xf32>
    %386 = arith.addf %380, %385 : vector<8x256xf32>
    %387 = vector.extract_strided_slice %37 {offsets = [0, 6], sizes = [8, 1], strides = [1, 1]} : vector<8x8xf32> to vector<8x1xf32>
    %388 = vector.extract_strided_slice %351 {offsets = [6, 0], sizes = [1, 256], strides = [1, 1]} : vector<8x256xf32> to vector<1x256xf32>
    %389 = vector.broadcast %387 : vector<8x1xf32> to vector<8x256xf32>
    %390 = vector.broadcast %388 : vector<1x256xf32> to vector<8x256xf32>
    %391 = arith.mulf %389, %390 : vector<8x256xf32>
    %392 = arith.addf %386, %391 : vector<8x256xf32>
    %393 = vector.extract_strided_slice %37 {offsets = [0, 7], sizes = [8, 1], strides = [1, 1]} : vector<8x8xf32> to vector<8x1xf32>
    %394 = vector.extract_strided_slice %351 {offsets = [7, 0], sizes = [1, 256], strides = [1, 1]} : vector<8x256xf32> to vector<1x256xf32>
    %395 = vector.broadcast %393 : vector<8x1xf32> to vector<8x256xf32>
    %396 = vector.broadcast %394 : vector<1x256xf32> to vector<8x256xf32>
    %397 = arith.mulf %395, %396 : vector<8x256xf32>
    %398 = arith.addf %392, %397 : vector<8x256xf32>
    %399 = vector.shape_cast %398 : vector<8x256xf32> to vector<1x8x256xf32>
    %cst_120 = arith.constant dense<0.000000e+00> : vector<1xf32>
    %400 = vector.multi_reduction <add>, %399, %cst_120 [1, 2] : vector<1x8x256xf32> to vector<1xf32>
    %401 = vector.shape_cast %400 : vector<1xf32> to vector<1x1x1xf32>
    %402 = vector.extract %401[0, 0, 0] : f32 from vector<1x1x1xf32>
    %403 = arith.mulf %398, %398 : vector<8x256xf32>
    %404 = vector.shape_cast %403 : vector<8x256xf32> to vector<1x8x256xf32>
    %cst_121 = arith.constant dense<0.000000e+00> : vector<1xf32>
    %405 = vector.multi_reduction <add>, %404, %cst_121 [1, 2] : vector<1x8x256xf32> to vector<1xf32>
    %406 = vector.shape_cast %405 : vector<1xf32> to vector<1x1x1xf32>
    %407 = vector.extract %406[0, 0, 0] : f32 from vector<1x1x1xf32>
    %cst_122 = arith.constant 6.250000e-04 : f32
    %408 = arith.mulf %402, %cst_122 : f32
    %cst_123 = arith.constant 6.250000e-04 : f32
    %409 = arith.mulf %407, %cst_123 : f32
    %410 = arith.mulf %408, %408 : f32
    %411 = arith.subf %409, %410 : f32
    %cst_124 = arith.constant 0.000000e+00 : f32
    %412 = arith.maximumf %411, %cst_124 : f32
    %cst_125 = arith.constant 9.99999974E-6 : f32
    %413 = arith.addf %412, %cst_125 : f32
    %414 = math.rsqrt %413 : f32
    %415 = vector.broadcast %414 : f32 to vector<8x1xf32>
    %416 = arith.mulf %39, %415 : vector<8x1xf32>
    %417 = vector.broadcast %408 : f32 to vector<8x1xf32>
    %418 = arith.mulf %416, %417 : vector<8x1xf32>
    %419 = arith.subf %41, %418 : vector<8x1xf32>
    %420 = vector.broadcast %416 : vector<8x1xf32> to vector<8x256xf32>
    %421 = arith.mulf %420, %398 : vector<8x256xf32>
    %422 = vector.broadcast %419 : vector<8x1xf32> to vector<8x256xf32>
    %423 = arith.addf %421, %422 : vector<8x256xf32>
    %424 = vector.broadcast %62 : vector<1x256xf32> to vector<8x256xf32>
    %425 = arith.mulf %423, %424 : vector<8x256xf32>
    %426 = arith.addf %425, %193 : vector<8x256xf32>
    %cst_126 = arith.constant 0.000000e+00 : f32
    %427 = vector.broadcast %cst_126 : f32 to vector<8x256xf32>
    %428 = arith.maximumf %426, %427 : vector<8x256xf32>
    %429 = vector.extract_strided_slice %43 {offsets = [0, 0], sizes = [4, 1], strides = [1, 1]} : vector<4x8xf32> to vector<4x1xf32>
    %430 = vector.extract_strided_slice %428 {offsets = [0, 0], sizes = [1, 256], strides = [1, 1]} : vector<8x256xf32> to vector<1x256xf32>
    %431 = vector.broadcast %429 : vector<4x1xf32> to vector<4x256xf32>
    %432 = vector.broadcast %430 : vector<1x256xf32> to vector<4x256xf32>
    %433 = arith.mulf %431, %432 : vector<4x256xf32>
    %434 = vector.extract_strided_slice %43 {offsets = [0, 1], sizes = [4, 1], strides = [1, 1]} : vector<4x8xf32> to vector<4x1xf32>
    %435 = vector.extract_strided_slice %428 {offsets = [1, 0], sizes = [1, 256], strides = [1, 1]} : vector<8x256xf32> to vector<1x256xf32>
    %436 = vector.broadcast %434 : vector<4x1xf32> to vector<4x256xf32>
    %437 = vector.broadcast %435 : vector<1x256xf32> to vector<4x256xf32>
    %438 = arith.mulf %436, %437 : vector<4x256xf32>
    %439 = arith.addf %433, %438 : vector<4x256xf32>
    %440 = vector.extract_strided_slice %43 {offsets = [0, 2], sizes = [4, 1], strides = [1, 1]} : vector<4x8xf32> to vector<4x1xf32>
    %441 = vector.extract_strided_slice %428 {offsets = [2, 0], sizes = [1, 256], strides = [1, 1]} : vector<8x256xf32> to vector<1x256xf32>
    %442 = vector.broadcast %440 : vector<4x1xf32> to vector<4x256xf32>
    %443 = vector.broadcast %441 : vector<1x256xf32> to vector<4x256xf32>
    %444 = arith.mulf %442, %443 : vector<4x256xf32>
    %445 = arith.addf %439, %444 : vector<4x256xf32>
    %446 = vector.extract_strided_slice %43 {offsets = [0, 3], sizes = [4, 1], strides = [1, 1]} : vector<4x8xf32> to vector<4x1xf32>
    %447 = vector.extract_strided_slice %428 {offsets = [3, 0], sizes = [1, 256], strides = [1, 1]} : vector<8x256xf32> to vector<1x256xf32>
    %448 = vector.broadcast %446 : vector<4x1xf32> to vector<4x256xf32>
    %449 = vector.broadcast %447 : vector<1x256xf32> to vector<4x256xf32>
    %450 = arith.mulf %448, %449 : vector<4x256xf32>
    %451 = arith.addf %445, %450 : vector<4x256xf32>
    %452 = vector.extract_strided_slice %43 {offsets = [0, 4], sizes = [4, 1], strides = [1, 1]} : vector<4x8xf32> to vector<4x1xf32>
    %453 = vector.extract_strided_slice %428 {offsets = [4, 0], sizes = [1, 256], strides = [1, 1]} : vector<8x256xf32> to vector<1x256xf32>
    %454 = vector.broadcast %452 : vector<4x1xf32> to vector<4x256xf32>
    %455 = vector.broadcast %453 : vector<1x256xf32> to vector<4x256xf32>
    %456 = arith.mulf %454, %455 : vector<4x256xf32>
    %457 = arith.addf %451, %456 : vector<4x256xf32>
    %458 = vector.extract_strided_slice %43 {offsets = [0, 5], sizes = [4, 1], strides = [1, 1]} : vector<4x8xf32> to vector<4x1xf32>
    %459 = vector.extract_strided_slice %428 {offsets = [5, 0], sizes = [1, 256], strides = [1, 1]} : vector<8x256xf32> to vector<1x256xf32>
    %460 = vector.broadcast %458 : vector<4x1xf32> to vector<4x256xf32>
    %461 = vector.broadcast %459 : vector<1x256xf32> to vector<4x256xf32>
    %462 = arith.mulf %460, %461 : vector<4x256xf32>
    %463 = arith.addf %457, %462 : vector<4x256xf32>
    %464 = vector.extract_strided_slice %43 {offsets = [0, 6], sizes = [4, 1], strides = [1, 1]} : vector<4x8xf32> to vector<4x1xf32>
    %465 = vector.extract_strided_slice %428 {offsets = [6, 0], sizes = [1, 256], strides = [1, 1]} : vector<8x256xf32> to vector<1x256xf32>
    %466 = vector.broadcast %464 : vector<4x1xf32> to vector<4x256xf32>
    %467 = vector.broadcast %465 : vector<1x256xf32> to vector<4x256xf32>
    %468 = arith.mulf %466, %467 : vector<4x256xf32>
    %469 = arith.addf %463, %468 : vector<4x256xf32>
    %470 = vector.extract_strided_slice %43 {offsets = [0, 7], sizes = [4, 1], strides = [1, 1]} : vector<4x8xf32> to vector<4x1xf32>
    %471 = vector.extract_strided_slice %428 {offsets = [7, 0], sizes = [1, 256], strides = [1, 1]} : vector<8x256xf32> to vector<1x256xf32>
    %472 = vector.broadcast %470 : vector<4x1xf32> to vector<4x256xf32>
    %473 = vector.broadcast %471 : vector<1x256xf32> to vector<4x256xf32>
    %474 = arith.mulf %472, %473 : vector<4x256xf32>
    %475 = arith.addf %469, %474 : vector<4x256xf32>
    %476 = vector.shape_cast %475 : vector<4x256xf32> to vector<1x4x256xf32>
    %cst_127 = arith.constant dense<0.000000e+00> : vector<1xf32>
    %477 = vector.multi_reduction <add>, %476, %cst_127 [1, 2] : vector<1x4x256xf32> to vector<1xf32>
    %478 = vector.shape_cast %477 : vector<1xf32> to vector<1x1x1xf32>
    %479 = vector.extract %478[0, 0, 0] : f32 from vector<1x1x1xf32>
    %480 = arith.mulf %475, %475 : vector<4x256xf32>
    %481 = vector.shape_cast %480 : vector<4x256xf32> to vector<1x4x256xf32>
    %cst_128 = arith.constant dense<0.000000e+00> : vector<1xf32>
    %482 = vector.multi_reduction <add>, %481, %cst_128 [1, 2] : vector<1x4x256xf32> to vector<1xf32>
    %483 = vector.shape_cast %482 : vector<1xf32> to vector<1x1x1xf32>
    %484 = vector.extract %483[0, 0, 0] : f32 from vector<1x1x1xf32>
    %cst_129 = arith.constant 1.250000e-03 : f32
    %485 = arith.mulf %479, %cst_129 : f32
    %cst_130 = arith.constant 1.250000e-03 : f32
    %486 = arith.mulf %484, %cst_130 : f32
    %487 = arith.mulf %485, %485 : f32
    %488 = arith.subf %486, %487 : f32
    %cst_131 = arith.constant 0.000000e+00 : f32
    %489 = arith.maximumf %488, %cst_131 : f32
    %cst_132 = arith.constant 9.99999974E-6 : f32
    %490 = arith.addf %489, %cst_132 : f32
    %491 = math.rsqrt %490 : f32
    %492 = vector.broadcast %491 : f32 to vector<4x1xf32>
    %493 = arith.mulf %45, %492 : vector<4x1xf32>
    %494 = vector.broadcast %485 : f32 to vector<4x1xf32>
    %495 = arith.mulf %493, %494 : vector<4x1xf32>
    %496 = arith.subf %47, %495 : vector<4x1xf32>
    %497 = vector.broadcast %493 : vector<4x1xf32> to vector<4x256xf32>
    %498 = arith.mulf %497, %475 : vector<4x256xf32>
    %499 = vector.broadcast %496 : vector<4x1xf32> to vector<4x256xf32>
    %500 = arith.addf %498, %499 : vector<4x256xf32>
    %501 = vector.broadcast %62 : vector<1x256xf32> to vector<4x256xf32>
    %502 = arith.mulf %500, %501 : vector<4x256xf32>
    %cst_133 = arith.constant 0.000000e+00 : f32
    %503 = vector.broadcast %cst_133 : f32 to vector<4x256xf32>
    %504 = arith.maximumf %502, %503 : vector<4x256xf32>
    %505 = vector.extract_strided_slice %49 {offsets = [0, 0], sizes = [1, 1], strides = [1, 1]} : vector<1x4xf32> to vector<1x1xf32>
    %506 = vector.extract_strided_slice %504 {offsets = [0, 0], sizes = [1, 256], strides = [1, 1]} : vector<4x256xf32> to vector<1x256xf32>
    %507 = vector.broadcast %505 : vector<1x1xf32> to vector<1x256xf32>
    %508 = arith.mulf %507, %506 : vector<1x256xf32>
    %509 = vector.extract_strided_slice %49 {offsets = [0, 1], sizes = [1, 1], strides = [1, 1]} : vector<1x4xf32> to vector<1x1xf32>
    %510 = vector.extract_strided_slice %504 {offsets = [1, 0], sizes = [1, 256], strides = [1, 1]} : vector<4x256xf32> to vector<1x256xf32>
    %511 = vector.broadcast %509 : vector<1x1xf32> to vector<1x256xf32>
    %512 = arith.mulf %511, %510 : vector<1x256xf32>
    %513 = arith.addf %508, %512 : vector<1x256xf32>
    %514 = vector.extract_strided_slice %49 {offsets = [0, 2], sizes = [1, 1], strides = [1, 1]} : vector<1x4xf32> to vector<1x1xf32>
    %515 = vector.extract_strided_slice %504 {offsets = [2, 0], sizes = [1, 256], strides = [1, 1]} : vector<4x256xf32> to vector<1x256xf32>
    %516 = vector.broadcast %514 : vector<1x1xf32> to vector<1x256xf32>
    %517 = arith.mulf %516, %515 : vector<1x256xf32>
    %518 = arith.addf %513, %517 : vector<1x256xf32>
    %519 = vector.extract_strided_slice %49 {offsets = [0, 3], sizes = [1, 1], strides = [1, 1]} : vector<1x4xf32> to vector<1x1xf32>
    %520 = vector.extract_strided_slice %504 {offsets = [3, 0], sizes = [1, 256], strides = [1, 1]} : vector<4x256xf32> to vector<1x256xf32>
    %521 = vector.broadcast %519 : vector<1x1xf32> to vector<1x256xf32>
    %522 = arith.mulf %521, %520 : vector<1x256xf32>
    %523 = arith.addf %518, %522 : vector<1x256xf32>
    %524 = vector.shape_cast %523 : vector<1x256xf32> to vector<1x1x256xf32>
    %cst_134 = arith.constant dense<0.000000e+00> : vector<1xf32>
    %525 = vector.multi_reduction <add>, %524, %cst_134 [1, 2] : vector<1x1x256xf32> to vector<1xf32>
    %526 = vector.shape_cast %525 : vector<1xf32> to vector<1x1x1xf32>
    %527 = vector.extract %526[0, 0, 0] : f32 from vector<1x1x1xf32>
    %528 = arith.mulf %523, %523 : vector<1x256xf32>
    %529 = vector.shape_cast %528 : vector<1x256xf32> to vector<1x1x256xf32>
    %cst_135 = arith.constant dense<0.000000e+00> : vector<1xf32>
    %530 = vector.multi_reduction <add>, %529, %cst_135 [1, 2] : vector<1x1x256xf32> to vector<1xf32>
    %531 = vector.shape_cast %530 : vector<1xf32> to vector<1x1x1xf32>
    %532 = vector.extract %531[0, 0, 0] : f32 from vector<1x1x1xf32>
    %cst_136 = arith.constant 5.000000e-03 : f32
    %533 = arith.mulf %527, %cst_136 : f32
    %cst_137 = arith.constant 5.000000e-03 : f32
    %534 = arith.mulf %532, %cst_137 : f32
    %535 = arith.mulf %533, %533 : f32
    %536 = arith.subf %534, %535 : f32
    %cst_138 = arith.constant 0.000000e+00 : f32
    %537 = arith.maximumf %536, %cst_138 : f32
    %cst_139 = arith.constant 9.99999974E-6 : f32
    %538 = arith.addf %537, %cst_139 : f32
    %539 = math.rsqrt %538 : f32
    %540 = vector.broadcast %539 : f32 to vector<1x1xf32>
    %541 = arith.mulf %51, %540 : vector<1x1xf32>
    %542 = vector.broadcast %533 : f32 to vector<1x1xf32>
    %543 = arith.mulf %541, %542 : vector<1x1xf32>
    %544 = arith.subf %53, %543 : vector<1x1xf32>
    %545 = vector.broadcast %541 : vector<1x1xf32> to vector<1x256xf32>
    %546 = arith.mulf %545, %523 : vector<1x256xf32>
    %547 = vector.broadcast %544 : vector<1x1xf32> to vector<1x256xf32>
    %548 = arith.addf %546, %547 : vector<1x256xf32>
    %549 = arith.mulf %548, %62 : vector<1x256xf32>
    %cst_140 = arith.constant -1.000000e+30 : f32
    %550 = vector.broadcast %cst_140 : f32 to vector<1x256xf32>
    %551 = arith.select %60, %549, %550 : vector<1x256xi1>, vector<1x256xf32>
    %cst_141 = arith.constant dense<0xFF800000> : vector<1xf32>
    %552 = vector.multi_reduction <maximumf>, %551, %cst_141 [1] : vector<1x256xf32> to vector<1xf32>
    %553 = vector.shape_cast %552 : vector<1xf32> to vector<1x1xf32>
    %554 = vector.broadcast %553 : vector<1x1xf32> to vector<1x256xf32>
    %555 = arith.subf %551, %554 : vector<1x256xf32>
    %556 = math.exp %555 : vector<1x256xf32>
    %cst_142 = arith.constant dense<0.000000e+00> : vector<1xf32>
    %557 = vector.multi_reduction <add>, %556, %cst_142 [1] : vector<1x256xf32> to vector<1xf32>
    %558 = vector.shape_cast %557 : vector<1xf32> to vector<1x1xf32>
    %559 = vector.broadcast %558 : vector<1x1xf32> to vector<1x256xf32>
    %560 = arith.divf %556, %559 : vector<1x256xf32>
    %c0_143 = arith.constant 0 : index
    %c0_144 = arith.constant 0 : index
    %c0_145 = arith.constant 0 : index
    %561 = vector.load %arg6[%c0_143, %c0_144, %c0_145] : memref<2x1x256xf32, #tpu.memory_space<vmem>>, vector<1x1x256xf32>
    %562 = vector.shape_cast %561 : vector<1x1x256xf32> to vector<1x256xf32>
    %563 = vector.shape_cast %560 : vector<1x256xf32> to vector<1x1x256xf32>
    tpu.vector_store %arg6[%c0_143, %c0_144, %c0_145], %563 {strides = array<i32>} : memref<2x1x256xf32, #tpu.memory_space<vmem>>, vector<1x1x256xf32>,
    %564 = vector.broadcast %560 : vector<1x256xf32> to vector<2x256xf32>
    %565 = arith.mulf %66, %564 : vector<2x256xf32>
    %cst_146 = arith.constant dense<0.000000e+00> : vector<2xf32>
    %566 = vector.multi_reduction <add>, %565, %cst_146 [1] : vector<2x256xf32> to vector<2xf32>
    %567 = vector.shape_cast %566 : vector<2xf32> to vector<2x1xf32>
    %c0_147 = arith.constant 0 : index
    %c0_148 = arith.constant 0 : index
    %c0_149 = arith.constant 0 : index
    %568 = vector.load %arg5[%c0_147, %c0_148, %c0_149] : memref<2x2x1xf32, #tpu.memory_space<vmem>>, vector<1x2x1xf32>
    %569 = vector.shape_cast %568 : vector<1x2x1xf32> to vector<2x1xf32>
    %570 = vector.shape_cast %567 : vector<2x1xf32> to vector<1x2x1xf32>
    tpu.vector_store %arg5[%c0_147, %c0_148, %c0_149], %570 {strides = array<i32>} : memref<2x2x1xf32, #tpu.memory_space<vmem>>, vector<1x2x1xf32>,
    %c1_150 = arith.constant 1 : index
    %c0_151 = arith.constant 0 : index
    %c0_152 = arith.constant 0 : index
    %571 = vector.load %arg1[%c1_150, %c0_151, %c0_152] : memref<2x32x256xf32, #tpu.memory_space<vmem>>, vector<1x32x256xf32>
    %572 = vector.shape_cast %571 : vector<1x32x256xf32> to vector<32x256xf32>
    %c1_153 = arith.constant 1 : index
    %c0_154 = arith.constant 0 : index
    %c0_155 = arith.constant 0 : index
    %573 = vector.load %arg2[%c1_153, %c0_154, %c0_155] : memref<2x2x256xf32, #tpu.memory_space<vmem>>, vector<1x2x256xf32>
    %574 = vector.shape_cast %573 : vector<1x2x256xf32> to vector<2x256xf32>
    %cst_156 = arith.constant dense<0.000000e+00> : vector<32x256xf32>
    %575 = tpu.matmul %1, %572, %cst_156 {dimension_numbers = #tpu.dot_dimension_numbers<[1], [0], [0], [1], [0, 0, 1, 1], [], []>} : vector<32x32xf32>, vector<32x256xf32>, vector<32x256xf32> -> vector<32x256xf32>
    %576 = vector.shape_cast %575 : vector<32x256xf32> to vector<1x32x256xf32>
    %cst_157 = arith.constant dense<0.000000e+00> : vector<1xf32>
    %577 = vector.multi_reduction <add>, %576, %cst_157 [1, 2] : vector<1x32x256xf32> to vector<1xf32>
    %578 = vector.shape_cast %577 : vector<1xf32> to vector<1x1x1xf32>
    %579 = vector.extract %578[0, 0, 0] : f32 from vector<1x1x1xf32>
    %580 = arith.mulf %575, %575 : vector<32x256xf32>
    %581 = vector.shape_cast %580 : vector<32x256xf32> to vector<1x32x256xf32>
    %cst_158 = arith.constant dense<0.000000e+00> : vector<1xf32>
    %582 = vector.multi_reduction <add>, %581, %cst_158 [1, 2] : vector<1x32x256xf32> to vector<1xf32>
    %583 = vector.shape_cast %582 : vector<1xf32> to vector<1x1x1xf32>
    %584 = vector.extract %583[0, 0, 0] : f32 from vector<1x1x1xf32>
    %cst_159 = arith.constant 1.562500e-04 : f32
    %585 = arith.mulf %579, %cst_159 : f32
    %cst_160 = arith.constant 1.562500e-04 : f32
    %586 = arith.mulf %584, %cst_160 : f32
    %587 = arith.mulf %585, %585 : f32
    %588 = arith.subf %586, %587 : f32
    %cst_161 = arith.constant 0.000000e+00 : f32
    %589 = arith.maximumf %588, %cst_161 : f32
    %cst_162 = arith.constant 9.99999974E-6 : f32
    %590 = arith.addf %589, %cst_162 : f32
    %591 = math.rsqrt %590 : f32
    %592 = vector.broadcast %591 : f32 to vector<32x1xf32>
    %593 = arith.mulf %3, %592 : vector<32x1xf32>
    %594 = vector.broadcast %585 : f32 to vector<32x1xf32>
    %595 = arith.mulf %593, %594 : vector<32x1xf32>
    %596 = arith.subf %5, %595 : vector<32x1xf32>
    %597 = vector.broadcast %593 : vector<32x1xf32> to vector<32x256xf32>
    %598 = arith.mulf %597, %575 : vector<32x256xf32>
    %599 = vector.broadcast %596 : vector<32x1xf32> to vector<32x256xf32>
    %600 = arith.addf %598, %599 : vector<32x256xf32>
    %601 = vector.broadcast %62 : vector<1x256xf32> to vector<32x256xf32>
    %602 = arith.mulf %600, %601 : vector<32x256xf32>
    %cst_163 = arith.constant 0.000000e+00 : f32
    %603 = vector.broadcast %cst_163 : f32 to vector<32x256xf32>
    %604 = arith.maximumf %602, %603 : vector<32x256xf32>
    %cst_164 = arith.constant dense<0xFF800000> : vector<256xf32>
    %605 = vector.multi_reduction <maximumf>, %604, %cst_164 [0] : vector<32x256xf32> to vector<256xf32>
    %606 = vector.shape_cast %605 : vector<256xf32> to vector<1x256xf32>
    %cst_165 = arith.constant dense<0.000000e+00> : vector<32x256xf32>
    %607 = tpu.matmul %7, %604, %cst_165 {dimension_numbers = #tpu.dot_dimension_numbers<[1], [0], [0], [1], [0, 0, 1, 1], [], []>} : vector<32x32xf32>, vector<32x256xf32>, vector<32x256xf32> -> vector<32x256xf32>
    %608 = vector.broadcast %55 : vector<32x1xf32> to vector<32x256xf32>
    %609 = vector.broadcast %606 : vector<1x256xf32> to vector<32x256xf32>
    %610 = arith.mulf %608, %609 : vector<32x256xf32>
    %611 = arith.addf %607, %610 : vector<32x256xf32>
    %612 = vector.shape_cast %611 : vector<32x256xf32> to vector<1x32x256xf32>
    %cst_166 = arith.constant dense<0.000000e+00> : vector<1xf32>
    %613 = vector.multi_reduction <add>, %612, %cst_166 [1, 2] : vector<1x32x256xf32> to vector<1xf32>
    %614 = vector.shape_cast %613 : vector<1xf32> to vector<1x1x1xf32>
    %615 = vector.extract %614[0, 0, 0] : f32 from vector<1x1x1xf32>
    %616 = arith.mulf %611, %611 : vector<32x256xf32>
    %617 = vector.shape_cast %616 : vector<32x256xf32> to vector<1x32x256xf32>
    %cst_167 = arith.constant dense<0.000000e+00> : vector<1xf32>
    %618 = vector.multi_reduction <add>, %617, %cst_167 [1, 2] : vector<1x32x256xf32> to vector<1xf32>
    %619 = vector.shape_cast %618 : vector<1xf32> to vector<1x1x1xf32>
    %620 = vector.extract %619[0, 0, 0] : f32 from vector<1x1x1xf32>
    %cst_168 = arith.constant 1.562500e-04 : f32
    %621 = arith.mulf %615, %cst_168 : f32
    %cst_169 = arith.constant 1.562500e-04 : f32
    %622 = arith.mulf %620, %cst_169 : f32
    %623 = arith.mulf %621, %621 : f32
    %624 = arith.subf %622, %623 : f32
    %cst_170 = arith.constant 0.000000e+00 : f32
    %625 = arith.maximumf %624, %cst_170 : f32
    %cst_171 = arith.constant 9.99999974E-6 : f32
    %626 = arith.addf %625, %cst_171 : f32
    %627 = math.rsqrt %626 : f32
    %628 = vector.broadcast %627 : f32 to vector<32x1xf32>
    %629 = arith.mulf %9, %628 : vector<32x1xf32>
    %630 = vector.broadcast %621 : f32 to vector<32x1xf32>
    %631 = arith.mulf %629, %630 : vector<32x1xf32>
    %632 = arith.subf %11, %631 : vector<32x1xf32>
    %633 = vector.broadcast %629 : vector<32x1xf32> to vector<32x256xf32>
    %634 = arith.mulf %633, %611 : vector<32x256xf32>
    %635 = vector.broadcast %632 : vector<32x1xf32> to vector<32x256xf32>
    %636 = arith.addf %634, %635 : vector<32x256xf32>
    %637 = vector.broadcast %62 : vector<1x256xf32> to vector<32x256xf32>
    %638 = arith.mulf %636, %637 : vector<32x256xf32>
    %cst_172 = arith.constant 0.000000e+00 : f32
    %639 = vector.broadcast %cst_172 : f32 to vector<32x256xf32>
    %640 = arith.maximumf %638, %639 : vector<32x256xf32>
    %cst_173 = arith.constant dense<0.000000e+00> : vector<32x256xf32>
    %641 = tpu.matmul %13, %640, %cst_173 {dimension_numbers = #tpu.dot_dimension_numbers<[1], [0], [0], [1], [0, 0, 1, 1], [], []>} : vector<32x32xf32>, vector<32x256xf32>, vector<32x256xf32> -> vector<32x256xf32>
    %642 = vector.shape_cast %641 : vector<32x256xf32> to vector<1x32x256xf32>
    %cst_174 = arith.constant dense<0.000000e+00> : vector<1xf32>
    %643 = vector.multi_reduction <add>, %642, %cst_174 [1, 2] : vector<1x32x256xf32> to vector<1xf32>
    %644 = vector.shape_cast %643 : vector<1xf32> to vector<1x1x1xf32>
    %645 = vector.extract %644[0, 0, 0] : f32 from vector<1x1x1xf32>
    %646 = arith.mulf %641, %641 : vector<32x256xf32>
    %647 = vector.shape_cast %646 : vector<32x256xf32> to vector<1x32x256xf32>
    %cst_175 = arith.constant dense<0.000000e+00> : vector<1xf32>
    %648 = vector.multi_reduction <add>, %647, %cst_175 [1, 2] : vector<1x32x256xf32> to vector<1xf32>
    %649 = vector.shape_cast %648 : vector<1xf32> to vector<1x1x1xf32>
    %650 = vector.extract %649[0, 0, 0] : f32 from vector<1x1x1xf32>
    %cst_176 = arith.constant 1.562500e-04 : f32
    %651 = arith.mulf %645, %cst_176 : f32
    %cst_177 = arith.constant 1.562500e-04 : f32
    %652 = arith.mulf %650, %cst_177 : f32
    %653 = arith.mulf %651, %651 : f32
    %654 = arith.subf %652, %653 : f32
    %cst_178 = arith.constant 0.000000e+00 : f32
    %655 = arith.maximumf %654, %cst_178 : f32
    %cst_179 = arith.constant 9.99999974E-6 : f32
    %656 = arith.addf %655, %cst_179 : f32
    %657 = math.rsqrt %656 : f32
    %658 = vector.broadcast %657 : f32 to vector<32x1xf32>
    %659 = arith.mulf %15, %658 : vector<32x1xf32>
    %660 = vector.broadcast %651 : f32 to vector<32x1xf32>
    %661 = arith.mulf %659, %660 : vector<32x1xf32>
    %662 = arith.subf %17, %661 : vector<32x1xf32>
    %663 = vector.broadcast %659 : vector<32x1xf32> to vector<32x256xf32>
    %664 = arith.mulf %663, %641 : vector<32x256xf32>
    %665 = vector.broadcast %662 : vector<32x1xf32> to vector<32x256xf32>
    %666 = arith.addf %664, %665 : vector<32x256xf32>
    %667 = vector.broadcast %62 : vector<1x256xf32> to vector<32x256xf32>
    %668 = arith.mulf %666, %667 : vector<32x256xf32>
    %669 = arith.addf %668, %572 : vector<32x256xf32>
    %cst_180 = arith.constant 0.000000e+00 : f32
    %670 = vector.broadcast %cst_180 : f32 to vector<32x256xf32>
    %671 = arith.maximumf %669, %670 : vector<32x256xf32>
    %cst_181 = arith.constant dense<0.000000e+00> : vector<8x256xf32>
    %672 = tpu.matmul %19, %671, %cst_181 {dimension_numbers = #tpu.dot_dimension_numbers<[1], [0], [0], [1], [0, 0, 1, 1], [], []>} : vector<8x32xf32>, vector<32x256xf32>, vector<8x256xf32> -> vector<8x256xf32>
    %673 = vector.shape_cast %672 : vector<8x256xf32> to vector<1x8x256xf32>
    %cst_182 = arith.constant dense<0.000000e+00> : vector<1xf32>
    %674 = vector.multi_reduction <add>, %673, %cst_182 [1, 2] : vector<1x8x256xf32> to vector<1xf32>
    %675 = vector.shape_cast %674 : vector<1xf32> to vector<1x1x1xf32>
    %676 = vector.extract %675[0, 0, 0] : f32 from vector<1x1x1xf32>
    %677 = arith.mulf %672, %672 : vector<8x256xf32>
    %678 = vector.shape_cast %677 : vector<8x256xf32> to vector<1x8x256xf32>
    %cst_183 = arith.constant dense<0.000000e+00> : vector<1xf32>
    %679 = vector.multi_reduction <add>, %678, %cst_183 [1, 2] : vector<1x8x256xf32> to vector<1xf32>
    %680 = vector.shape_cast %679 : vector<1xf32> to vector<1x1x1xf32>
    %681 = vector.extract %680[0, 0, 0] : f32 from vector<1x1x1xf32>
    %cst_184 = arith.constant 6.250000e-04 : f32
    %682 = arith.mulf %676, %cst_184 : f32
    %cst_185 = arith.constant 6.250000e-04 : f32
    %683 = arith.mulf %681, %cst_185 : f32
    %684 = arith.mulf %682, %682 : f32
    %685 = arith.subf %683, %684 : f32
    %cst_186 = arith.constant 0.000000e+00 : f32
    %686 = arith.maximumf %685, %cst_186 : f32
    %cst_187 = arith.constant 9.99999974E-6 : f32
    %687 = arith.addf %686, %cst_187 : f32
    %688 = math.rsqrt %687 : f32
    %689 = vector.broadcast %688 : f32 to vector<8x1xf32>
    %690 = arith.mulf %21, %689 : vector<8x1xf32>
    %691 = vector.broadcast %682 : f32 to vector<8x1xf32>
    %692 = arith.mulf %690, %691 : vector<8x1xf32>
    %693 = arith.subf %23, %692 : vector<8x1xf32>
    %694 = vector.broadcast %690 : vector<8x1xf32> to vector<8x256xf32>
    %695 = arith.mulf %694, %672 : vector<8x256xf32>
    %696 = vector.broadcast %693 : vector<8x1xf32> to vector<8x256xf32>
    %697 = arith.addf %695, %696 : vector<8x256xf32>
    %698 = vector.broadcast %62 : vector<1x256xf32> to vector<8x256xf32>
    %699 = arith.mulf %697, %698 : vector<8x256xf32>
    %cst_188 = arith.constant 0.000000e+00 : f32
    %700 = vector.broadcast %cst_188 : f32 to vector<8x256xf32>
    %701 = arith.maximumf %699, %700 : vector<8x256xf32>
    %702 = vector.extract_strided_slice %25 {offsets = [0, 0], sizes = [8, 1], strides = [1, 1]} : vector<8x8xf32> to vector<8x1xf32>
    %703 = vector.extract_strided_slice %701 {offsets = [0, 0], sizes = [1, 256], strides = [1, 1]} : vector<8x256xf32> to vector<1x256xf32>
    %704 = vector.broadcast %702 : vector<8x1xf32> to vector<8x256xf32>
    %705 = vector.broadcast %703 : vector<1x256xf32> to vector<8x256xf32>
    %706 = arith.mulf %704, %705 : vector<8x256xf32>
    %707 = vector.extract_strided_slice %25 {offsets = [0, 1], sizes = [8, 1], strides = [1, 1]} : vector<8x8xf32> to vector<8x1xf32>
    %708 = vector.extract_strided_slice %701 {offsets = [1, 0], sizes = [1, 256], strides = [1, 1]} : vector<8x256xf32> to vector<1x256xf32>
    %709 = vector.broadcast %707 : vector<8x1xf32> to vector<8x256xf32>
    %710 = vector.broadcast %708 : vector<1x256xf32> to vector<8x256xf32>
    %711 = arith.mulf %709, %710 : vector<8x256xf32>
    %712 = arith.addf %706, %711 : vector<8x256xf32>
    %713 = vector.extract_strided_slice %25 {offsets = [0, 2], sizes = [8, 1], strides = [1, 1]} : vector<8x8xf32> to vector<8x1xf32>
    %714 = vector.extract_strided_slice %701 {offsets = [2, 0], sizes = [1, 256], strides = [1, 1]} : vector<8x256xf32> to vector<1x256xf32>
    %715 = vector.broadcast %713 : vector<8x1xf32> to vector<8x256xf32>
    %716 = vector.broadcast %714 : vector<1x256xf32> to vector<8x256xf32>
    %717 = arith.mulf %715, %716 : vector<8x256xf32>
    %718 = arith.addf %712, %717 : vector<8x256xf32>
    %719 = vector.extract_strided_slice %25 {offsets = [0, 3], sizes = [8, 1], strides = [1, 1]} : vector<8x8xf32> to vector<8x1xf32>
    %720 = vector.extract_strided_slice %701 {offsets = [3, 0], sizes = [1, 256], strides = [1, 1]} : vector<8x256xf32> to vector<1x256xf32>
    %721 = vector.broadcast %719 : vector<8x1xf32> to vector<8x256xf32>
    %722 = vector.broadcast %720 : vector<1x256xf32> to vector<8x256xf32>
    %723 = arith.mulf %721, %722 : vector<8x256xf32>
    %724 = arith.addf %718, %723 : vector<8x256xf32>
    %725 = vector.extract_strided_slice %25 {offsets = [0, 4], sizes = [8, 1], strides = [1, 1]} : vector<8x8xf32> to vector<8x1xf32>
    %726 = vector.extract_strided_slice %701 {offsets = [4, 0], sizes = [1, 256], strides = [1, 1]} : vector<8x256xf32> to vector<1x256xf32>
    %727 = vector.broadcast %725 : vector<8x1xf32> to vector<8x256xf32>
    %728 = vector.broadcast %726 : vector<1x256xf32> to vector<8x256xf32>
    %729 = arith.mulf %727, %728 : vector<8x256xf32>
    %730 = arith.addf %724, %729 : vector<8x256xf32>
    %731 = vector.extract_strided_slice %25 {offsets = [0, 5], sizes = [8, 1], strides = [1, 1]} : vector<8x8xf32> to vector<8x1xf32>
    %732 = vector.extract_strided_slice %701 {offsets = [5, 0], sizes = [1, 256], strides = [1, 1]} : vector<8x256xf32> to vector<1x256xf32>
    %733 = vector.broadcast %731 : vector<8x1xf32> to vector<8x256xf32>
    %734 = vector.broadcast %732 : vector<1x256xf32> to vector<8x256xf32>
    %735 = arith.mulf %733, %734 : vector<8x256xf32>
    %736 = arith.addf %730, %735 : vector<8x256xf32>
    %737 = vector.extract_strided_slice %25 {offsets = [0, 6], sizes = [8, 1], strides = [1, 1]} : vector<8x8xf32> to vector<8x1xf32>
    %738 = vector.extract_strided_slice %701 {offsets = [6, 0], sizes = [1, 256], strides = [1, 1]} : vector<8x256xf32> to vector<1x256xf32>
    %739 = vector.broadcast %737 : vector<8x1xf32> to vector<8x256xf32>
    %740 = vector.broadcast %738 : vector<1x256xf32> to vector<8x256xf32>
    %741 = arith.mulf %739, %740 : vector<8x256xf32>
    %742 = arith.addf %736, %741 : vector<8x256xf32>
    %743 = vector.extract_strided_slice %25 {offsets = [0, 7], sizes = [8, 1], strides = [1, 1]} : vector<8x8xf32> to vector<8x1xf32>
    %744 = vector.extract_strided_slice %701 {offsets = [7, 0], sizes = [1, 256], strides = [1, 1]} : vector<8x256xf32> to vector<1x256xf32>
    %745 = vector.broadcast %743 : vector<8x1xf32> to vector<8x256xf32>
    %746 = vector.broadcast %744 : vector<1x256xf32> to vector<8x256xf32>
    %747 = arith.mulf %745, %746 : vector<8x256xf32>
    %748 = arith.addf %742, %747 : vector<8x256xf32>
    %749 = vector.shape_cast %748 : vector<8x256xf32> to vector<1x8x256xf32>
    %cst_189 = arith.constant dense<0.000000e+00> : vector<1xf32>
    %750 = vector.multi_reduction <add>, %749, %cst_189 [1, 2] : vector<1x8x256xf32> to vector<1xf32>
    %751 = vector.shape_cast %750 : vector<1xf32> to vector<1x1x1xf32>
    %752 = vector.extract %751[0, 0, 0] : f32 from vector<1x1x1xf32>
    %753 = arith.mulf %748, %748 : vector<8x256xf32>
    %754 = vector.shape_cast %753 : vector<8x256xf32> to vector<1x8x256xf32>
    %cst_190 = arith.constant dense<0.000000e+00> : vector<1xf32>
    %755 = vector.multi_reduction <add>, %754, %cst_190 [1, 2] : vector<1x8x256xf32> to vector<1xf32>
    %756 = vector.shape_cast %755 : vector<1xf32> to vector<1x1x1xf32>
    %757 = vector.extract %756[0, 0, 0] : f32 from vector<1x1x1xf32>
    %cst_191 = arith.constant 6.250000e-04 : f32
    %758 = arith.mulf %752, %cst_191 : f32
    %cst_192 = arith.constant 6.250000e-04 : f32
    %759 = arith.mulf %757, %cst_192 : f32
    %760 = arith.mulf %758, %758 : f32
    %761 = arith.subf %759, %760 : f32
    %cst_193 = arith.constant 0.000000e+00 : f32
    %762 = arith.maximumf %761, %cst_193 : f32
    %cst_194 = arith.constant 9.99999974E-6 : f32
    %763 = arith.addf %762, %cst_194 : f32
    %764 = math.rsqrt %763 : f32
    %765 = vector.broadcast %764 : f32 to vector<8x1xf32>
    %766 = arith.mulf %27, %765 : vector<8x1xf32>
    %767 = vector.broadcast %758 : f32 to vector<8x1xf32>
    %768 = arith.mulf %766, %767 : vector<8x1xf32>
    %769 = arith.subf %29, %768 : vector<8x1xf32>
    %770 = vector.broadcast %766 : vector<8x1xf32> to vector<8x256xf32>
    %771 = arith.mulf %770, %748 : vector<8x256xf32>
    %772 = vector.broadcast %769 : vector<8x1xf32> to vector<8x256xf32>
    %773 = arith.addf %771, %772 : vector<8x256xf32>
    %774 = vector.broadcast %62 : vector<1x256xf32> to vector<8x256xf32>
    %775 = arith.mulf %773, %774 : vector<8x256xf32>
    %cst_195 = arith.constant 0.000000e+00 : f32
    %776 = vector.broadcast %cst_195 : f32 to vector<8x256xf32>
    %777 = arith.maximumf %775, %776 : vector<8x256xf32>
    %cst_196 = arith.constant dense<0xFF800000> : vector<256xf32>
    %778 = vector.multi_reduction <maximumf>, %777, %cst_196 [0] : vector<8x256xf32> to vector<256xf32>
    %779 = vector.shape_cast %778 : vector<256xf32> to vector<1x256xf32>
    %780 = vector.extract_strided_slice %31 {offsets = [0, 0], sizes = [8, 1], strides = [1, 1]} : vector<8x8xf32> to vector<8x1xf32>
    %781 = vector.extract_strided_slice %777 {offsets = [0, 0], sizes = [1, 256], strides = [1, 1]} : vector<8x256xf32> to vector<1x256xf32>
    %782 = vector.broadcast %780 : vector<8x1xf32> to vector<8x256xf32>
    %783 = vector.broadcast %781 : vector<1x256xf32> to vector<8x256xf32>
    %784 = arith.mulf %782, %783 : vector<8x256xf32>
    %785 = vector.extract_strided_slice %31 {offsets = [0, 1], sizes = [8, 1], strides = [1, 1]} : vector<8x8xf32> to vector<8x1xf32>
    %786 = vector.extract_strided_slice %777 {offsets = [1, 0], sizes = [1, 256], strides = [1, 1]} : vector<8x256xf32> to vector<1x256xf32>
    %787 = vector.broadcast %785 : vector<8x1xf32> to vector<8x256xf32>
    %788 = vector.broadcast %786 : vector<1x256xf32> to vector<8x256xf32>
    %789 = arith.mulf %787, %788 : vector<8x256xf32>
    %790 = arith.addf %784, %789 : vector<8x256xf32>
    %791 = vector.extract_strided_slice %31 {offsets = [0, 2], sizes = [8, 1], strides = [1, 1]} : vector<8x8xf32> to vector<8x1xf32>
    %792 = vector.extract_strided_slice %777 {offsets = [2, 0], sizes = [1, 256], strides = [1, 1]} : vector<8x256xf32> to vector<1x256xf32>
    %793 = vector.broadcast %791 : vector<8x1xf32> to vector<8x256xf32>
    %794 = vector.broadcast %792 : vector<1x256xf32> to vector<8x256xf32>
    %795 = arith.mulf %793, %794 : vector<8x256xf32>
    %796 = arith.addf %790, %795 : vector<8x256xf32>
    %797 = vector.extract_strided_slice %31 {offsets = [0, 3], sizes = [8, 1], strides = [1, 1]} : vector<8x8xf32> to vector<8x1xf32>
    %798 = vector.extract_strided_slice %777 {offsets = [3, 0], sizes = [1, 256], strides = [1, 1]} : vector<8x256xf32> to vector<1x256xf32>
    %799 = vector.broadcast %797 : vector<8x1xf32> to vector<8x256xf32>
    %800 = vector.broadcast %798 : vector<1x256xf32> to vector<8x256xf32>
    %801 = arith.mulf %799, %800 : vector<8x256xf32>
    %802 = arith.addf %796, %801 : vector<8x256xf32>
    %803 = vector.extract_strided_slice %31 {offsets = [0, 4], sizes = [8, 1], strides = [1, 1]} : vector<8x8xf32> to vector<8x1xf32>
    %804 = vector.extract_strided_slice %777 {offsets = [4, 0], sizes = [1, 256], strides = [1, 1]} : vector<8x256xf32> to vector<1x256xf32>
    %805 = vector.broadcast %803 : vector<8x1xf32> to vector<8x256xf32>
    %806 = vector.broadcast %804 : vector<1x256xf32> to vector<8x256xf32>
    %807 = arith.mulf %805, %806 : vector<8x256xf32>
    %808 = arith.addf %802, %807 : vector<8x256xf32>
    %809 = vector.extract_strided_slice %31 {offsets = [0, 5], sizes = [8, 1], strides = [1, 1]} : vector<8x8xf32> to vector<8x1xf32>
    %810 = vector.extract_strided_slice %777 {offsets = [5, 0], sizes = [1, 256], strides = [1, 1]} : vector<8x256xf32> to vector<1x256xf32>
    %811 = vector.broadcast %809 : vector<8x1xf32> to vector<8x256xf32>
    %812 = vector.broadcast %810 : vector<1x256xf32> to vector<8x256xf32>
    %813 = arith.mulf %811, %812 : vector<8x256xf32>
    %814 = arith.addf %808, %813 : vector<8x256xf32>
    %815 = vector.extract_strided_slice %31 {offsets = [0, 6], sizes = [8, 1], strides = [1, 1]} : vector<8x8xf32> to vector<8x1xf32>
    %816 = vector.extract_strided_slice %777 {offsets = [6, 0], sizes = [1, 256], strides = [1, 1]} : vector<8x256xf32> to vector<1x256xf32>
    %817 = vector.broadcast %815 : vector<8x1xf32> to vector<8x256xf32>
    %818 = vector.broadcast %816 : vector<1x256xf32> to vector<8x256xf32>
    %819 = arith.mulf %817, %818 : vector<8x256xf32>
    %820 = arith.addf %814, %819 : vector<8x256xf32>
    %821 = vector.extract_strided_slice %31 {offsets = [0, 7], sizes = [8, 1], strides = [1, 1]} : vector<8x8xf32> to vector<8x1xf32>
    %822 = vector.extract_strided_slice %777 {offsets = [7, 0], sizes = [1, 256], strides = [1, 1]} : vector<8x256xf32> to vector<1x256xf32>
    %823 = vector.broadcast %821 : vector<8x1xf32> to vector<8x256xf32>
    %824 = vector.broadcast %822 : vector<1x256xf32> to vector<8x256xf32>
    %825 = arith.mulf %823, %824 : vector<8x256xf32>
    %826 = arith.addf %820, %825 : vector<8x256xf32>
    %827 = vector.broadcast %57 : vector<8x1xf32> to vector<8x256xf32>
    %828 = vector.broadcast %779 : vector<1x256xf32> to vector<8x256xf32>
    %829 = arith.mulf %827, %828 : vector<8x256xf32>
    %830 = arith.addf %826, %829 : vector<8x256xf32>
    %831 = vector.shape_cast %830 : vector<8x256xf32> to vector<1x8x256xf32>
    %cst_197 = arith.constant dense<0.000000e+00> : vector<1xf32>
    %832 = vector.multi_reduction <add>, %831, %cst_197 [1, 2] : vector<1x8x256xf32> to vector<1xf32>
    %833 = vector.shape_cast %832 : vector<1xf32> to vector<1x1x1xf32>
    %834 = vector.extract %833[0, 0, 0] : f32 from vector<1x1x1xf32>
    %835 = arith.mulf %830, %830 : vector<8x256xf32>
    %836 = vector.shape_cast %835 : vector<8x256xf32> to vector<1x8x256xf32>
    %cst_198 = arith.constant dense<0.000000e+00> : vector<1xf32>
    %837 = vector.multi_reduction <add>, %836, %cst_198 [1, 2] : vector<1x8x256xf32> to vector<1xf32>
    %838 = vector.shape_cast %837 : vector<1xf32> to vector<1x1x1xf32>
    %839 = vector.extract %838[0, 0, 0] : f32 from vector<1x1x1xf32>
    %cst_199 = arith.constant 6.250000e-04 : f32
    %840 = arith.mulf %834, %cst_199 : f32
    %cst_200 = arith.constant 6.250000e-04 : f32
    %841 = arith.mulf %839, %cst_200 : f32
    %842 = arith.mulf %840, %840 : f32
    %843 = arith.subf %841, %842 : f32
    %cst_201 = arith.constant 0.000000e+00 : f32
    %844 = arith.maximumf %843, %cst_201 : f32
    %cst_202 = arith.constant 9.99999974E-6 : f32
    %845 = arith.addf %844, %cst_202 : f32
    %846 = math.rsqrt %845 : f32
    %847 = vector.broadcast %846 : f32 to vector<8x1xf32>
    %848 = arith.mulf %33, %847 : vector<8x1xf32>
    %849 = vector.broadcast %840 : f32 to vector<8x1xf32>
    %850 = arith.mulf %848, %849 : vector<8x1xf32>
    %851 = arith.subf %35, %850 : vector<8x1xf32>
    %852 = vector.broadcast %848 : vector<8x1xf32> to vector<8x256xf32>
    %853 = arith.mulf %852, %830 : vector<8x256xf32>
    %854 = vector.broadcast %851 : vector<8x1xf32> to vector<8x256xf32>
    %855 = arith.addf %853, %854 : vector<8x256xf32>
    %856 = vector.broadcast %62 : vector<1x256xf32> to vector<8x256xf32>
    %857 = arith.mulf %855, %856 : vector<8x256xf32>
    %cst_203 = arith.constant 0.000000e+00 : f32
    %858 = vector.broadcast %cst_203 : f32 to vector<8x256xf32>
    %859 = arith.maximumf %857, %858 : vector<8x256xf32>
    %860 = vector.extract_strided_slice %37 {offsets = [0, 0], sizes = [8, 1], strides = [1, 1]} : vector<8x8xf32> to vector<8x1xf32>
    %861 = vector.extract_strided_slice %859 {offsets = [0, 0], sizes = [1, 256], strides = [1, 1]} : vector<8x256xf32> to vector<1x256xf32>
    %862 = vector.broadcast %860 : vector<8x1xf32> to vector<8x256xf32>
    %863 = vector.broadcast %861 : vector<1x256xf32> to vector<8x256xf32>
    %864 = arith.mulf %862, %863 : vector<8x256xf32>
    %865 = vector.extract_strided_slice %37 {offsets = [0, 1], sizes = [8, 1], strides = [1, 1]} : vector<8x8xf32> to vector<8x1xf32>
    %866 = vector.extract_strided_slice %859 {offsets = [1, 0], sizes = [1, 256], strides = [1, 1]} : vector<8x256xf32> to vector<1x256xf32>
    %867 = vector.broadcast %865 : vector<8x1xf32> to vector<8x256xf32>
    %868 = vector.broadcast %866 : vector<1x256xf32> to vector<8x256xf32>
    %869 = arith.mulf %867, %868 : vector<8x256xf32>
    %870 = arith.addf %864, %869 : vector<8x256xf32>
    %871 = vector.extract_strided_slice %37 {offsets = [0, 2], sizes = [8, 1], strides = [1, 1]} : vector<8x8xf32> to vector<8x1xf32>
    %872 = vector.extract_strided_slice %859 {offsets = [2, 0], sizes = [1, 256], strides = [1, 1]} : vector<8x256xf32> to vector<1x256xf32>
    %873 = vector.broadcast %871 : vector<8x1xf32> to vector<8x256xf32>
    %874 = vector.broadcast %872 : vector<1x256xf32> to vector<8x256xf32>
    %875 = arith.mulf %873, %874 : vector<8x256xf32>
    %876 = arith.addf %870, %875 : vector<8x256xf32>
    %877 = vector.extract_strided_slice %37 {offsets = [0, 3], sizes = [8, 1], strides = [1, 1]} : vector<8x8xf32> to vector<8x1xf32>
    %878 = vector.extract_strided_slice %859 {offsets = [3, 0], sizes = [1, 256], strides = [1, 1]} : vector<8x256xf32> to vector<1x256xf32>
    %879 = vector.broadcast %877 : vector<8x1xf32> to vector<8x256xf32>
    %880 = vector.broadcast %878 : vector<1x256xf32> to vector<8x256xf32>
    %881 = arith.mulf %879, %880 : vector<8x256xf32>
    %882 = arith.addf %876, %881 : vector<8x256xf32>
    %883 = vector.extract_strided_slice %37 {offsets = [0, 4], sizes = [8, 1], strides = [1, 1]} : vector<8x8xf32> to vector<8x1xf32>
    %884 = vector.extract_strided_slice %859 {offsets = [4, 0], sizes = [1, 256], strides = [1, 1]} : vector<8x256xf32> to vector<1x256xf32>
    %885 = vector.broadcast %883 : vector<8x1xf32> to vector<8x256xf32>
    %886 = vector.broadcast %884 : vector<1x256xf32> to vector<8x256xf32>
    %887 = arith.mulf %885, %886 : vector<8x256xf32>
    %888 = arith.addf %882, %887 : vector<8x256xf32>
    %889 = vector.extract_strided_slice %37 {offsets = [0, 5], sizes = [8, 1], strides = [1, 1]} : vector<8x8xf32> to vector<8x1xf32>
    %890 = vector.extract_strided_slice %859 {offsets = [5, 0], sizes = [1, 256], strides = [1, 1]} : vector<8x256xf32> to vector<1x256xf32>
    %891 = vector.broadcast %889 : vector<8x1xf32> to vector<8x256xf32>
    %892 = vector.broadcast %890 : vector<1x256xf32> to vector<8x256xf32>
    %893 = arith.mulf %891, %892 : vector<8x256xf32>
    %894 = arith.addf %888, %893 : vector<8x256xf32>
    %895 = vector.extract_strided_slice %37 {offsets = [0, 6], sizes = [8, 1], strides = [1, 1]} : vector<8x8xf32> to vector<8x1xf32>
    %896 = vector.extract_strided_slice %859 {offsets = [6, 0], sizes = [1, 256], strides = [1, 1]} : vector<8x256xf32> to vector<1x256xf32>
    %897 = vector.broadcast %895 : vector<8x1xf32> to vector<8x256xf32>
    %898 = vector.broadcast %896 : vector<1x256xf32> to vector<8x256xf32>
    %899 = arith.mulf %897, %898 : vector<8x256xf32>
    %900 = arith.addf %894, %899 : vector<8x256xf32>
    %901 = vector.extract_strided_slice %37 {offsets = [0, 7], sizes = [8, 1], strides = [1, 1]} : vector<8x8xf32> to vector<8x1xf32>
    %902 = vector.extract_strided_slice %859 {offsets = [7, 0], sizes = [1, 256], strides = [1, 1]} : vector<8x256xf32> to vector<1x256xf32>
    %903 = vector.broadcast %901 : vector<8x1xf32> to vector<8x256xf32>
    %904 = vector.broadcast %902 : vector<1x256xf32> to vector<8x256xf32>
    %905 = arith.mulf %903, %904 : vector<8x256xf32>
    %906 = arith.addf %900, %905 : vector<8x256xf32>
    %907 = vector.shape_cast %906 : vector<8x256xf32> to vector<1x8x256xf32>
    %cst_204 = arith.constant dense<0.000000e+00> : vector<1xf32>
    %908 = vector.multi_reduction <add>, %907, %cst_204 [1, 2] : vector<1x8x256xf32> to vector<1xf32>
    %909 = vector.shape_cast %908 : vector<1xf32> to vector<1x1x1xf32>
    %910 = vector.extract %909[0, 0, 0] : f32 from vector<1x1x1xf32>
    %911 = arith.mulf %906, %906 : vector<8x256xf32>
    %912 = vector.shape_cast %911 : vector<8x256xf32> to vector<1x8x256xf32>
    %cst_205 = arith.constant dense<0.000000e+00> : vector<1xf32>
    %913 = vector.multi_reduction <add>, %912, %cst_205 [1, 2] : vector<1x8x256xf32> to vector<1xf32>
    %914 = vector.shape_cast %913 : vector<1xf32> to vector<1x1x1xf32>
    %915 = vector.extract %914[0, 0, 0] : f32 from vector<1x1x1xf32>
    %cst_206 = arith.constant 6.250000e-04 : f32
    %916 = arith.mulf %910, %cst_206 : f32
    %cst_207 = arith.constant 6.250000e-04 : f32
    %917 = arith.mulf %915, %cst_207 : f32
    %918 = arith.mulf %916, %916 : f32
    %919 = arith.subf %917, %918 : f32
    %cst_208 = arith.constant 0.000000e+00 : f32
    %920 = arith.maximumf %919, %cst_208 : f32
    %cst_209 = arith.constant 9.99999974E-6 : f32
    %921 = arith.addf %920, %cst_209 : f32
    %922 = math.rsqrt %921 : f32
    %923 = vector.broadcast %922 : f32 to vector<8x1xf32>
    %924 = arith.mulf %39, %923 : vector<8x1xf32>
    %925 = vector.broadcast %916 : f32 to vector<8x1xf32>
    %926 = arith.mulf %924, %925 : vector<8x1xf32>
    %927 = arith.subf %41, %926 : vector<8x1xf32>
    %928 = vector.broadcast %924 : vector<8x1xf32> to vector<8x256xf32>
    %929 = arith.mulf %928, %906 : vector<8x256xf32>
    %930 = vector.broadcast %927 : vector<8x1xf32> to vector<8x256xf32>
    %931 = arith.addf %929, %930 : vector<8x256xf32>
    %932 = vector.broadcast %62 : vector<1x256xf32> to vector<8x256xf32>
    %933 = arith.mulf %931, %932 : vector<8x256xf32>
    %934 = arith.addf %933, %701 : vector<8x256xf32>
    %cst_210 = arith.constant 0.000000e+00 : f32
    %935 = vector.broadcast %cst_210 : f32 to vector<8x256xf32>
    %936 = arith.maximumf %934, %935 : vector<8x256xf32>
    %937 = vector.extract_strided_slice %43 {offsets = [0, 0], sizes = [4, 1], strides = [1, 1]} : vector<4x8xf32> to vector<4x1xf32>
    %938 = vector.extract_strided_slice %936 {offsets = [0, 0], sizes = [1, 256], strides = [1, 1]} : vector<8x256xf32> to vector<1x256xf32>
    %939 = vector.broadcast %937 : vector<4x1xf32> to vector<4x256xf32>
    %940 = vector.broadcast %938 : vector<1x256xf32> to vector<4x256xf32>
    %941 = arith.mulf %939, %940 : vector<4x256xf32>
    %942 = vector.extract_strided_slice %43 {offsets = [0, 1], sizes = [4, 1], strides = [1, 1]} : vector<4x8xf32> to vector<4x1xf32>
    %943 = vector.extract_strided_slice %936 {offsets = [1, 0], sizes = [1, 256], strides = [1, 1]} : vector<8x256xf32> to vector<1x256xf32>
    %944 = vector.broadcast %942 : vector<4x1xf32> to vector<4x256xf32>
    %945 = vector.broadcast %943 : vector<1x256xf32> to vector<4x256xf32>
    %946 = arith.mulf %944, %945 : vector<4x256xf32>
    %947 = arith.addf %941, %946 : vector<4x256xf32>
    %948 = vector.extract_strided_slice %43 {offsets = [0, 2], sizes = [4, 1], strides = [1, 1]} : vector<4x8xf32> to vector<4x1xf32>
    %949 = vector.extract_strided_slice %936 {offsets = [2, 0], sizes = [1, 256], strides = [1, 1]} : vector<8x256xf32> to vector<1x256xf32>
    %950 = vector.broadcast %948 : vector<4x1xf32> to vector<4x256xf32>
    %951 = vector.broadcast %949 : vector<1x256xf32> to vector<4x256xf32>
    %952 = arith.mulf %950, %951 : vector<4x256xf32>
    %953 = arith.addf %947, %952 : vector<4x256xf32>
    %954 = vector.extract_strided_slice %43 {offsets = [0, 3], sizes = [4, 1], strides = [1, 1]} : vector<4x8xf32> to vector<4x1xf32>
    %955 = vector.extract_strided_slice %936 {offsets = [3, 0], sizes = [1, 256], strides = [1, 1]} : vector<8x256xf32> to vector<1x256xf32>
    %956 = vector.broadcast %954 : vector<4x1xf32> to vector<4x256xf32>
    %957 = vector.broadcast %955 : vector<1x256xf32> to vector<4x256xf32>
    %958 = arith.mulf %956, %957 : vector<4x256xf32>
    %959 = arith.addf %953, %958 : vector<4x256xf32>
    %960 = vector.extract_strided_slice %43 {offsets = [0, 4], sizes = [4, 1], strides = [1, 1]} : vector<4x8xf32> to vector<4x1xf32>
    %961 = vector.extract_strided_slice %936 {offsets = [4, 0], sizes = [1, 256], strides = [1, 1]} : vector<8x256xf32> to vector<1x256xf32>
    %962 = vector.broadcast %960 : vector<4x1xf32> to vector<4x256xf32>
    %963 = vector.broadcast %961 : vector<1x256xf32> to vector<4x256xf32>
    %964 = arith.mulf %962, %963 : vector<4x256xf32>
    %965 = arith.addf %959, %964 : vector<4x256xf32>
    %966 = vector.extract_strided_slice %43 {offsets = [0, 5], sizes = [4, 1], strides = [1, 1]} : vector<4x8xf32> to vector<4x1xf32>
    %967 = vector.extract_strided_slice %936 {offsets = [5, 0], sizes = [1, 256], strides = [1, 1]} : vector<8x256xf32> to vector<1x256xf32>
    %968 = vector.broadcast %966 : vector<4x1xf32> to vector<4x256xf32>
    %969 = vector.broadcast %967 : vector<1x256xf32> to vector<4x256xf32>
    %970 = arith.mulf %968, %969 : vector<4x256xf32>
    %971 = arith.addf %965, %970 : vector<4x256xf32>
    %972 = vector.extract_strided_slice %43 {offsets = [0, 6], sizes = [4, 1], strides = [1, 1]} : vector<4x8xf32> to vector<4x1xf32>
    %973 = vector.extract_strided_slice %936 {offsets = [6, 0], sizes = [1, 256], strides = [1, 1]} : vector<8x256xf32> to vector<1x256xf32>
    %974 = vector.broadcast %972 : vector<4x1xf32> to vector<4x256xf32>
    %975 = vector.broadcast %973 : vector<1x256xf32> to vector<4x256xf32>
    %976 = arith.mulf %974, %975 : vector<4x256xf32>
    %977 = arith.addf %971, %976 : vector<4x256xf32>
    %978 = vector.extract_strided_slice %43 {offsets = [0, 7], sizes = [4, 1], strides = [1, 1]} : vector<4x8xf32> to vector<4x1xf32>
    %979 = vector.extract_strided_slice %936 {offsets = [7, 0], sizes = [1, 256], strides = [1, 1]} : vector<8x256xf32> to vector<1x256xf32>
    %980 = vector.broadcast %978 : vector<4x1xf32> to vector<4x256xf32>
    %981 = vector.broadcast %979 : vector<1x256xf32> to vector<4x256xf32>
    %982 = arith.mulf %980, %981 : vector<4x256xf32>
    %983 = arith.addf %977, %982 : vector<4x256xf32>
    %984 = vector.shape_cast %983 : vector<4x256xf32> to vector<1x4x256xf32>
    %cst_211 = arith.constant dense<0.000000e+00> : vector<1xf32>
    %985 = vector.multi_reduction <add>, %984, %cst_211 [1, 2] : vector<1x4x256xf32> to vector<1xf32>
    %986 = vector.shape_cast %985 : vector<1xf32> to vector<1x1x1xf32>
    %987 = vector.extract %986[0, 0, 0] : f32 from vector<1x1x1xf32>
    %988 = arith.mulf %983, %983 : vector<4x256xf32>
    %989 = vector.shape_cast %988 : vector<4x256xf32> to vector<1x4x256xf32>
    %cst_212 = arith.constant dense<0.000000e+00> : vector<1xf32>
    %990 = vector.multi_reduction <add>, %989, %cst_212 [1, 2] : vector<1x4x256xf32> to vector<1xf32>
    %991 = vector.shape_cast %990 : vector<1xf32> to vector<1x1x1xf32>
    %992 = vector.extract %991[0, 0, 0] : f32 from vector<1x1x1xf32>
    %cst_213 = arith.constant 1.250000e-03 : f32
    %993 = arith.mulf %987, %cst_213 : f32
    %cst_214 = arith.constant 1.250000e-03 : f32
    %994 = arith.mulf %992, %cst_214 : f32
    %995 = arith.mulf %993, %993 : f32
    %996 = arith.subf %994, %995 : f32
    %cst_215 = arith.constant 0.000000e+00 : f32
    %997 = arith.maximumf %996, %cst_215 : f32
    %cst_216 = arith.constant 9.99999974E-6 : f32
    %998 = arith.addf %997, %cst_216 : f32
    %999 = math.rsqrt %998 : f32
    %1000 = vector.broadcast %999 : f32 to vector<4x1xf32>
    %1001 = arith.mulf %45, %1000 : vector<4x1xf32>
    %1002 = vector.broadcast %993 : f32 to vector<4x1xf32>
    %1003 = arith.mulf %1001, %1002 : vector<4x1xf32>
    %1004 = arith.subf %47, %1003 : vector<4x1xf32>
    %1005 = vector.broadcast %1001 : vector<4x1xf32> to vector<4x256xf32>
    %1006 = arith.mulf %1005, %983 : vector<4x256xf32>
    %1007 = vector.broadcast %1004 : vector<4x1xf32> to vector<4x256xf32>
    %1008 = arith.addf %1006, %1007 : vector<4x256xf32>
    %1009 = vector.broadcast %62 : vector<1x256xf32> to vector<4x256xf32>
    %1010 = arith.mulf %1008, %1009 : vector<4x256xf32>
    %cst_217 = arith.constant 0.000000e+00 : f32
    %1011 = vector.broadcast %cst_217 : f32 to vector<4x256xf32>
    %1012 = arith.maximumf %1010, %1011 : vector<4x256xf32>
    %1013 = vector.extract_strided_slice %49 {offsets = [0, 0], sizes = [1, 1], strides = [1, 1]} : vector<1x4xf32> to vector<1x1xf32>
    %1014 = vector.extract_strided_slice %1012 {offsets = [0, 0], sizes = [1, 256], strides = [1, 1]} : vector<4x256xf32> to vector<1x256xf32>
    %1015 = vector.broadcast %1013 : vector<1x1xf32> to vector<1x256xf32>
    %1016 = arith.mulf %1015, %1014 : vector<1x256xf32>
    %1017 = vector.extract_strided_slice %49 {offsets = [0, 1], sizes = [1, 1], strides = [1, 1]} : vector<1x4xf32> to vector<1x1xf32>
    %1018 = vector.extract_strided_slice %1012 {offsets = [1, 0], sizes = [1, 256], strides = [1, 1]} : vector<4x256xf32> to vector<1x256xf32>
    %1019 = vector.broadcast %1017 : vector<1x1xf32> to vector<1x256xf32>
    %1020 = arith.mulf %1019, %1018 : vector<1x256xf32>
    %1021 = arith.addf %1016, %1020 : vector<1x256xf32>
    %1022 = vector.extract_strided_slice %49 {offsets = [0, 2], sizes = [1, 1], strides = [1, 1]} : vector<1x4xf32> to vector<1x1xf32>
    %1023 = vector.extract_strided_slice %1012 {offsets = [2, 0], sizes = [1, 256], strides = [1, 1]} : vector<4x256xf32> to vector<1x256xf32>
    %1024 = vector.broadcast %1022 : vector<1x1xf32> to vector<1x256xf32>
    %1025 = arith.mulf %1024, %1023 : vector<1x256xf32>
    %1026 = arith.addf %1021, %1025 : vector<1x256xf32>
    %1027 = vector.extract_strided_slice %49 {offsets = [0, 3], sizes = [1, 1], strides = [1, 1]} : vector<1x4xf32> to vector<1x1xf32>
    %1028 = vector.extract_strided_slice %1012 {offsets = [3, 0], sizes = [1, 256], strides = [1, 1]} : vector<4x256xf32> to vector<1x256xf32>
    %1029 = vector.broadcast %1027 : vector<1x1xf32> to vector<1x256xf32>
    %1030 = arith.mulf %1029, %1028 : vector<1x256xf32>
    %1031 = arith.addf %1026, %1030 : vector<1x256xf32>
    %1032 = vector.shape_cast %1031 : vector<1x256xf32> to vector<1x1x256xf32>
    %cst_218 = arith.constant dense<0.000000e+00> : vector<1xf32>
    %1033 = vector.multi_reduction <add>, %1032, %cst_218 [1, 2] : vector<1x1x256xf32> to vector<1xf32>
    %1034 = vector.shape_cast %1033 : vector<1xf32> to vector<1x1x1xf32>
    %1035 = vector.extract %1034[0, 0, 0] : f32 from vector<1x1x1xf32>
    %1036 = arith.mulf %1031, %1031 : vector<1x256xf32>
    %1037 = vector.shape_cast %1036 : vector<1x256xf32> to vector<1x1x256xf32>
    %cst_219 = arith.constant dense<0.000000e+00> : vector<1xf32>
    %1038 = vector.multi_reduction <add>, %1037, %cst_219 [1, 2] : vector<1x1x256xf32> to vector<1xf32>
    %1039 = vector.shape_cast %1038 : vector<1xf32> to vector<1x1x1xf32>
    %1040 = vector.extract %1039[0, 0, 0] : f32 from vector<1x1x1xf32>
    %cst_220 = arith.constant 5.000000e-03 : f32
    %1041 = arith.mulf %1035, %cst_220 : f32
    %cst_221 = arith.constant 5.000000e-03 : f32
    %1042 = arith.mulf %1040, %cst_221 : f32
    %1043 = arith.mulf %1041, %1041 : f32
    %1044 = arith.subf %1042, %1043 : f32
    %cst_222 = arith.constant 0.000000e+00 : f32
    %1045 = arith.maximumf %1044, %cst_222 : f32
    %cst_223 = arith.constant 9.99999974E-6 : f32
    %1046 = arith.addf %1045, %cst_223 : f32
    %1047 = math.rsqrt %1046 : f32
    %1048 = vector.broadcast %1047 : f32 to vector<1x1xf32>
    %1049 = arith.mulf %51, %1048 : vector<1x1xf32>
    %1050 = vector.broadcast %1041 : f32 to vector<1x1xf32>
    %1051 = arith.mulf %1049, %1050 : vector<1x1xf32>
    %1052 = arith.subf %53, %1051 : vector<1x1xf32>
    %1053 = vector.broadcast %1049 : vector<1x1xf32> to vector<1x256xf32>
    %1054 = arith.mulf %1053, %1031 : vector<1x256xf32>
    %1055 = vector.broadcast %1052 : vector<1x1xf32> to vector<1x256xf32>
    %1056 = arith.addf %1054, %1055 : vector<1x256xf32>
    %1057 = arith.mulf %1056, %62 : vector<1x256xf32>
    %cst_224 = arith.constant -1.000000e+30 : f32
    %1058 = vector.broadcast %cst_224 : f32 to vector<1x256xf32>
    %1059 = arith.select %60, %1057, %1058 : vector<1x256xi1>, vector<1x256xf32>
    %cst_225 = arith.constant dense<0xFF800000> : vector<1xf32>
    %1060 = vector.multi_reduction <maximumf>, %1059, %cst_225 [1] : vector<1x256xf32> to vector<1xf32>
    %1061 = vector.shape_cast %1060 : vector<1xf32> to vector<1x1xf32>
    %1062 = vector.broadcast %1061 : vector<1x1xf32> to vector<1x256xf32>
    %1063 = arith.subf %1059, %1062 : vector<1x256xf32>
    %1064 = math.exp %1063 : vector<1x256xf32>
    %cst_226 = arith.constant dense<0.000000e+00> : vector<1xf32>
    %1065 = vector.multi_reduction <add>, %1064, %cst_226 [1] : vector<1x256xf32> to vector<1xf32>
    %1066 = vector.shape_cast %1065 : vector<1xf32> to vector<1x1xf32>
    %1067 = vector.broadcast %1066 : vector<1x1xf32> to vector<1x256xf32>
    %1068 = arith.divf %1064, %1067 : vector<1x256xf32>
    %c1_227 = arith.constant 1 : index
    %c0_228 = arith.constant 0 : index
    %c0_229 = arith.constant 0 : index
    %1069 = vector.load %arg6[%c1_227, %c0_228, %c0_229] : memref<2x1x256xf32, #tpu.memory_space<vmem>>, vector<1x1x256xf32>
    %1070 = vector.shape_cast %1069 : vector<1x1x256xf32> to vector<1x256xf32>
    %1071 = vector.shape_cast %1068 : vector<1x256xf32> to vector<1x1x256xf32>
    tpu.vector_store %arg6[%c1_227, %c0_228, %c0_229], %1071 {strides = array<i32>} : memref<2x1x256xf32, #tpu.memory_space<vmem>>, vector<1x1x256xf32>,
    %1072 = vector.broadcast %1068 : vector<1x256xf32> to vector<2x256xf32>
    %1073 = arith.mulf %574, %1072 : vector<2x256xf32>
    %cst_230 = arith.constant dense<0.000000e+00> : vector<2xf32>
    %1074 = vector.multi_reduction <add>, %1073, %cst_230 [1] : vector<2x256xf32> to vector<2xf32>
    %1075 = vector.shape_cast %1074 : vector<2xf32> to vector<2x1xf32>
    %c1_231 = arith.constant 1 : index
    %c0_232 = arith.constant 0 : index
    %c0_233 = arith.constant 0 : index
    %1076 = vector.load %arg5[%c1_231, %c0_232, %c0_233] : memref<2x2x1xf32, #tpu.memory_space<vmem>>, vector<1x2x1xf32>
    %1077 = vector.shape_cast %1076 : vector<1x2x1xf32> to vector<2x1xf32>
    %1078 = vector.shape_cast %1075 : vector<2x1xf32> to vector<1x2x1xf32>
    tpu.vector_store %arg5[%c1_231, %c0_232, %c0_233], %1078 {strides = array<i32>} : memref<2x2x1xf32, #tpu.memory_space<vmem>>, vector<1x2x1xf32>,
    return
  }
  func.func @transform_0(%arg0: i32) -> (i32, i32, i32) {
    %c0_i32 = arith.constant 0 : i32
    %c0_i32_0 = arith.constant 0 : i32
    %c0_i32_1 = arith.constant 0 : i32
    return %arg0, %c0_i32, %c0_i32_0 : i32, i32, i32
  }
  func.func @transform_1(%arg0: i32) -> (i32, i32, i32) {
    %c0_i32 = arith.constant 0 : i32
    %c0_i32_0 = arith.constant 0 : i32
    %c0_i32_1 = arith.constant 0 : i32
    return %arg0, %c0_i32, %c0_i32_0 : i32, i32, i32
  }
  func.func @transform_2(%arg0: i32) -> (i32, i32, i32) {
    %c0_i32 = arith.constant 0 : i32
    %c0_i32_0 = arith.constant 0 : i32
    %c0_i32_1 = arith.constant 0 : i32
    %c0_i32_2 = arith.constant 0 : i32
    return %c0_i32, %c0_i32_0, %c0_i32_1 : i32, i32, i32
  }
  func.func @transform_3(%arg0: i32) -> (i32, i32, i32) {
    %c0_i32 = arith.constant 0 : i32
    %c0_i32_0 = arith.constant 0 : i32
    %c0_i32_1 = arith.constant 0 : i32
    %c0_i32_2 = arith.constant 0 : i32
    return %c0_i32, %c0_i32_0, %c0_i32_1 : i32, i32, i32
  }
  func.func @transform_4(%arg0: i32) -> (i32, i32, i32) {
    %c0_i32 = arith.constant 0 : i32
    %c0_i32_0 = arith.constant 0 : i32
    %c0_i32_1 = arith.constant 0 : i32
    return %arg0, %c0_i32, %c0_i32_0 : i32, i32, i32
  }
  func.func @transform_5(%arg0: i32) -> (i32, i32, i32) {
    %c0_i32 = arith.constant 0 : i32
    %c0_i32_0 = arith.constant 0 : i32
    %c0_i32_1 = arith.constant 0 : i32
    return %arg0, %c0_i32, %c0_i32_0 : i32, i32, i32
  }
}

</mosaic_0001>

<llo_original>
// kernel: tpu_custom_call.1
$region0: #{tpu_custom_call.1}
  #allocation0 [shape = 'u32[]', space=smem, size = 0x4, offset = 0x4, fixed_abs, tag = 'smem constant byte address 0x4 - core index']
  #allocation1 [shape = 'u32[144,128]{1,0:T(1,128)}', space=vmem, size = 0x12000, scoped, tag = 'internal scratch']
  %s0 = inlined_call_operand.vmem [shape: f32[2,32,256], index: 0, kind: input, shape index: {}]
  %s1 = inlined_call_operand.vmem [shape: f32[2,2,256], index: 1, kind: input, shape index: {}]
  %s2 = inlined_call_operand.vmem [shape: f32[9,32,32], index: 2, kind: input, shape index: {}]
  %s3 = inlined_call_operand.vmem [shape: f32[20,32,1], index: 3, kind: input, shape index: {}]
  %s4 = inlined_call_operand.vmem [shape: f32[2,2,1], index: 4, kind: output, shape index: {0}]
  %s5 = inlined_call_operand.hbm [shape: f32[2,1,256], index: 5, kind: output, shape index: {1}]
  %6 = xla_tuple %s4, %s5
  %s7 = sld [smem:[#allocation0]]
  $region34: #{tpu_custom_call.1} parent=0
    _
  %s9 = ssub.s32 1, %s7
  %s10 = scalar_select 0, %s9, %s7
  $region1: #{tpu_custom_call.1} parent=0
    #allocation2 [shape = 'u8[2048]{0}', space=vmem, size = 0x800, scoped, tag = 'output window, operand 1, single buffered']
    #allocation3 [shape = 's32[1]{0}', space=sflag, size = 0x4, scoped, tag = 'scoped memory for tpu_custom_call.1']
    %11 = vsyncpa [#allocation3], 0
    // Predicated region
    $region2: #{tpu_custom_call.1} parent=1 // pred_check
      _
    $region3: #{tpu_custom_call.1} parent=1 // pred_check_branch
      %13 = sbr.rel (0) target = $region5
    $region4: #{tpu_custom_call.1} parent=1 // pred_region
      _
    $region5: #{tpu_custom_call.1} parent=1 // pred_fallthru
      _
    // Predicated region
    $region6: #{tpu_custom_call.1} parent=1 // pred_check
      _
    $region7: #{tpu_custom_call.1} parent=1 // pred_check_branch
      %15 = sbr.rel (0) target = $region9
    $region8: #{tpu_custom_call.1} parent=1 // pred_region
      _
    $region9: #{tpu_custom_call.1} parent=1 // pred_fallthru
      _
    // Predicated region
    $region10: #{tpu_custom_call.1} parent=1 // pred_check
      _
    $region11: #{tpu_custom_call.1} parent=1 // pred_check_branch
      %17 = sbr.rel (0) target = $region13
    $region12: #{tpu_custom_call.1} parent=1 // pred_region
      _
    $region13: #{tpu_custom_call.1} parent=1 // pred_fallthru
      _
    // Predicated region
    $region14: #{tpu_custom_call.1} parent=1 // pred_check
      _
    $region15: #{tpu_custom_call.1} parent=1 // pred_check_branch
      %19 = sbr.rel (0) target = $region17
    $region16: #{tpu_custom_call.1} parent=1 // pred_region
      _
    $region17: #{tpu_custom_call.1} parent=1 // pred_fallthru
      _
    %v20 = vld [vmem:[%s2] sm:$0xff]
    %v21 = vld [vmem:[%s2 + $0x8] sm:$0xff]
    %v22 = vld [vmem:[%s2 + $0x10] sm:$0xff]
    %v23 = vld [vmem:[%s2 + $0x18] sm:$0xff]
    %v24 = vld [vmem:[%s3] sm:$0xff]
    %v25 = vld [vmem:[%s3 + $0x8] sm:$0xff]
    %v26 = vld [vmem:[%s3 + $0x10] sm:$0xff]
    %v27 = vld [vmem:[%s3 + $0x18] sm:$0xff]
    %s28 = scalar_lea.vmem %s3, 288
    %v29 = vld [vmem:[%s28] sm:$0xff]
    %v30 = vld [vmem:[%s28 + $0x8] sm:$0xff]
    %v31 = vld [vmem:[%s28 + $0x10] sm:$0xff]
    %v32 = vld [vmem:[%s28 + $0x18] sm:$0xff]
    %s33 = scalar_lea.vmem %s2, 32
    %v34 = vld [vmem:[%s33] sm:$0xff]
    %v35 = vld [vmem:[%s33 + $0x8] sm:$0xff]
    %v36 = vld [vmem:[%s33 + $0x10] sm:$0xff]
    %v37 = vld [vmem:[%s33 + $0x18] sm:$0xff]
    %s38 = scalar_lea.vmem %s3, 32
    %v39 = vld [vmem:[%s38] sm:$0xff]
    %v40 = vld [vmem:[%s38 + $0x8] sm:$0xff]
    %v41 = vld [vmem:[%s38 + $0x10] sm:$0xff]
    %v42 = vld [vmem:[%s38 + $0x18] sm:$0xff]
    %s43 = scalar_lea.vmem %s3, 320
    %v44 = vld [vmem:[%s43] sm:$0xff]
    %v45 = vld [vmem:[%s43 + $0x8] sm:$0xff]
    %v46 = vld [vmem:[%s43 + $0x10] sm:$0xff]
    %v47 = vld [vmem:[%s43 + $0x18] sm:$0xff]
    %s48 = scalar_lea.vmem %s2, 64
    %v49 = vld [vmem:[%s48] sm:$0xff]
    %v50 = vld [vmem:[%s48 + $0x8] sm:$0xff]
    %v51 = vld [vmem:[%s48 + $0x10] sm:$0xff]
    %v52 = vld [vmem:[%s48 + $0x18] sm:$0xff]
    %s53 = scalar_lea.vmem %s3, 64
    %v54 = vld [vmem:[%s53] sm:$0xff]
    %v55 = vld [vmem:[%s53 + $0x8] sm:$0xff]
    %v56 = vld [vmem:[%s53 + $0x10] sm:$0xff]
    %v57 = vld [vmem:[%s53 + $0x18] sm:$0xff]
    %s58 = scalar_lea.vmem %s3, 352
    %v59 = vld [vmem:[%s58] sm:$0xff]
    %v60 = vld [vmem:[%s58 + $0x8] sm:$0xff]
    %v61 = vld [vmem:[%s58 + $0x10] sm:$0xff]
    %v62 = vld [vmem:[%s58 + $0x18] sm:$0xff]
    %s63 = scalar_lea.vmem %s2, 96
    %v64 = vld [vmem:[%s63] sm:$0xff]
    %s65 = scalar_lea.vmem %s3, 96
    %v66 = vld [vmem:[%s65] sm:$0xff]
    %s67 = scalar_lea.vmem %s3, 384
    %v68 = vld [vmem:[%s67] sm:$0xff]
    %s69 = scalar_lea.vmem %s2, 128
    %v70 = vld [vmem:[%s69] sm:$0xff]
    %s71 = scalar_lea.vmem %s3, 128
    %v72 = vld [vmem:[%s71] sm:$0xff]
    %s73 = scalar_lea.vmem %s3, 416
    %v74 = vld [vmem:[%s73] sm:$0xff]
    %s75 = scalar_lea.vmem %s2, 160
    %v76 = vld [vmem:[%s75] sm:$0xff]
    %s77 = scalar_lea.vmem %s3, 160
    %v78 = vld [vmem:[%s77] sm:$0xff]
    %s79 = scalar_lea.vmem %s3, 448
    %v80 = vld [vmem:[%s79] sm:$0xff]
    %s81 = scalar_lea.vmem %s2, 192
    %v82 = vld [vmem:[%s81] sm:$0xff]
    %s83 = scalar_lea.vmem %s3, 192
    %v84 = vld [vmem:[%s83] sm:$0xff]
    %s85 = scalar_lea.vmem %s3, 480
    %v86 = vld [vmem:[%s85] sm:$0xff]
    %s87 = scalar_lea.vmem %s2, 224
    %v88 = vld [vmem:[%s87] sm:$0xf]
    %s89 = scalar_lea.vmem %s3, 224
    %v90 = vld [vmem:[%s89] sm:$0xf]
    %s91 = scalar_lea.vmem %s3, 512
    %v92 = vld [vmem:[%s91] sm:$0xf]
    %s93 = scalar_lea.vmem %s2, 256
    %v94 = vld [vmem:[%s93] sm:$0x1]
    %s95 = scalar_lea.vmem %s3, 256
    %v96 = vld [vmem:[%s95] sm:$0x1]
    %s97 = scalar_lea.vmem %s3, 544
    %v98 = vld [vmem:[%s97] sm:$0x1]
    %s99 = scalar_lea.vmem %s3, 576
    %v100 = vld [vmem:[%s99] sm:$0xff]
    %v101 = vld [vmem:[%s99 + $0x8] sm:$0xff]
    %v102 = vld [vmem:[%s99 + $0x10] sm:$0xff]
    %v103 = vld [vmem:[%s99 + $0x18] sm:$0xff]
    %s104 = scalar_lea.vmem %s3, 608
    %v105 = vld [vmem:[%s104] sm:$0xff]
    %v106 = vlaneseq
    %v107 = vand.u32 %v106, 127
    %v108 = vadd.s32 %v107, 128
    %vm109 = vcmp.lt.s32.totalorder %v107, 200
    %vm110 = vcmp.lt.s32.totalorder %v108, 200
    %v111 = vsel %vm109, 1, 0
    %v112 = vsel %vm110, 1, 0
    %v113 = vcvt.s32.f32 %v111
    %v114 = vcvt.s32.f32 %v112
    %v115 = vld [vmem:[%s0] sm:$0xff]
    %v116 = vld [vmem:[%s0 + $0x8] sm:$0xff]
    %v117 = vld [vmem:[%s0 + $0x10] sm:$0xff]
    %v118 = vld [vmem:[%s0 + $0x18] sm:$0xff]
    %v119 = vld [vmem:[%s0 + $0x20] sm:$0xff]
    %v120 = vld [vmem:[%s0 + $0x28] sm:$0xff]
    %v121 = vld [vmem:[%s0 + $0x30] sm:$0xff]
    %v122 = vld [vmem:[%s0 + $0x38] sm:$0xff]
    %v123 = vld [vmem:[%s1] sm:$0xf]
    %vm124 = vcmask 261120
    %v126 = vsel %vm124, %v20, 0
    %v129 = vsel %vm124, %v21, 0
    %v132 = vsel %vm124, %v22, 0
    %v135 = vsel %vm124, %v23, 0
    %137 = vmatprep.subr.mxu0 %v116
    %138 = vmatpush1.msra.mxu0 %v115
    %139 = vmatprep.subr.mxu0 %v118
    %140 = vmatpush1.msra.mxu0 %v117
    %141 = vmatprep.subr.mxu0 %v120
    %142 = vmatpush1.msra.mxu0 %v119
    %143 = vmatprep.subr.mxu0 %v122
    %144 = vmatpush1.msra.mxu0 %v121
    %145 = vmatprep.subr.mxu0 0.0
    %146 = vmatpush1.msra.mxu0 0.0
    %147 = vmatprep.subr.mxu0 0.0
    %148 = vmatpush1.msra.mxu0 0.0
    %149 = vmatprep.subr.mxu0 0.0
    %150 = vmatpush1.msra.mxu0 0.0
    %151 = vmatprep.subr.mxu0 0.0
    %152 = vmatpush1.msra.mxu0 0.0
    %153 = vmatprep.subr.mxu0 0.0
    %154 = vmatpush1.msra.mxu0 0.0
    %155 = vmatprep.subr.mxu0 0.0
    %156 = vmatpush1.msra.mxu0 0.0
    %157 = vmatprep.subr.mxu0 0.0
    %158 = vmatpush1.msra.mxu0 0.0
    %159 = vmatprep.subr.mxu0 0.0
    %160 = vmatpush1.msra.mxu0 0.0
    %161 = vmatprep.subr.mxu0 0.0
    %162 = vmatpush1.msra.mxu0 0.0
    %163 = vmatprep.subr.mxu0 0.0
    %164 = vmatpush1.msra.mxu0 0.0
    %165 = vmatprep.subr.mxu0 0.0
    %166 = vmatpush1.msra.mxu0 0.0
    %167 = vmatprep.subr.mxu0 0.0
    %168 = vmatpush1.msra.mxu0 0.0
    %169 = vmatprep.subr.mxu0 0.0
    %170 = vmatpush1.msra.mxu0 0.0
    %171 = vmatprep.subr.mxu0 0.0
    %172 = vmatpush1.msra.mxu0 0.0
    %173 = vmatprep.subr.mxu0 0.0
    %174 = vmatpush1.msra.mxu0 0.0
    %175 = vmatprep.subr.mxu0 0.0
    %176 = vmatpush1.msra.mxu0 0.0
    %177 = vmatprep.subr.mxu0 0.0
    %178 = vmatpush1.msra.mxu0 0.0
    %179 = vmatprep.subr.mxu0 0.0
    %180 = vmatpush1.msra.mxu0 0.0
    %181 = vmatprep.subr.mxu0 0.0
    %182 = vmatpush1.msra.mxu0 0.0
    %183 = vmatprep.subr.mxu0 0.0
    %184 = vmatpush1.msra.mxu0 0.0
    %185 = vmatprep.subr.mxu0 0.0
    %186 = vmatpush1.msra.mxu0 0.0
    %187 = vmatprep.subr.mxu0 0.0
    %188 = vmatpush1.msra.mxu0 0.0
    %189 = vmatprep.subr.mxu0 0.0
    %190 = vmatpush1.msra.mxu0 0.0
    %191 = vmatprep.subr.mxu0 0.0
    %192 = vmatpush1.msra.mxu0 0.0
    %193 = vmatprep.subr.mxu0 0.0
    %194 = vmatpush1.msra.mxu0 0.0
    %195 = vmatprep.subr.mxu0 0.0
    %196 = vmatpush1.msra.mxu0 0.0
    %197 = vmatprep.subr.mxu0 0.0
    %198 = vmatpush1.msra.mxu0 0.0
    %199 = vmatprep.subr.mxu0 0.0
    %200 = vmatpush1.msra.mxu0 0.0
    %201 = vmatprep.mubr.f32.mxu0 0.0
    %202 = vmatmul.mubr.f32.gmra.mrb[0].mxu0 %v126
    %v203 = vpop.f32.mrb[0].mxu0
    %v204 = vadd.f32 0.0, %v203
    %v205 = vpop.f32.mrb[0].mxu0
    %v206 = vadd.f32 0.0, %v205
    %207 = vmatprep.mubr.f32.mxu0 0.0
    %208 = vmatmul.mubr.f32.gmra.mrb[0].mxu0 %v129
    %v209 = vpop.f32.mrb[0].mxu0
    %v210 = vadd.f32 0.0, %v209
    %v211 = vpop.f32.mrb[0].mxu0
    %v212 = vadd.f32 0.0, %v211
    %213 = vmatprep.mubr.f32.mxu0 0.0
    %214 = vmatmul.mubr.f32.gmra.mrb[0].mxu0 %v132
    %v215 = vpop.f32.mrb[0].mxu0
    %v216 = vadd.f32 0.0, %v215
    %v217 = vpop.f32.mrb[0].mxu0
    %v218 = vadd.f32 0.0, %v217
    %219 = vmatprep.mubr.f32.mxu0 0.0
    %220 = vmatmul.mubr.f32.gmra.mrb[0].mxu0 %v135
    %v221 = vpop.f32.mrb[0].mxu0
    %v222 = vadd.f32 0.0, %v221
    %v223 = vpop.f32.mrb[0].mxu0
    %v224 = vadd.f32 0.0, %v223
    %225 = vdwg.mxu0
    %v226 = vadd.f32 %v204, %v206
    %v227 = vadd.f32 %v226, %v210
    %v228 = vadd.f32 %v227, %v212
    %v229 = vadd.f32 %v228, %v216
    %v230 = vadd.f32 %v229, %v218
    %v231 = vadd.f32 %v230, %v222
    %v232 = vadd.f32 %v231, %v224
    %233 = vadd.xlane.f32.xlu0 %v232
    %v234 = vpop.xlane.xlu0 %233
    %v235 = vrot.slane %v234, 4
    %v236 = vadd.f32 %v234, %v235
    %v237 = vrot.slane %v236, 2
    %v238 = vadd.f32 %v236, %v237
    %v239 = vrot.slane %v238, 1
    %v240 = vadd.f32 %v238, %v239
    %s241 = vtos %v240
    %v242 = vmul.f32 %v204, %v204
    %v243 = vmul.f32 %v206, %v206
    %v244 = vmul.f32 %v210, %v210
    %v245 = vmul.f32 %v212, %v212
    %v246 = vmul.f32 %v216, %v216
    %v247 = vmul.f32 %v218, %v218
    %v248 = vmul.f32 %v222, %v222
    %v249 = vmul.f32 %v224, %v224
    %v250 = vadd.f32 %v242, %v243
    %v251 = vadd.f32 %v250, %v244
    %v252 = vadd.f32 %v251, %v245
    %v253 = vadd.f32 %v252, %v246
    %v254 = vadd.f32 %v253, %v247
    %v255 = vadd.f32 %v254, %v248
    %v256 = vadd.f32 %v255, %v249
    %257 = vadd.xlane.f32.xlu0 %v256
    %v258 = vpop.xlane.xlu0 %257
    %v259 = vrot.slane %v258, 4
    %v260 = vadd.f32 %v258, %v259
    %v261 = vrot.slane %v260, 2
    %v262 = vadd.f32 %v260, %v261
    %v263 = vrot.slane %v262, 1
    %v264 = vadd.f32 %v262, %v263
    %s265 = vtos %v264
    %s266 = smul.f32 %s241, 0.00015625
    %s267 = smul.f32 %s265, 0.00015625
    %s268 = smul.f32 %s266, %s266
    %s269 = ssub.f32 %s267, %s268
    %s270 = smax.f32 %s269, 0.0
    %s271 = sadd.f32 %s270, 1e-05
    %v272 = vstv %s271
    %v273 = vrsqrt.pop %v272
    %s274 = vtos %v273
    %v275 = vstv %s274
    %v276 = vmul.f32 %v24, %v275
    %v277 = vmul.f32 %v25, %v275
    %v278 = vmul.f32 %v26, %v275
    %v279 = vmul.f32 %v27, %v275
    %v280 = vstv %s266
    %v281 = vmul.f32 %v276, %v280
    %v282 = vmul.f32 %v277, %v280
    %v283 = vmul.f32 %v278, %v280
    %v284 = vmul.f32 %v279, %v280
    %v285 = vsub.f32 %v29, %v281
    %v286 = vsub.f32 %v30, %v282
    %v287 = vsub.f32 %v31, %v283
    %v288 = vsub.f32 %v32, %v284
    %290 = vset.pattern.permute.xlu0 0
    %291 = vperm.xlu0 %290, %v276
    %v292 = vpop.permute.xlu0 %291
    %295 = vset.pattern.permute.xlu0 0
    %296 = vperm.xlu0 %295, %v277
    %v297 = vpop.permute.xlu0 %296
    %300 = vset.pattern.permute.xlu0 0
    %301 = vperm.xlu0 %300, %v278
    %v302 = vpop.permute.xlu0 %301
    %305 = vset.pattern.permute.xlu0 0
    %306 = vperm.xlu0 %305, %v279
    %v307 = vpop.permute.xlu0 %306
    %v309 = vmul.f32 %v292, %v204
    %v310 = vmul.f32 %v292, %v206
    %v311 = vmul.f32 %v297, %v210
    %v312 = vmul.f32 %v297, %v212
    %v313 = vmul.f32 %v302, %v216
    %v314 = vmul.f32 %v302, %v218
    %v315 = vmul.f32 %v307, %v222
    %v316 = vmul.f32 %v307, %v224
    %318 = vset.pattern.permute.xlu0 0
    %319 = vperm.xlu0 %318, %v285
    %v320 = vpop.permute.xlu0 %319
    %323 = vset.pattern.permute.xlu0 0
    %324 = vperm.xlu0 %323, %v286
    %v325 = vpop.permute.xlu0 %324
    %328 = vset.pattern.permute.xlu0 0
    %329 = vperm.xlu0 %328, %v287
    %v330 = vpop.permute.xlu0 %329
    %333 = vset.pattern.permute.xlu0 0
    %334 = vperm.xlu0 %333, %v288
    %v335 = vpop.permute.xlu0 %334
    %v337 = vadd.f32 %v309, %v320
    %v338 = vadd.f32 %v310, %v320
    %v339 = vadd.f32 %v311, %v325
    %v340 = vadd.f32 %v312, %v325
    %v341 = vadd.f32 %v313, %v330
    %v342 = vadd.f32 %v314, %v330
    %v343 = vadd.f32 %v315, %v335
    %v344 = vadd.f32 %v316, %v335
    %v345 = vmul.f32 %v337, %v113
    %v346 = vmul.f32 %v338, %v114
    %v347 = vmul.f32 %v339, %v113
    %v348 = vmul.f32 %v340, %v114
    %v349 = vmul.f32 %v341, %v113
    %v350 = vmul.f32 %v342, %v114
    %v351 = vmul.f32 %v343, %v113
    %v352 = vmul.f32 %v344, %v114
    %v353 = vmax.f32 %v345, 0.0
    %v354 = vmax.f32 %v346, 0.0
    %v355 = vmax.f32 %v347, 0.0
    %v356 = vmax.f32 %v348, 0.0
    %v357 = vmax.f32 %v349, 0.0
    %v358 = vmax.f32 %v350, 0.0
    %v359 = vmax.f32 %v351, 0.0
    %v360 = vmax.f32 %v352, 0.0
    %v361 = vmax.f32 %v353, %v357
    %v362 = vmax.f32 %v355, %v359
    %v363 = vmax.f32 %v361, %v362
    %v364 = vrot.slane %v363, 4
    %v365 = vmax.f32 %v363, %v364
    %v366 = vrot.slane %v365, 2
    %v367 = vmax.f32 %v365, %v366
    %v368 = vrot.slane %v367, 1
    %v369 = vmax.f32 %v367, %v368
    %v370 = vmax.f32 %v354, %v358
    %v371 = vmax.f32 %v356, %v360
    %v372 = vmax.f32 %v370, %v371
    %v373 = vrot.slane %v372, 4
    %v374 = vmax.f32 %v372, %v373
    %v375 = vrot.slane %v374, 2
    %v376 = vmax.f32 %v374, %v375
    %v377 = vrot.slane %v376, 1
    %v378 = vmax.f32 %v376, %v377
    %380 = vset.pattern.permute.xlu0 0
    %381 = vperm.xlu0 %380, %v100
    %v382 = vpop.permute.xlu0 %381
    %385 = vset.pattern.permute.xlu0 0
    %386 = vperm.xlu0 %385, %v101
    %v387 = vpop.permute.xlu0 %386
    %390 = vset.pattern.permute.xlu0 0
    %391 = vperm.xlu0 %390, %v102
    %v392 = vpop.permute.xlu0 %391
    %395 = vset.pattern.permute.xlu0 0
    %396 = vperm.xlu0 %395, %v103
    %v397 = vpop.permute.xlu0 %396
    %v399 = vmul.f32 %v382, %v369
    %v400 = vmul.f32 %v382, %v378
    %v401 = vmul.f32 %v387, %v369
    %v402 = vmul.f32 %v387, %v378
    %v403 = vmul.f32 %v392, %v369
    %v404 = vmul.f32 %v392, %v378
    %v405 = vmul.f32 %v397, %v369
    %v406 = vmul.f32 %v397, %v378
    %v408 = vsel %vm124, %v34, 0
    %v411 = vsel %vm124, %v35, 0
    %v414 = vsel %vm124, %v36, 0
    %v417 = vsel %vm124, %v37, 0
    %419 = vmatprep.subr.mxu0 %v354
    %420 = vmatpush1.msra.mxu0 %v353
    %421 = vmatprep.subr.mxu0 %v356
    %422 = vmatpush1.msra.mxu0 %v355
    %423 = vmatprep.subr.mxu0 %v358
    %424 = vmatpush1.msra.mxu0 %v357
    %425 = vmatprep.subr.mxu0 %v360
    %426 = vmatpush1.msra.mxu0 %v359
    %427 = vmatprep.subr.mxu0 0.0
    %428 = vmatpush1.msra.mxu0 0.0
    %429 = vmatprep.subr.mxu0 0.0
    %430 = vmatpush1.msra.mxu0 0.0
    %431 = vmatprep.subr.mxu0 0.0
    %432 = vmatpush1.msra.mxu0 0.0
    %433 = vmatprep.subr.mxu0 0.0
    %434 = vmatpush1.msra.mxu0 0.0
    %435 = vmatprep.subr.mxu0 0.0
    %436 = vmatpush1.msra.mxu0 0.0
    %437 = vmatprep.subr.mxu0 0.0
    %438 = vmatpush1.msra.mxu0 0.0
    %439 = vmatprep.subr.mxu0 0.0
    %440 = vmatpush1.msra.mxu0 0.0
    %441 = vmatprep.subr.mxu0 0.0
    %442 = vmatpush1.msra.mxu0 0.0
    %443 = vmatprep.subr.mxu0 0.0
    %444 = vmatpush1.msra.mxu0 0.0
    %445 = vmatprep.subr.mxu0 0.0
    %446 = vmatpush1.msra.mxu0 0.0
    %447 = vmatprep.subr.mxu0 0.0
    %448 = vmatpush1.msra.mxu0 0.0
    %449 = vmatprep.subr.mxu0 0.0
    %450 = vmatpush1.msra.mxu0 0.0
    %451 = vmatprep.subr.mxu0 0.0
    %452 = vmatpush1.msra.mxu0 0.0
    %453 = vmatprep.subr.mxu0 0.0
    %454 = vmatpush1.msra.mxu0 0.0
    %455 = vmatprep.subr.mxu0 0.0
    %456 = vmatpush1.msra.mxu0 0.0
    %457 = vmatprep.subr.mxu0 0.0
    %458 = vmatpush1.msra.mxu0 0.0
    %459 = vmatprep.subr.mxu0 0.0
    %460 = vmatpush1.msra.mxu0 0.0
    %461 = vmatprep.subr.mxu0 0.0
    %462 = vmatpush1.msra.mxu0 0.0
    %463 = vmatprep.subr.mxu0 0.0
    %464 = vmatpush1.msra.mxu0 0.0
    %465 = vmatprep.subr.mxu0 0.0
    %466 = vmatpush1.msra.mxu0 0.0
    %467 = vmatprep.subr.mxu0 0.0
    %468 = vmatpush1.msra.mxu0 0.0
    %469 = vmatprep.subr.mxu0 0.0
    %470 = vmatpush1.msra.mxu0 0.0
    %471 = vmatprep.subr.mxu0 0.0
    %472 = vmatpush1.msra.mxu0 0.0
    %473 = vmatprep.subr.mxu0 0.0
    %474 = vmatpush1.msra.mxu0 0.0
    %475 = vmatprep.subr.mxu0 0.0
    %476 = vmatpush1.msra.mxu0 0.0
    %477 = vmatprep.subr.mxu0 0.0
    %478 = vmatpush1.msra.mxu0 0.0
    %479 = vmatprep.subr.mxu0 0.0
    %480 = vmatpush1.msra.mxu0 0.0
    %481 = vmatprep.subr.mxu0 0.0
    %482 = vmatpush1.msra.mxu0 0.0
    %483 = vmatprep.mubr.f32.mxu0 0.0
    %484 = vmatmul.mubr.f32.gmra.mrb[0].mxu0 %v408
    %v485 = vpop.f32.mrb[0].mxu0
    %v486 = vadd.f32 %v399, %v485
    %v487 = vpop.f32.mrb[0].mxu0
    %v488 = vadd.f32 %v400, %v487
    %489 = vmatprep.mubr.f32.mxu0 0.0
    %490 = vmatmul.mubr.f32.gmra.mrb[0].mxu0 %v411
    %v491 = vpop.f32.mrb[0].mxu0
    %v492 = vadd.f32 %v401, %v491
    %v493 = vpop.f32.mrb[0].mxu0
    %v494 = vadd.f32 %v402, %v493
    %495 = vmatprep.mubr.f32.mxu0 0.0
    %496 = vmatmul.mubr.f32.gmra.mrb[0].mxu0 %v414
    %v497 = vpop.f32.mrb[0].mxu0
    %v498 = vadd.f32 %v403, %v497
    %v499 = vpop.f32.mrb[0].mxu0
    %v500 = vadd.f32 %v404, %v499
    %501 = vmatprep.mubr.f32.mxu0 0.0
    %502 = vmatmul.mubr.f32.gmra.mrb[0].mxu0 %v417
    %v503 = vpop.f32.mrb[0].mxu0
    %v504 = vadd.f32 %v405, %v503
    %v505 = vpop.f32.mrb[0].mxu0
    %v506 = vadd.f32 %v406, %v505
    %507 = vdwg.mxu0
    %v508 = vadd.f32 %v486, %v488
    %v509 = vadd.f32 %v508, %v492
    %v510 = vadd.f32 %v509, %v494
    %v511 = vadd.f32 %v510, %v498
    %v512 = vadd.f32 %v511, %v500
    %v513 = vadd.f32 %v512, %v504
    %v514 = vadd.f32 %v513, %v506
    %515 = vadd.xlane.f32.xlu0 %v514
    %v516 = vpop.xlane.xlu0 %515
    %v517 = vrot.slane %v516, 4
    %v518 = vadd.f32 %v516, %v517
    %v519 = vrot.slane %v518, 2
    %v520 = vadd.f32 %v518, %v519
    %v521 = vrot.slane %v520, 1
    %v522 = vadd.f32 %v520, %v521
    %s523 = vtos %v522
    %v524 = vmul.f32 %v486, %v486
    %v525 = vmul.f32 %v488, %v488
    %v526 = vmul.f32 %v492, %v492
    %v527 = vmul.f32 %v494, %v494
    %v528 = vmul.f32 %v498, %v498
    %v529 = vmul.f32 %v500, %v500
    %v530 = vmul.f32 %v504, %v504
    %v531 = vmul.f32 %v506, %v506
    %v532 = vadd.f32 %v524, %v525
    %v533 = vadd.f32 %v532, %v526
    %v534 = vadd.f32 %v533, %v527
    %v535 = vadd.f32 %v534, %v528
    %v536 = vadd.f32 %v535, %v529
    %v537 = vadd.f32 %v536, %v530
    %v538 = vadd.f32 %v537, %v531
    %539 = vadd.xlane.f32.xlu0 %v538
    %v540 = vpop.xlane.xlu0 %539
    %v541 = vrot.slane %v540, 4
    %v542 = vadd.f32 %v540, %v541
    %v543 = vrot.slane %v542, 2
    %v544 = vadd.f32 %v542, %v543
    %v545 = vrot.slane %v544, 1
    %v546 = vadd.f32 %v544, %v545
    %s547 = vtos %v546
    %s548 = smul.f32 %s523, 0.00015625
    %s549 = smul.f32 %s547, 0.00015625
    %s550 = smul.f32 %s548, %s548
    %s551 = ssub.f32 %s549, %s550
    %s552 = smax.f32 %s551, 0.0
    %s553 = sadd.f32 %s552, 1e-05
    %v554 = vstv %s553
    %v555 = vrsqrt.pop %v554
    %s556 = vtos %v555
    %v557 = vstv %s556
    %v558 = vmul.f32 %v39, %v557
    %v559 = vmul.f32 %v40, %v557
    %v560 = vmul.f32 %v41, %v557
    %v561 = vmul.f32 %v42, %v557
    %v562 = vstv %s548
    %v563 = vmul.f32 %v558, %v562
    %v564 = vmul.f32 %v559, %v562
    %v565 = vmul.f32 %v560, %v562
    %v566 = vmul.f32 %v561, %v562
    %v567 = vsub.f32 %v44, %v563
    %v568 = vsub.f32 %v45, %v564
    %v569 = vsub.f32 %v46, %v565
    %v570 = vsub.f32 %v47, %v566
    %572 = vset.pattern.permute.xlu0 0
    %573 = vperm.xlu0 %572, %v558
    %v574 = vpop.permute.xlu0 %573
    %577 = vset.pattern.permute.xlu0 0
    %578 = vperm.xlu0 %577, %v559
    %v579 = vpop.permute.xlu0 %578
    %582 = vset.pattern.permute.xlu0 0
    %583 = vperm.xlu0 %582, %v560
    %v584 = vpop.permute.xlu0 %583
    %587 = vset.pattern.permute.xlu0 0
    %588 = vperm.xlu0 %587, %v561
    %v589 = vpop.permute.xlu0 %588
    %v591 = vmul.f32 %v574, %v486
    %v592 = vmul.f32 %v574, %v488
    %v593 = vmul.f32 %v579, %v492
    %v594 = vmul.f32 %v579, %v494
    %v595 = vmul.f32 %v584, %v498
    %v596 = vmul.f32 %v584, %v500
    %v597 = vmul.f32 %v589, %v504
    %v598 = vmul.f32 %v589, %v506
    %600 = vset.pattern.permute.xlu0 0
    %601 = vperm.xlu0 %600, %v567
    %v602 = vpop.permute.xlu0 %601
    %605 = vset.pattern.permute.xlu0 0
    %606 = vperm.xlu0 %605, %v568
    %v607 = vpop.permute.xlu0 %606
    %610 = vset.pattern.permute.xlu0 0
    %611 = vperm.xlu0 %610, %v569
    %v612 = vpop.permute.xlu0 %611
    %615 = vset.pattern.permute.xlu0 0
    %616 = vperm.xlu0 %615, %v570
    %v617 = vpop.permute.xlu0 %616
    %v619 = vadd.f32 %v591, %v602
    %v620 = vadd.f32 %v592, %v602
    %v621 = vadd.f32 %v593, %v607
    %v622 = vadd.f32 %v594, %v607
    %v623 = vadd.f32 %v595, %v612
    %v624 = vadd.f32 %v596, %v612
    %v625 = vadd.f32 %v597, %v617
    %v626 = vadd.f32 %v598, %v617
    %v627 = vmul.f32 %v619, %v113
    %v628 = vmul.f32 %v620, %v114
    %v629 = vmul.f32 %v621, %v113
    %v630 = vmul.f32 %v622, %v114
    %v631 = vmul.f32 %v623, %v113
    %v632 = vmul.f32 %v624, %v114
    %v633 = vmul.f32 %v625, %v113
    %v634 = vmul.f32 %v626, %v114
    %v635 = vmax.f32 %v627, 0.0
    %v636 = vmax.f32 %v628, 0.0
    %v637 = vmax.f32 %v629, 0.0
    %v638 = vmax.f32 %v630, 0.0
    %v639 = vmax.f32 %v631, 0.0
    %v640 = vmax.f32 %v632, 0.0
    %v641 = vmax.f32 %v633, 0.0
    %v642 = vmax.f32 %v634, 0.0
    %v644 = vsel %vm124, %v49, 0
    %v647 = vsel %vm124, %v50, 0
    %v650 = vsel %vm124, %v51, 0
    %v653 = vsel %vm124, %v52, 0
    %655 = vmatprep.subr.mxu0 %v636
    %656 = vmatpush1.msra.mxu0 %v635
    %657 = vmatprep.subr.mxu0 %v638
    %658 = vmatpush1.msra.mxu0 %v637
    %659 = vmatprep.subr.mxu0 %v640
    %660 = vmatpush1.msra.mxu0 %v639
    %661 = vmatprep.subr.mxu0 %v642
    %662 = vmatpush1.msra.mxu0 %v641
    %663 = vmatprep.subr.mxu0 0.0
    %664 = vmatpush1.msra.mxu0 0.0
    %665 = vmatprep.subr.mxu0 0.0
    %666 = vmatpush1.msra.mxu0 0.0
    %667 = vmatprep.subr.mxu0 0.0
    %668 = vmatpush1.msra.mxu0 0.0
    %669 = vmatprep.subr.mxu0 0.0
    %670 = vmatpush1.msra.mxu0 0.0
    %671 = vmatprep.subr.mxu0 0.0
    %672 = vmatpush1.msra.mxu0 0.0
    %673 = vmatprep.subr.mxu0 0.0
    %674 = vmatpush1.msra.mxu0 0.0
    %675 = vmatprep.subr.mxu0 0.0
    %676 = vmatpush1.msra.mxu0 0.0
    %677 = vmatprep.subr.mxu0 0.0
    %678 = vmatpush1.msra.mxu0 0.0
    %679 = vmatprep.subr.mxu0 0.0
    %680 = vmatpush1.msra.mxu0 0.0
    %681 = vmatprep.subr.mxu0 0.0
    %682 = vmatpush1.msra.mxu0 0.0
    %683 = vmatprep.subr.mxu0 0.0
    %684 = vmatpush1.msra.mxu0 0.0
    %685 = vmatprep.subr.mxu0 0.0
    %686 = vmatpush1.msra.mxu0 0.0
    %687 = vmatprep.subr.mxu0 0.0
    %688 = vmatpush1.msra.mxu0 0.0
    %689 = vmatprep.subr.mxu0 0.0
    %690 = vmatpush1.msra.mxu0 0.0
    %691 = vmatprep.subr.mxu0 0.0
    %692 = vmatpush1.msra.mxu0 0.0
    %693 = vmatprep.subr.mxu0 0.0
    %694 = vmatpush1.msra.mxu0 0.0
    %695 = vmatprep.subr.mxu0 0.0
    %696 = vmatpush1.msra.mxu0 0.0
    %697 = vmatprep.subr.mxu0 0.0
    %698 = vmatpush1.msra.mxu0 0.0
    %699 = vmatprep.subr.mxu0 0.0
    %700 = vmatpush1.msra.mxu0 0.0
    %701 = vmatprep.subr.mxu0 0.0
    %702 = vmatpush1.msra.mxu0 0.0
    %703 = vmatprep.subr.mxu0 0.0
    %704 = vmatpush1.msra.mxu0 0.0
    %705 = vmatprep.subr.mxu0 0.0
    %706 = vmatpush1.msra.mxu0 0.0
    %707 = vmatprep.subr.mxu0 0.0
    %708 = vmatpush1.msra.mxu0 0.0
    %709 = vmatprep.subr.mxu0 0.0
    %710 = vmatpush1.msra.mxu0 0.0
    %711 = vmatprep.subr.mxu0 0.0
    %712 = vmatpush1.msra.mxu0 0.0
    %713 = vmatprep.subr.mxu0 0.0
    %714 = vmatpush1.msra.mxu0 0.0
    %715 = vmatprep.subr.mxu0 0.0
    %716 = vmatpush1.msra.mxu0 0.0
    %717 = vmatprep.subr.mxu0 0.0
    %718 = vmatpush1.msra.mxu0 0.0
    %719 = vmatprep.mubr.f32.mxu0 0.0
    %720 = vmatmul.mubr.f32.gmra.mrb[0].mxu0 %v644
    %v721 = vpop.f32.mrb[0].mxu0
    %v722 = vadd.f32 0.0, %v721
    %v723 = vpop.f32.mrb[0].mxu0
    %v724 = vadd.f32 0.0, %v723
    %725 = vmatprep.mubr.f32.mxu0 0.0
    %726 = vmatmul.mubr.f32.gmra.mrb[0].mxu0 %v647
    %v727 = vpop.f32.mrb[0].mxu0
    %v728 = vadd.f32 0.0, %v727
    %v729 = vpop.f32.mrb[0].mxu0
    %v730 = vadd.f32 0.0, %v729
    %731 = vmatprep.mubr.f32.mxu0 0.0
    %732 = vmatmul.mubr.f32.gmra.mrb[0].mxu0 %v650
    %v733 = vpop.f32.mrb[0].mxu0
    %v734 = vadd.f32 0.0, %v733
    %v735 = vpop.f32.mrb[0].mxu0
    %v736 = vadd.f32 0.0, %v735
    %737 = vmatprep.mubr.f32.mxu0 0.0
    %738 = vmatmul.mubr.f32.gmra.mrb[0].mxu0 %v653
    %v739 = vpop.f32.mrb[0].mxu0
    %v740 = vadd.f32 0.0, %v739
    %v741 = vpop.f32.mrb[0].mxu0
    %v742 = vadd.f32 0.0, %v741
    %743 = vdwg.mxu0
    %v744 = vadd.f32 %v722, %v724
    %v745 = vadd.f32 %v744, %v728
    %v746 = vadd.f32 %v745, %v730
    %v747 = vadd.f32 %v746, %v734
    %v748 = vadd.f32 %v747, %v736
    %v749 = vadd.f32 %v748, %v740
    %v750 = vadd.f32 %v749, %v742
    %751 = vadd.xlane.f32.xlu0 %v750
    %v752 = vpop.xlane.xlu0 %751
    %v753 = vrot.slane %v752, 4
    %v754 = vadd.f32 %v752, %v753
    %v755 = vrot.slane %v754, 2
    %v756 = vadd.f32 %v754, %v755
    %v757 = vrot.slane %v756, 1
    %v758 = vadd.f32 %v756, %v757
    %s759 = vtos %v758
    %v760 = vmul.f32 %v722, %v722
    %v761 = vmul.f32 %v724, %v724
    %v762 = vmul.f32 %v728, %v728
    %v763 = vmul.f32 %v730, %v730
    %v764 = vmul.f32 %v734, %v734
    %v765 = vmul.f32 %v736, %v736
    %v766 = vmul.f32 %v740, %v740
    %v767 = vmul.f32 %v742, %v742
    %v768 = vadd.f32 %v760, %v761
    %v769 = vadd.f32 %v768, %v762
    %v770 = vadd.f32 %v769, %v763
    %v771 = vadd.f32 %v770, %v764
    %v772 = vadd.f32 %v771, %v765
    %v773 = vadd.f32 %v772, %v766
    %v774 = vadd.f32 %v773, %v767
    %775 = vadd.xlane.f32.xlu0 %v774
    %v776 = vpop.xlane.xlu0 %775
    %v777 = vrot.slane %v776, 4
    %v778 = vadd.f32 %v776, %v777
    %v779 = vrot.slane %v778, 2
    %v780 = vadd.f32 %v778, %v779
    %v781 = vrot.slane %v780, 1
    %v782 = vadd.f32 %v780, %v781
    %s783 = vtos %v782
    %s784 = smul.f32 %s759, 0.00015625
    %s785 = smul.f32 %s783, 0.00015625
    %s786 = smul.f32 %s784, %s784
    %s787 = ssub.f32 %s785, %s786
    %s788 = smax.f32 %s787, 0.0
    %s789 = sadd.f32 %s788, 1e-05
    %v790 = vstv %s789
    %v791 = vrsqrt.pop %v790
    %s792 = vtos %v791
    %v793 = vstv %s792
    %v794 = vmul.f32 %v54, %v793
    %v795 = vmul.f32 %v55, %v793
    %v796 = vmul.f32 %v56, %v793
    %v797 = vmul.f32 %v57, %v793
    %v798 = vstv %s784
    %v799 = vmul.f32 %v794, %v798
    %v800 = vmul.f32 %v795, %v798
    %v801 = vmul.f32 %v796, %v798
    %v802 = vmul.f32 %v797, %v798
    %v803 = vsub.f32 %v59, %v799
    %v804 = vsub.f32 %v60, %v800
    %v805 = vsub.f32 %v61, %v801
    %v806 = vsub.f32 %v62, %v802
    %808 = vset.pattern.permute.xlu0 0
    %809 = vperm.xlu0 %808, %v794
    %v810 = vpop.permute.xlu0 %809
    %813 = vset.pattern.permute.xlu0 0
    %814 = vperm.xlu0 %813, %v795
    %v815 = vpop.permute.xlu0 %814
    %818 = vset.pattern.permute.xlu0 0
    %819 = vperm.xlu0 %818, %v796
    %v820 = vpop.permute.xlu0 %819
    %823 = vset.pattern.permute.xlu0 0
    %824 = vperm.xlu0 %823, %v797
    %v825 = vpop.permute.xlu0 %824
    %v827 = vmul.f32 %v810, %v722
    %v828 = vmul.f32 %v810, %v724
    %v829 = vmul.f32 %v815, %v728
    %v830 = vmul.f32 %v815, %v730
    %v831 = vmul.f32 %v820, %v734
    %v832 = vmul.f32 %v820, %v736
    %v833 = vmul.f32 %v825, %v740
    %v834 = vmul.f32 %v825, %v742
    %836 = vset.pattern.permute.xlu0 0
    %837 = vperm.xlu0 %836, %v803
    %v838 = vpop.permute.xlu0 %837
    %841 = vset.pattern.permute.xlu0 0
    %842 = vperm.xlu0 %841, %v804
    %v843 = vpop.permute.xlu0 %842
    %846 = vset.pattern.permute.xlu0 0
    %847 = vperm.xlu0 %846, %v805
    %v848 = vpop.permute.xlu0 %847
    %851 = vset.pattern.permute.xlu0 0
    %852 = vperm.xlu0 %851, %v806
    %v853 = vpop.permute.xlu0 %852
    %v855 = vadd.f32 %v827, %v838
    %v856 = vadd.f32 %v828, %v838
    %v857 = vadd.f32 %v829, %v843
    %v858 = vadd.f32 %v830, %v843
    %v859 = vadd.f32 %v831, %v848
    %v860 = vadd.f32 %v832, %v848
    %v861 = vadd.f32 %v833, %v853
    %v862 = vadd.f32 %v834, %v853
    %v863 = vmul.f32 %v855, %v113
    %v864 = vmul.f32 %v856, %v114
    %v865 = vmul.f32 %v857, %v113
    %v866 = vmul.f32 %v858, %v114
    %v867 = vmul.f32 %v859, %v113
    %v868 = vmul.f32 %v860, %v114
    %v869 = vmul.f32 %v861, %v113
    %v870 = vmul.f32 %v862, %v114
    %v871 = vadd.f32 %v863, %v115
    %v872 = vadd.f32 %v864, %v116
    %v873 = vadd.f32 %v865, %v117
    %v874 = vadd.f32 %v866, %v118
    %v875 = vadd.f32 %v867, %v119
    %v876 = vadd.f32 %v868, %v120
    %v877 = vadd.f32 %v869, %v121
    %v878 = vadd.f32 %v870, %v122
    %v879 = vmax.f32 %v871, 0.0
    %v880 = vmax.f32 %v872, 0.0
    %v881 = vmax.f32 %v873, 0.0
    %v882 = vmax.f32 %v874, 0.0
    %v883 = vmax.f32 %v875, 0.0
    %v884 = vmax.f32 %v876, 0.0
    %v885 = vmax.f32 %v877, 0.0
    %v886 = vmax.f32 %v878, 0.0
    %v888 = vsel %vm124, %v64, 0
    %890 = vmatprep.subr.mxu0 %v880
    %891 = vmatpush1.msra.mxu0 %v879
    %892 = vmatprep.subr.mxu0 %v882
    %893 = vmatpush1.msra.mxu0 %v881
    %894 = vmatprep.subr.mxu0 %v884
    %895 = vmatpush1.msra.mxu0 %v883
    %896 = vmatprep.subr.mxu0 %v886
    %897 = vmatpush1.msra.mxu0 %v885
    %898 = vmatprep.subr.mxu0 0.0
    %899 = vmatpush1.msra.mxu0 0.0
    %900 = vmatprep.subr.mxu0 0.0
    %901 = vmatpush1.msra.mxu0 0.0
    %902 = vmatprep.subr.mxu0 0.0
    %903 = vmatpush1.msra.mxu0 0.0
    %904 = vmatprep.subr.mxu0 0.0
    %905 = vmatpush1.msra.mxu0 0.0
    %906 = vmatprep.subr.mxu0 0.0
    %907 = vmatpush1.msra.mxu0 0.0
    %908 = vmatprep.subr.mxu0 0.0
    %909 = vmatpush1.msra.mxu0 0.0
    %910 = vmatprep.subr.mxu0 0.0
    %911 = vmatpush1.msra.mxu0 0.0
    %912 = vmatprep.subr.mxu0 0.0
    %913 = vmatpush1.msra.mxu0 0.0
    %914 = vmatprep.subr.mxu0 0.0
    %915 = vmatpush1.msra.mxu0 0.0
    %916 = vmatprep.subr.mxu0 0.0
    %917 = vmatpush1.msra.mxu0 0.0
    %918 = vmatprep.subr.mxu0 0.0
    %919 = vmatpush1.msra.mxu0 0.0
    %920 = vmatprep.subr.mxu0 0.0
    %921 = vmatpush1.msra.mxu0 0.0
    %922 = vmatprep.subr.mxu0 0.0
    %923 = vmatpush1.msra.mxu0 0.0
    %924 = vmatprep.subr.mxu0 0.0
    %925 = vmatpush1.msra.mxu0 0.0
    %926 = vmatprep.subr.mxu0 0.0
    %927 = vmatpush1.msra.mxu0 0.0
    %928 = vmatprep.subr.mxu0 0.0
    %929 = vmatpush1.msra.mxu0 0.0
    %930 = vmatprep.subr.mxu0 0.0
    %931 = vmatpush1.msra.mxu0 0.0
    %932 = vmatprep.subr.mxu0 0.0
    %933 = vmatpush1.msra.mxu0 0.0
    %934 = vmatprep.subr.mxu0 0.0
    %935 = vmatpush1.msra.mxu0 0.0
    %936 = vmatprep.subr.mxu0 0.0
    %937 = vmatpush1.msra.mxu0 0.0
    %938 = vmatprep.subr.mxu0 0.0
    %939 = vmatpush1.msra.mxu0 0.0
    %940 = vmatprep.subr.mxu0 0.0
    %941 = vmatpush1.msra.mxu0 0.0
    %942 = vmatprep.subr.mxu0 0.0
    %943 = vmatpush1.msra.mxu0 0.0
    %944 = vmatprep.subr.mxu0 0.0
    %945 = vmatpush1.msra.mxu0 0.0
    %946 = vmatprep.subr.mxu0 0.0
    %947 = vmatpush1.msra.mxu0 0.0
    %948 = vmatprep.subr.mxu0 0.0
    %949 = vmatpush1.msra.mxu0 0.0
    %950 = vmatprep.subr.mxu0 0.0
    %951 = vmatpush1.msra.mxu0 0.0
    %952 = vmatprep.subr.mxu0 0.0
    %953 = vmatpush1.msra.mxu0 0.0
    %954 = vmatprep.mubr.f32.mxu0 0.0
    %955 = vmatmul.mubr.f32.gmra.mrb[0].mxu0 %v888
    %v956 = vpop.f32.mrb[0].mxu0
    %v957 = vadd.f32 0.0, %v956
    %v958 = vpop.f32.mrb[0].mxu0
    %v959 = vadd.f32 0.0, %v958
    %960 = vdwg.mxu0
    %v961 = vadd.f32 %v957, %v959
    %962 = vadd.xlane.f32.xlu0 %v961
    %v963 = vpop.xlane.xlu0 %962
    %v964 = vrot.slane %v963, 4
    %v965 = vadd.f32 %v963, %v964
    %v966 = vrot.slane %v965, 2
    %v967 = vadd.f32 %v965, %v966
    %v968 = vrot.slane %v967, 1
    %v969 = vadd.f32 %v967, %v968
    %s970 = vtos %v969
    %v971 = vmul.f32 %v957, %v957
    %v972 = vmul.f32 %v959, %v959
    %v973 = vadd.f32 %v971, %v972
    %974 = vadd.xlane.f32.xlu0 %v973
    %v975 = vpop.xlane.xlu0 %974
    %v976 = vrot.slane %v975, 4
    %v977 = vadd.f32 %v975, %v976
    %v978 = vrot.slane %v977, 2
    %v979 = vadd.f32 %v977, %v978
    %v980 = vrot.slane %v979, 1
    %v981 = vadd.f32 %v979, %v980
    %s982 = vtos %v981
    %s983 = smul.f32 %s970, 0.000625
    %s984 = smul.f32 %s982, 0.000625
    %s985 = smul.f32 %s983, %s983
    %s986 = ssub.f32 %s984, %s985
    %s987 = smax.f32 %s986, 0.0
    %s988 = sadd.f32 %s987, 1e-05
    %v989 = vstv %s988
    %v990 = vrsqrt.pop %v989
    %s991 = vtos %v990
    %v992 = vstv %s991
    %v993 = vmul.f32 %v66, %v992
    %v994 = vstv %s983
    %v995 = vmul.f32 %v993, %v994
    %v996 = vsub.f32 %v68, %v995
    %998 = vset.pattern.permute.xlu0 0
    %999 = vperm.xlu0 %998, %v993
    %v1000 = vpop.permute.xlu0 %999
    %v1002 = vmul.f32 %v1000, %v957
    %v1003 = vmul.f32 %v1000, %v959
    %1005 = vset.pattern.permute.xlu0 0
    %1006 = vperm.xlu0 %1005, %v996
    %v1007 = vpop.permute.xlu0 %1006
    %v1009 = vadd.f32 %v1002, %v1007
    %v1010 = vadd.f32 %v1003, %v1007
    %v1011 = vmul.f32 %v1009, %v113
    %v1012 = vmul.f32 %v1010, %v114
    %v1013 = vmax.f32 %v1011, 0.0
    %v1014 = vmax.f32 %v1012, 0.0
    %1016 = vset.pattern.permute.xlu0 0
    %1017 = vperm.xlu0 %1016, %v70
    %v1018 = vpop.permute.xlu0 %1017
    %v1020 = vlaneseq
    %v1021 = vshrl.u32 %v1020, 7
    %v1022 = vsub.s32 0, %v1021
    %v1023 = vrot.slane %v1013, %v1022
    %v1024 = vlaneseq
    %v1025 = vshrl.u32 %v1024, 7
    %v1026 = vsub.s32 0, %v1025
    %v1027 = vrot.slane %v1014, %v1026
    %v1028 = vmul.f32 %v1018, %v1023
    %v1029 = vmul.f32 %v1018, %v1027
    %1030 = vset.pattern.permute.xlu0 1
    %1031 = vperm.xlu0 %1030, %v70
    %v1032 = vpop.permute.xlu0 %1031
    %v1034 = vlaneseq
    %v1035 = vshrl.u32 %v1034, 7
    %v1036 = vsub.s32 1, %v1035
    %v1037 = vrot.slane %v1013, %v1036
    %v1038 = vlaneseq
    %v1039 = vshrl.u32 %v1038, 7
    %v1040 = vsub.s32 1, %v1039
    %v1041 = vrot.slane %v1014, %v1040
    %v1042 = vmul.f32 %v1032, %v1037
    %v1043 = vmul.f32 %v1032, %v1041
    %v1044 = vadd.f32 %v1028, %v1042
    %v1045 = vadd.f32 %v1029, %v1043
    %1046 = vset.pattern.permute.xlu0 2
    %1047 = vperm.xlu0 %1046, %v70
    %v1048 = vpop.permute.xlu0 %1047
    %v1050 = vlaneseq
    %v1051 = vshrl.u32 %v1050, 7
    %v1052 = vsub.s32 2, %v1051
    %v1053 = vrot.slane %v1013, %v1052
    %v1054 = vlaneseq
    %v1055 = vshrl.u32 %v1054, 7
    %v1056 = vsub.s32 2, %v1055
    %v1057 = vrot.slane %v1014, %v1056
    %v1058 = vmul.f32 %v1048, %v1053
    %v1059 = vmul.f32 %v1048, %v1057
    %v1060 = vadd.f32 %v1044, %v1058
    %v1061 = vadd.f32 %v1045, %v1059
    %1062 = vset.pattern.permute.xlu0 3
    %1063 = vperm.xlu0 %1062, %v70
    %v1064 = vpop.permute.xlu0 %1063
    %v1066 = vlaneseq
    %v1067 = vshrl.u32 %v1066, 7
    %v1068 = vsub.s32 3, %v1067
    %v1069 = vrot.slane %v1013, %v1068
    %v1070 = vlaneseq
    %v1071 = vshrl.u32 %v1070, 7
    %v1072 = vsub.s32 3, %v1071
    %v1073 = vrot.slane %v1014, %v1072
    %v1074 = vmul.f32 %v1064, %v1069
    %v1075 = vmul.f32 %v1064, %v1073
    %v1076 = vadd.f32 %v1060, %v1074
    %v1077 = vadd.f32 %v1061, %v1075
    %1078 = vset.pattern.permute.xlu0 4
    %1079 = vperm.xlu0 %1078, %v70
    %v1080 = vpop.permute.xlu0 %1079
    %v1082 = vlaneseq
    %v1083 = vshrl.u32 %v1082, 7
    %v1084 = vsub.s32 4, %v1083
    %v1085 = vrot.slane %v1013, %v1084
    %v1086 = vlaneseq
    %v1087 = vshrl.u32 %v1086, 7
    %v1088 = vsub.s32 4, %v1087
    %v1089 = vrot.slane %v1014, %v1088
    %v1090 = vmul.f32 %v1080, %v1085
    %v1091 = vmul.f32 %v1080, %v1089
    %v1092 = vadd.f32 %v1076, %v1090
    %v1093 = vadd.f32 %v1077, %v1091
    %1094 = vset.pattern.permute.xlu0 5
    %1095 = vperm.xlu0 %1094, %v70
    %v1096 = vpop.permute.xlu0 %1095
    %v1098 = vlaneseq
    %v1099 = vshrl.u32 %v1098, 7
    %v1100 = vsub.s32 5, %v1099
    %v1101 = vrot.slane %v1013, %v1100
    %v1102 = vlaneseq
    %v1103 = vshrl.u32 %v1102, 7
    %v1104 = vsub.s32 5, %v1103
    %v1105 = vrot.slane %v1014, %v1104
    %v1106 = vmul.f32 %v1096, %v1101
    %v1107 = vmul.f32 %v1096, %v1105
    %v1108 = vadd.f32 %v1092, %v1106
    %v1109 = vadd.f32 %v1093, %v1107
    %1110 = vset.pattern.permute.xlu0 6
    %1111 = vperm.xlu0 %1110, %v70
    %v1112 = vpop.permute.xlu0 %1111
    %v1114 = vlaneseq
    %v1115 = vshrl.u32 %v1114, 7
    %v1116 = vsub.s32 6, %v1115
    %v1117 = vrot.slane %v1013, %v1116
    %v1118 = vlaneseq
    %v1119 = vshrl.u32 %v1118, 7
    %v1120 = vsub.s32 6, %v1119
    %v1121 = vrot.slane %v1014, %v1120
    %v1122 = vmul.f32 %v1112, %v1117
    %v1123 = vmul.f32 %v1112, %v1121
    %v1124 = vadd.f32 %v1108, %v1122
    %v1125 = vadd.f32 %v1109, %v1123
    %1126 = vset.pattern.permute.xlu0 7
    %1127 = vperm.xlu0 %1126, %v70
    %v1128 = vpop.permute.xlu0 %1127
    %v1130 = vlaneseq
    %v1131 = vshrl.u32 %v1130, 7
    %v1132 = vsub.s32 7, %v1131
    %v1133 = vrot.slane %v1013, %v1132
    %v1134 = vlaneseq
    %v1135 = vshrl.u32 %v1134, 7
    %v1136 = vsub.s32 7, %v1135
    %v1137 = vrot.slane %v1014, %v1136
    %v1138 = vmul.f32 %v1128, %v1133
    %v1139 = vmul.f32 %v1128, %v1137
    %v1140 = vadd.f32 %v1124, %v1138
    %v1141 = vadd.f32 %v1125, %v1139
    %v1142 = vadd.f32 %v1140, %v1141
    %1143 = vadd.xlane.f32.xlu0 %v1142
    %v1144 = vpop.xlane.xlu0 %1143
    %v1145 = vrot.slane %v1144, 4
    %v1146 = vadd.f32 %v1144, %v1145
    %v1147 = vrot.slane %v1146, 2
    %v1148 = vadd.f32 %v1146, %v1147
    %v1149 = vrot.slane %v1148, 1
    %v1150 = vadd.f32 %v1148, %v1149
    %s1151 = vtos %v1150
    %v1152 = vmul.f32 %v1140, %v1140
    %v1153 = vmul.f32 %v1141, %v1141
    %v1154 = vadd.f32 %v1152, %v1153
    %1155 = vadd.xlane.f32.xlu0 %v1154
    %v1156 = vpop.xlane.xlu0 %1155
    %v1157 = vrot.slane %v1156, 4
    %v1158 = vadd.f32 %v1156, %v1157
    %v1159 = vrot.slane %v1158, 2
    %v1160 = vadd.f32 %v1158, %v1159
    %v1161 = vrot.slane %v1160, 1
    %v1162 = vadd.f32 %v1160, %v1161
    %s1163 = vtos %v1162
    %s1164 = smul.f32 %s1151, 0.000625
    %s1165 = smul.f32 %s1163, 0.000625
    %s1166 = smul.f32 %s1164, %s1164
    %s1167 = ssub.f32 %s1165, %s1166
    %s1168 = smax.f32 %s1167, 0.0
    %s1169 = sadd.f32 %s1168, 1e-05
    %v1170 = vstv %s1169
    %v1171 = vrsqrt.pop %v1170
    %s1172 = vtos %v1171
    %v1173 = vstv %s1172
    %v1174 = vmul.f32 %v72, %v1173
    %v1175 = vstv %s1164
    %v1176 = vmul.f32 %v1174, %v1175
    %v1177 = vsub.f32 %v74, %v1176
    %1179 = vset.pattern.permute.xlu0 0
    %1180 = vperm.xlu0 %1179, %v1174
    %v1181 = vpop.permute.xlu0 %1180
    %v1183 = vmul.f32 %v1181, %v1140
    %v1184 = vmul.f32 %v1181, %v1141
    %1186 = vset.pattern.permute.xlu0 0
    %1187 = vperm.xlu0 %1186, %v1177
    %v1188 = vpop.permute.xlu0 %1187
    %v1190 = vadd.f32 %v1183, %v1188
    %v1191 = vadd.f32 %v1184, %v1188
    %v1192 = vmul.f32 %v1190, %v113
    %v1193 = vmul.f32 %v1191, %v114
    %v1194 = vmax.f32 %v1192, 0.0
    %v1195 = vmax.f32 %v1193, 0.0
    %v1196 = vrot.slane %v1194, 4
    %v1197 = vmax.f32 %v1194, %v1196
    %v1198 = vrot.slane %v1197, 2
    %v1199 = vmax.f32 %v1197, %v1198
    %v1200 = vrot.slane %v1199, 1
    %v1201 = vmax.f32 %v1199, %v1200
    %v1202 = vrot.slane %v1195, 4
    %v1203 = vmax.f32 %v1195, %v1202
    %v1204 = vrot.slane %v1203, 2
    %v1205 = vmax.f32 %v1203, %v1204
    %v1206 = vrot.slane %v1205, 1
    %v1207 = vmax.f32 %v1205, %v1206
    %1209 = vset.pattern.permute.xlu0 0
    %1210 = vperm.xlu0 %1209, %v76
    %v1211 = vpop.permute.xlu0 %1210
    %v1213 = vlaneseq
    %v1214 = vshrl.u32 %v1213, 7
    %v1215 = vsub.s32 0, %v1214
    %v1216 = vrot.slane %v1194, %v1215
    %v1217 = vlaneseq
    %v1218 = vshrl.u32 %v1217, 7
    %v1219 = vsub.s32 0, %v1218
    %v1220 = vrot.slane %v1195, %v1219
    %v1221 = vmul.f32 %v1211, %v1216
    %v1222 = vmul.f32 %v1211, %v1220
    %1223 = vset.pattern.permute.xlu0 1
    %1224 = vperm.xlu0 %1223, %v76
    %v1225 = vpop.permute.xlu0 %1224
    %v1227 = vlaneseq
    %v1228 = vshrl.u32 %v1227, 7
    %v1229 = vsub.s32 1, %v1228
    %v1230 = vrot.slane %v1194, %v1229
    %v1231 = vlaneseq
    %v1232 = vshrl.u32 %v1231, 7
    %v1233 = vsub.s32 1, %v1232
    %v1234 = vrot.slane %v1195, %v1233
    %v1235 = vmul.f32 %v1225, %v1230
    %v1236 = vmul.f32 %v1225, %v1234
    %v1237 = vadd.f32 %v1221, %v1235
    %v1238 = vadd.f32 %v1222, %v1236
    %1239 = vset.pattern.permute.xlu0 2
    %1240 = vperm.xlu0 %1239, %v76
    %v1241 = vpop.permute.xlu0 %1240
    %v1243 = vlaneseq
    %v1244 = vshrl.u32 %v1243, 7
    %v1245 = vsub.s32 2, %v1244
    %v1246 = vrot.slane %v1194, %v1245
    %v1247 = vlaneseq
    %v1248 = vshrl.u32 %v1247, 7
    %v1249 = vsub.s32 2, %v1248
    %v1250 = vrot.slane %v1195, %v1249
    %v1251 = vmul.f32 %v1241, %v1246
    %v1252 = vmul.f32 %v1241, %v1250
    %v1253 = vadd.f32 %v1237, %v1251
    %v1254 = vadd.f32 %v1238, %v1252
    %1255 = vset.pattern.permute.xlu0 3
    %1256 = vperm.xlu0 %1255, %v76
    %v1257 = vpop.permute.xlu0 %1256
    %v1259 = vlaneseq
    %v1260 = vshrl.u32 %v1259, 7
    %v1261 = vsub.s32 3, %v1260
    %v1262 = vrot.slane %v1194, %v1261
    %v1263 = vlaneseq
    %v1264 = vshrl.u32 %v1263, 7
    %v1265 = vsub.s32 3, %v1264
    %v1266 = vrot.slane %v1195, %v1265
    %v1267 = vmul.f32 %v1257, %v1262
    %v1268 = vmul.f32 %v1257, %v1266
    %v1269 = vadd.f32 %v1253, %v1267
    %v1270 = vadd.f32 %v1254, %v1268
    %1271 = vset.pattern.permute.xlu0 4
    %1272 = vperm.xlu0 %1271, %v76
    %v1273 = vpop.permute.xlu0 %1272
    %v1275 = vlaneseq
    %v1276 = vshrl.u32 %v1275, 7
    %v1277 = vsub.s32 4, %v1276
    %v1278 = vrot.slane %v1194, %v1277
    %v1279 = vlaneseq
    %v1280 = vshrl.u32 %v1279, 7
    %v1281 = vsub.s32 4, %v1280
    %v1282 = vrot.slane %v1195, %v1281
    %v1283 = vmul.f32 %v1273, %v1278
    %v1284 = vmul.f32 %v1273, %v1282
    %v1285 = vadd.f32 %v1269, %v1283
    %v1286 = vadd.f32 %v1270, %v1284
    %1287 = vset.pattern.permute.xlu0 5
    %1288 = vperm.xlu0 %1287, %v76
    %v1289 = vpop.permute.xlu0 %1288
    %v1291 = vlaneseq
    %v1292 = vshrl.u32 %v1291, 7
    %v1293 = vsub.s32 5, %v1292
    %v1294 = vrot.slane %v1194, %v1293
    %v1295 = vlaneseq
    %v1296 = vshrl.u32 %v1295, 7
    %v1297 = vsub.s32 5, %v1296
    %v1298 = vrot.slane %v1195, %v1297
    %v1299 = vmul.f32 %v1289, %v1294
    %v1300 = vmul.f32 %v1289, %v1298
    %v1301 = vadd.f32 %v1285, %v1299
    %v1302 = vadd.f32 %v1286, %v1300
    %1303 = vset.pattern.permute.xlu0 6
    %1304 = vperm.xlu0 %1303, %v76
    %v1305 = vpop.permute.xlu0 %1304
    %v1307 = vlaneseq
    %v1308 = vshrl.u32 %v1307, 7
    %v1309 = vsub.s32 6, %v1308
    %v1310 = vrot.slane %v1194, %v1309
    %v1311 = vlaneseq
    %v1312 = vshrl.u32 %v1311, 7
    %v1313 = vsub.s32 6, %v1312
    %v1314 = vrot.slane %v1195, %v1313
    %v1315 = vmul.f32 %v1305, %v1310
    %v1316 = vmul.f32 %v1305, %v1314
    %v1317 = vadd.f32 %v1301, %v1315
    %v1318 = vadd.f32 %v1302, %v1316
    %1319 = vset.pattern.permute.xlu0 7
    %1320 = vperm.xlu0 %1319, %v76
    %v1321 = vpop.permute.xlu0 %1320
    %v1323 = vlaneseq
    %v1324 = vshrl.u32 %v1323, 7
    %v1325 = vsub.s32 7, %v1324
    %v1326 = vrot.slane %v1194, %v1325
    %v1327 = vlaneseq
    %v1328 = vshrl.u32 %v1327, 7
    %v1329 = vsub.s32 7, %v1328
    %v1330 = vrot.slane %v1195, %v1329
    %v1331 = vmul.f32 %v1321, %v1326
    %v1332 = vmul.f32 %v1321, %v1330
    %v1333 = vadd.f32 %v1317, %v1331
    %v1334 = vadd.f32 %v1318, %v1332
    %1336 = vset.pattern.permute.xlu0 0
    %1337 = vperm.xlu0 %1336, %v105
    %v1338 = vpop.permute.xlu0 %1337
    %v1340 = vmul.f32 %v1338, %v1201
    %v1341 = vmul.f32 %v1338, %v1207
    %v1342 = vadd.f32 %v1333, %v1340
    %v1343 = vadd.f32 %v1334, %v1341
    %v1344 = vadd.f32 %v1342, %v1343
    %1345 = vadd.xlane.f32.xlu0 %v1344
    %v1346 = vpop.xlane.xlu0 %1345
    %v1347 = vrot.slane %v1346, 4
    %v1348 = vadd.f32 %v1346, %v1347
    %v1349 = vrot.slane %v1348, 2
    %v1350 = vadd.f32 %v1348, %v1349
    %v1351 = vrot.slane %v1350, 1
    %v1352 = vadd.f32 %v1350, %v1351
    %s1353 = vtos %v1352
    %v1354 = vmul.f32 %v1342, %v1342
    %v1355 = vmul.f32 %v1343, %v1343
    %v1356 = vadd.f32 %v1354, %v1355
    %1357 = vadd.xlane.f32.xlu0 %v1356
    %v1358 = vpop.xlane.xlu0 %1357
    %v1359 = vrot.slane %v1358, 4
    %v1360 = vadd.f32 %v1358, %v1359
    %v1361 = vrot.slane %v1360, 2
    %v1362 = vadd.f32 %v1360, %v1361
    %v1363 = vrot.slane %v1362, 1
    %v1364 = vadd.f32 %v1362, %v1363
    %s1365 = vtos %v1364
    %s1366 = smul.f32 %s1353, 0.000625
    %s1367 = smul.f32 %s1365, 0.000625
    %s1368 = smul.f32 %s1366, %s1366
    %s1369 = ssub.f32 %s1367, %s1368
    %s1370 = smax.f32 %s1369, 0.0
    %s1371 = sadd.f32 %s1370, 1e-05
    %v1372 = vstv %s1371
    %v1373 = vrsqrt.pop %v1372
    %s1374 = vtos %v1373
    %v1375 = vstv %s1374
    %v1376 = vmul.f32 %v78, %v1375
    %v1377 = vstv %s1366
    %v1378 = vmul.f32 %v1376, %v1377
    %v1379 = vsub.f32 %v80, %v1378
    %1381 = vset.pattern.permute.xlu0 0
    %1382 = vperm.xlu0 %1381, %v1376
    %v1383 = vpop.permute.xlu0 %1382
    %v1385 = vmul.f32 %v1383, %v1342
    %v1386 = vmul.f32 %v1383, %v1343
    %1388 = vset.pattern.permute.xlu0 0
    %1389 = vperm.xlu0 %1388, %v1379
    %v1390 = vpop.permute.xlu0 %1389
    %v1392 = vadd.f32 %v1385, %v1390
    %v1393 = vadd.f32 %v1386, %v1390
    %v1394 = vmul.f32 %v1392, %v113
    %v1395 = vmul.f32 %v1393, %v114
    %v1396 = vmax.f32 %v1394, 0.0
    %v1397 = vmax.f32 %v1395, 0.0
    %1399 = vset.pattern.permute.xlu0 0
    %1400 = vperm.xlu0 %1399, %v82
    %v1401 = vpop.permute.xlu0 %1400
    %v1403 = vlaneseq
    %v1404 = vshrl.u32 %v1403, 7
    %v1405 = vsub.s32 0, %v1404
    %v1406 = vrot.slane %v1396, %v1405
    %v1407 = vlaneseq
    %v1408 = vshrl.u32 %v1407, 7
    %v1409 = vsub.s32 0, %v1408
    %v1410 = vrot.slane %v1397, %v1409
    %v1411 = vmul.f32 %v1401, %v1406
    %v1412 = vmul.f32 %v1401, %v1410
    %1413 = vset.pattern.permute.xlu0 1
    %1414 = vperm.xlu0 %1413, %v82
    %v1415 = vpop.permute.xlu0 %1414
    %v1417 = vlaneseq
    %v1418 = vshrl.u32 %v1417, 7
    %v1419 = vsub.s32 1, %v1418
    %v1420 = vrot.slane %v1396, %v1419
    %v1421 = vlaneseq
    %v1422 = vshrl.u32 %v1421, 7
    %v1423 = vsub.s32 1, %v1422
    %v1424 = vrot.slane %v1397, %v1423
    %v1425 = vmul.f32 %v1415, %v1420
    %v1426 = vmul.f32 %v1415, %v1424
    %v1427 = vadd.f32 %v1411, %v1425
    %v1428 = vadd.f32 %v1412, %v1426
    %1429 = vset.pattern.permute.xlu0 2
    %1430 = vperm.xlu0 %1429, %v82
    %v1431 = vpop.permute.xlu0 %1430
    %v1433 = vlaneseq
    %v1434 = vshrl.u32 %v1433, 7
    %v1435 = vsub.s32 2, %v1434
    %v1436 = vrot.slane %v1396, %v1435
    %v1437 = vlaneseq
    %v1438 = vshrl.u32 %v1437, 7
    %v1439 = vsub.s32 2, %v1438
    %v1440 = vrot.slane %v1397, %v1439
    %v1441 = vmul.f32 %v1431, %v1436
    %v1442 = vmul.f32 %v1431, %v1440
    %v1443 = vadd.f32 %v1427, %v1441
    %v1444 = vadd.f32 %v1428, %v1442
    %1445 = vset.pattern.permute.xlu0 3
    %1446 = vperm.xlu0 %1445, %v82
    %v1447 = vpop.permute.xlu0 %1446
    %v1449 = vlaneseq
    %v1450 = vshrl.u32 %v1449, 7
    %v1451 = vsub.s32 3, %v1450
    %v1452 = vrot.slane %v1396, %v1451
    %v1453 = vlaneseq
    %v1454 = vshrl.u32 %v1453, 7
    %v1455 = vsub.s32 3, %v1454
    %v1456 = vrot.slane %v1397, %v1455
    %v1457 = vmul.f32 %v1447, %v1452
    %v1458 = vmul.f32 %v1447, %v1456
    %v1459 = vadd.f32 %v1443, %v1457
    %v1460 = vadd.f32 %v1444, %v1458
    %1461 = vset.pattern.permute.xlu0 4
    %1462 = vperm.xlu0 %1461, %v82
    %v1463 = vpop.permute.xlu0 %1462
    %v1465 = vlaneseq
    %v1466 = vshrl.u32 %v1465, 7
    %v1467 = vsub.s32 4, %v1466
    %v1468 = vrot.slane %v1396, %v1467
    %v1469 = vlaneseq
    %v1470 = vshrl.u32 %v1469, 7
    %v1471 = vsub.s32 4, %v1470
    %v1472 = vrot.slane %v1397, %v1471
    %v1473 = vmul.f32 %v1463, %v1468
    %v1474 = vmul.f32 %v1463, %v1472
    %v1475 = vadd.f32 %v1459, %v1473
    %v1476 = vadd.f32 %v1460, %v1474
    %1477 = vset.pattern.permute.xlu0 5
    %1478 = vperm.xlu0 %1477, %v82
    %v1479 = vpop.permute.xlu0 %1478
    %v1481 = vlaneseq
    %v1482 = vshrl.u32 %v1481, 7
    %v1483 = vsub.s32 5, %v1482
    %v1484 = vrot.slane %v1396, %v1483
    %v1485 = vlaneseq
    %v1486 = vshrl.u32 %v1485, 7
    %v1487 = vsub.s32 5, %v1486
    %v1488 = vrot.slane %v1397, %v1487
    %v1489 = vmul.f32 %v1479, %v1484
    %v1490 = vmul.f32 %v1479, %v1488
    %v1491 = vadd.f32 %v1475, %v1489
    %v1492 = vadd.f32 %v1476, %v1490
    %1493 = vset.pattern.permute.xlu0 6
    %1494 = vperm.xlu0 %1493, %v82
    %v1495 = vpop.permute.xlu0 %1494
    %v1497 = vlaneseq
    %v1498 = vshrl.u32 %v1497, 7
    %v1499 = vsub.s32 6, %v1498
    %v1500 = vrot.slane %v1396, %v1499
    %v1501 = vlaneseq
    %v1502 = vshrl.u32 %v1501, 7
    %v1503 = vsub.s32 6, %v1502
    %v1504 = vrot.slane %v1397, %v1503
    %v1505 = vmul.f32 %v1495, %v1500
    %v1506 = vmul.f32 %v1495, %v1504
    %v1507 = vadd.f32 %v1491, %v1505
    %v1508 = vadd.f32 %v1492, %v1506
    %1509 = vset.pattern.permute.xlu0 7
    %1510 = vperm.xlu0 %1509, %v82
    %v1511 = vpop.permute.xlu0 %1510
    %v1513 = vlaneseq
    %v1514 = vshrl.u32 %v1513, 7
    %v1515 = vsub.s32 7, %v1514
    %v1516 = vrot.slane %v1396, %v1515
    %v1517 = vlaneseq
    %v1518 = vshrl.u32 %v1517, 7
    %v1519 = vsub.s32 7, %v1518
    %v1520 = vrot.slane %v1397, %v1519
    %v1521 = vmul.f32 %v1511, %v1516
    %v1522 = vmul.f32 %v1511, %v1520
    %v1523 = vadd.f32 %v1507, %v1521
    %v1524 = vadd.f32 %v1508, %v1522
    %v1525 = vadd.f32 %v1523, %v1524
    %1526 = vadd.xlane.f32.xlu0 %v1525
    %v1527 = vpop.xlane.xlu0 %1526
    %v1528 = vrot.slane %v1527, 4
    %v1529 = vadd.f32 %v1527, %v1528
    %v1530 = vrot.slane %v1529, 2
    %v1531 = vadd.f32 %v1529, %v1530
    %v1532 = vrot.slane %v1531, 1
    %v1533 = vadd.f32 %v1531, %v1532
    %s1534 = vtos %v1533
    %v1535 = vmul.f32 %v1523, %v1523
    %v1536 = vmul.f32 %v1524, %v1524
    %v1537 = vadd.f32 %v1535, %v1536
    %1538 = vadd.xlane.f32.xlu0 %v1537
    %v1539 = vpop.xlane.xlu0 %1538
    %v1540 = vrot.slane %v1539, 4
    %v1541 = vadd.f32 %v1539, %v1540
    %v1542 = vrot.slane %v1541, 2
    %v1543 = vadd.f32 %v1541, %v1542
    %v1544 = vrot.slane %v1543, 1
    %v1545 = vadd.f32 %v1543, %v1544
    %s1546 = vtos %v1545
    %s1547 = smul.f32 %s1534, 0.000625
    %s1548 = smul.f32 %s1546, 0.000625
    %s1549 = smul.f32 %s1547, %s1547
    %s1550 = ssub.f32 %s1548, %s1549
    %s1551 = smax.f32 %s1550, 0.0
    %s1552 = sadd.f32 %s1551, 1e-05
    %v1553 = vstv %s1552
    %v1554 = vrsqrt.pop %v1553
    %s1555 = vtos %v1554
    %v1556 = vstv %s1555
    %v1557 = vmul.f32 %v84, %v1556
    %v1558 = vstv %s1547
    %v1559 = vmul.f32 %v1557, %v1558
    %v1560 = vsub.f32 %v86, %v1559
    %1562 = vset.pattern.permute.xlu0 0
    %1563 = vperm.xlu0 %1562, %v1557
    %v1564 = vpop.permute.xlu0 %1563
    %v1566 = vmul.f32 %v1564, %v1523
    %v1567 = vmul.f32 %v1564, %v1524
    %1569 = vset.pattern.permute.xlu0 0
    %1570 = vperm.xlu0 %1569, %v1560
    %v1571 = vpop.permute.xlu0 %1570
    %v1573 = vadd.f32 %v1566, %v1571
    %v1574 = vadd.f32 %v1567, %v1571
    %v1575 = vmul.f32 %v1573, %v113
    %v1576 = vmul.f32 %v1574, %v114
    %v1577 = vadd.f32 %v1575, %v1013
    %v1578 = vadd.f32 %v1576, %v1014
    %v1579 = vmax.f32 %v1577, 0.0
    %v1580 = vmax.f32 %v1578, 0.0
    %1582 = vset.pattern.permute.xlu0 0
    %1583 = vperm.xlu0 %1582, %v88
    %v1584 = vpop.permute.xlu0 %1583
    %v1586 = vlaneseq
    %v1587 = vshrl.u32 %v1586, 7
    %v1588 = vsub.s32 0, %v1587
    %v1589 = vrot.slane %v1579, %v1588
    %v1590 = vlaneseq
    %v1591 = vshrl.u32 %v1590, 7
    %v1592 = vsub.s32 0, %v1591
    %v1593 = vrot.slane %v1580, %v1592
    %v1594 = vmul.f32 %v1584, %v1589
    %v1595 = vmul.f32 %v1584, %v1593
    %1596 = vset.pattern.permute.xlu0 1
    %1597 = vperm.xlu0 %1596, %v88
    %v1598 = vpop.permute.xlu0 %1597
    %v1600 = vlaneseq
    %v1601 = vshrl.u32 %v1600, 7
    %v1602 = vsub.s32 1, %v1601
    %v1603 = vrot.slane %v1579, %v1602
    %v1604 = vlaneseq
    %v1605 = vshrl.u32 %v1604, 7
    %v1606 = vsub.s32 1, %v1605
    %v1607 = vrot.slane %v1580, %v1606
    %v1608 = vmul.f32 %v1598, %v1603
    %v1609 = vmul.f32 %v1598, %v1607
    %v1610 = vadd.f32 %v1594, %v1608
    %v1611 = vadd.f32 %v1595, %v1609
    %1612 = vset.pattern.permute.xlu0 2
    %1613 = vperm.xlu0 %1612, %v88
    %v1614 = vpop.permute.xlu0 %1613
    %v1616 = vlaneseq
    %v1617 = vshrl.u32 %v1616, 7
    %v1618 = vsub.s32 2, %v1617
    %v1619 = vrot.slane %v1579, %v1618
    %v1620 = vlaneseq
    %v1621 = vshrl.u32 %v1620, 7
    %v1622 = vsub.s32 2, %v1621
    %v1623 = vrot.slane %v1580, %v1622
    %v1624 = vmul.f32 %v1614, %v1619
    %v1625 = vmul.f32 %v1614, %v1623
    %v1626 = vadd.f32 %v1610, %v1624
    %v1627 = vadd.f32 %v1611, %v1625
    %1628 = vset.pattern.permute.xlu0 3
    %1629 = vperm.xlu0 %1628, %v88
    %v1630 = vpop.permute.xlu0 %1629
    %v1632 = vlaneseq
    %v1633 = vshrl.u32 %v1632, 7
    %v1634 = vsub.s32 3, %v1633
    %v1635 = vrot.slane %v1579, %v1634
    %v1636 = vlaneseq
    %v1637 = vshrl.u32 %v1636, 7
    %v1638 = vsub.s32 3, %v1637
    %v1639 = vrot.slane %v1580, %v1638
    %v1640 = vmul.f32 %v1630, %v1635
    %v1641 = vmul.f32 %v1630, %v1639
    %v1642 = vadd.f32 %v1626, %v1640
    %v1643 = vadd.f32 %v1627, %v1641
    %1644 = vset.pattern.permute.xlu0 4
    %1645 = vperm.xlu0 %1644, %v88
    %v1646 = vpop.permute.xlu0 %1645
    %v1648 = vlaneseq
    %v1649 = vshrl.u32 %v1648, 7
    %v1650 = vsub.s32 4, %v1649
    %v1651 = vrot.slane %v1579, %v1650
    %v1652 = vlaneseq
    %v1653 = vshrl.u32 %v1652, 7
    %v1654 = vsub.s32 4, %v1653
    %v1655 = vrot.slane %v1580, %v1654
    %v1656 = vmul.f32 %v1646, %v1651
    %v1657 = vmul.f32 %v1646, %v1655
    %v1658 = vadd.f32 %v1642, %v1656
    %v1659 = vadd.f32 %v1643, %v1657
    %1660 = vset.pattern.permute.xlu0 5
    %1661 = vperm.xlu0 %1660, %v88
    %v1662 = vpop.permute.xlu0 %1661
    %v1664 = vlaneseq
    %v1665 = vshrl.u32 %v1664, 7
    %v1666 = vsub.s32 5, %v1665
    %v1667 = vrot.slane %v1579, %v1666
    %v1668 = vlaneseq
    %v1669 = vshrl.u32 %v1668, 7
    %v1670 = vsub.s32 5, %v1669
    %v1671 = vrot.slane %v1580, %v1670
    %v1672 = vmul.f32 %v1662, %v1667
    %v1673 = vmul.f32 %v1662, %v1671
    %v1674 = vadd.f32 %v1658, %v1672
    %v1675 = vadd.f32 %v1659, %v1673
    %1676 = vset.pattern.permute.xlu0 6
    %1677 = vperm.xlu0 %1676, %v88
    %v1678 = vpop.permute.xlu0 %1677
    %v1680 = vlaneseq
    %v1681 = vshrl.u32 %v1680, 7
    %v1682 = vsub.s32 6, %v1681
    %v1683 = vrot.slane %v1579, %v1682
    %v1684 = vlaneseq
    %v1685 = vshrl.u32 %v1684, 7
    %v1686 = vsub.s32 6, %v1685
    %v1687 = vrot.slane %v1580, %v1686
    %v1688 = vmul.f32 %v1678, %v1683
    %v1689 = vmul.f32 %v1678, %v1687
    %v1690 = vadd.f32 %v1674, %v1688
    %v1691 = vadd.f32 %v1675, %v1689
    %1692 = vset.pattern.permute.xlu0 7
    %1693 = vperm.xlu0 %1692, %v88
    %v1694 = vpop.permute.xlu0 %1693
    %v1696 = vlaneseq
    %v1697 = vshrl.u32 %v1696, 7
    %v1698 = vsub.s32 7, %v1697
    %v1699 = vrot.slane %v1579, %v1698
    %v1700 = vlaneseq
    %v1701 = vshrl.u32 %v1700, 7
    %v1702 = vsub.s32 7, %v1701
    %v1703 = vrot.slane %v1580, %v1702
    %v1704 = vmul.f32 %v1694, %v1699
    %v1705 = vmul.f32 %v1694, %v1703
    %v1706 = vadd.f32 %v1690, %v1704
    %v1707 = vadd.f32 %v1691, %v1705
    %vm1708 = vcmask 1043456
    %v1709 = vsel %vm1708, %v1706, 0.0
    %v1710 = vsel %vm1708, %v1707, 0.0
    %v1711 = vadd.f32 %v1709, %v1710
    %1712 = vadd.xlane.f32.xlu0 %v1711
    %v1713 = vpop.xlane.xlu0 %1712
    %v1714 = vrot.slane %v1713, 4
    %v1715 = vadd.f32 %v1713, %v1714
    %v1716 = vrot.slane %v1715, 2
    %v1717 = vadd.f32 %v1715, %v1716
    %v1718 = vrot.slane %v1717, 1
    %v1719 = vadd.f32 %v1717, %v1718
    %s1720 = vtos %v1719
    %v1721 = vmul.f32 %v1706, %v1706
    %v1722 = vmul.f32 %v1707, %v1707
    %v1723 = vsel %vm1708, %v1721, 0.0
    %v1724 = vsel %vm1708, %v1722, 0.0
    %v1725 = vadd.f32 %v1723, %v1724
    %1726 = vadd.xlane.f32.xlu0 %v1725
    %v1727 = vpop.xlane.xlu0 %1726
    %v1728 = vrot.slane %v1727, 4
    %v1729 = vadd.f32 %v1727, %v1728
    %v1730 = vrot.slane %v1729, 2
    %v1731 = vadd.f32 %v1729, %v1730
    %v1732 = vrot.slane %v1731, 1
    %v1733 = vadd.f32 %v1731, %v1732
    %s1734 = vtos %v1733
    %s1735 = smul.f32 %s1720, 0.00125
    %s1736 = smul.f32 %s1734, 0.00125
    %s1737 = smul.f32 %s1735, %s1735
    %s1738 = ssub.f32 %s1736, %s1737
    %s1739 = smax.f32 %s1738, 0.0
    %s1740 = sadd.f32 %s1739, 1e-05
    %v1741 = vstv %s1740
    %v1742 = vrsqrt.pop %v1741
    %s1743 = vtos %v1742
    %v1744 = vstv %s1743
    %v1745 = vmul.f32 %v90, %v1744
    %v1746 = vstv %s1735
    %v1747 = vmul.f32 %v1745, %v1746
    %v1748 = vsub.f32 %v92, %v1747
    %1750 = vset.pattern.permute.xlu0 0
    %1751 = vperm.xlu0 %1750, %v1745
    %v1752 = vpop.permute.xlu0 %1751
    %v1754 = vmul.f32 %v1752, %v1706
    %v1755 = vmul.f32 %v1752, %v1707
    %1757 = vset.pattern.permute.xlu0 0
    %1758 = vperm.xlu0 %1757, %v1748
    %v1759 = vpop.permute.xlu0 %1758
    %v1761 = vadd.f32 %v1754, %v1759
    %v1762 = vadd.f32 %v1755, %v1759
    %v1763 = vmul.f32 %v1761, %v113
    %v1764 = vmul.f32 %v1762, %v114
    %v1765 = vmax.f32 %v1763, 0.0
    %v1766 = vmax.f32 %v1764, 0.0
    %1768 = vset.pattern.permute.xlu0 0
    %1769 = vperm.xlu0 %1768, %v94
    %v1770 = vpop.permute.xlu0 %1769
    %v1772 = vmul.f32 %v1770, %v1765
    %v1773 = vmul.f32 %v1770, %v1766
    %1774 = vset.pattern.permute.xlu0 1
    %1775 = vperm.xlu0 %1774, %v94
    %v1776 = vpop.permute.xlu0 %1775
    %v1780 = vrot.slane %v1765, 1
    %v1781 = vrot.slane %v1766, 1
    %v1784 = vmul.f32 %v1776, %v1780
    %v1785 = vmul.f32 %v1776, %v1781
    %v1786 = vadd.f32 %v1772, %v1784
    %v1787 = vadd.f32 %v1773, %v1785
    %1788 = vset.pattern.permute.xlu0 2
    %1789 = vperm.xlu0 %1788, %v94
    %v1790 = vpop.permute.xlu0 %1789
    %v1792 = vrot.slane %v1765, 2
    %v1793 = vrot.slane %v1766, 2
    %v1796 = vmul.f32 %v1790, %v1792
    %v1797 = vmul.f32 %v1790, %v1793
    %v1798 = vadd.f32 %v1786, %v1796
    %v1799 = vadd.f32 %v1787, %v1797
    %1800 = vset.pattern.permute.xlu0 3
    %1801 = vperm.xlu0 %1800, %v94
    %v1802 = vpop.permute.xlu0 %1801
    %v1804 = vrot.slane %v1765, 3
    %v1805 = vrot.slane %v1766, 3
    %v1808 = vmul.f32 %v1802, %v1804
    %v1809 = vmul.f32 %v1802, %v1805
    %v1810 = vadd.f32 %v1798, %v1808
    %v1811 = vadd.f32 %v1799, %v1809
    %vm1812 = vcmask 1040384
    %v1813 = vsel %vm1812, %v1810, 0.0
    %v1814 = vsel %vm1812, %v1811, 0.0
    %v1815 = vadd.f32 %v1813, %v1814
    %1816 = vadd.xlane.f32.xlu0 %v1815
    %v1817 = vpop.xlane.xlu0 %1816
    %v1818 = vrot.slane %v1817, 4
    %v1819 = vadd.f32 %v1817, %v1818
    %v1820 = vrot.slane %v1819, 2
    %v1821 = vadd.f32 %v1819, %v1820
    %v1822 = vrot.slane %v1821, 1
    %v1823 = vadd.f32 %v1821, %v1822
    %s1824 = vtos %v1823
    %v1825 = vmul.f32 %v1810, %v1810
    %v1826 = vmul.f32 %v1811, %v1811
    %v1827 = vsel %vm1812, %v1825, 0.0
    %v1828 = vsel %vm1812, %v1826, 0.0
    %v1829 = vadd.f32 %v1827, %v1828
    %1830 = vadd.xlane.f32.xlu0 %v1829
    %v1831 = vpop.xlane.xlu0 %1830
    %v1832 = vrot.slane %v1831, 4
    %v1833 = vadd.f32 %v1831, %v1832
    %v1834 = vrot.slane %v1833, 2
    %v1835 = vadd.f32 %v1833, %v1834
    %v1836 = vrot.slane %v1835, 1
    %v1837 = vadd.f32 %v1835, %v1836
    %s1838 = vtos %v1837
    %s1839 = smul.f32 %s1824, 0.005
    %s1840 = smul.f32 %s1838, 0.005
    %s1841 = smul.f32 %s1839, %s1839
    %s1842 = ssub.f32 %s1840, %s1841
    %s1843 = smax.f32 %s1842, 0.0
    %s1844 = sadd.f32 %s1843, 1e-05
    %v1845 = vstv %s1844
    %v1846 = vrsqrt.pop %v1845
    %s1847 = vtos %v1846
    %v1848 = vstv %s1847
    %v1849 = vmul.f32 %v96, %v1848
    %v1850 = vstv %s1839
    %v1851 = vmul.f32 %v1849, %v1850
    %v1852 = vsub.f32 %v98, %v1851
    %1854 = vset.pattern.permute.xlu0 0
    %1855 = vperm.xlu0 %1854, %v1849
    %v1856 = vpop.permute.xlu0 %1855
    %v1858 = vmul.f32 %v1856, %v1810
    %v1859 = vmul.f32 %v1856, %v1811
    %1861 = vset.pattern.permute.xlu0 0
    %1862 = vperm.xlu0 %1861, %v1852
    %v1863 = vpop.permute.xlu0 %1862
    %v1865 = vadd.f32 %v1858, %v1863
    %v1866 = vadd.f32 %v1859, %v1863
    %v1867 = vmul.f32 %v1865, %v113
    %v1868 = vmul.f32 %v1866, %v114
    %v1869 = vsel %vm109, %v1867, -1e+30
    %v1870 = vsel %vm110, %v1868, -1e+30
    %v1871 = vsel %vm1812, %v1869, -inf
    %v1872 = vsel %vm1812, %v1870, -inf
    %v1873 = vmax.f32 %v1871, %v1872
    %1874 = vmax.xlane.f32.xlu0 %v1873
    %v1875 = vpop.xlane.xlu0 %1874
    %v1876 = vsub.f32 %v1869, %v1875
    %v1877 = vsub.f32 %v1870, %v1875
    %v1878 = vmul.f32 %v1876, 1.442695
    %v1879 = vpow.pop %v1878
    %v1880 = vmul.f32 %v1877, 1.442695
    %v1881 = vpow.pop %v1880
    %v1882 = vsel %vm1812, %v1879, 0.0
    %v1883 = vsel %vm1812, %v1881, 0.0
    %v1884 = vadd.f32 %v1882, %v1883
    %1885 = vadd.xlane.f32.xlu0 %v1884
    %v1886 = vpop.xlane.xlu0 %1885
    %v1887 = vrcp.pop %v1886
    %v1888 = vmul.f32 %v1879, %v1887
    %v1889 = vmul.f32 %v1881, %v1887
    %v1892 = vcombine.low %v1888, %v1889
    %v1894 = vunpack.c.l.s4 1966171168
    %v1895 = vunpack.c.0.s8 %v1894
    %v1896 = vlaneseq
    %v1897 = vshrl.u32 %v1896, 7
    %v1898 = vsub.s32 %v1895, %v1897
    %v1899 = vrot.slane %v1892, %v1898
    %v1901 = vunpack.c.l.s4 1966171168
    %v1902 = vunpack.c.0.s8 %v1901
    %v1903 = vlaneseq
    %v1904 = vshrl.u32 %v1903, 7
    %v1905 = vsub.s32 %v1902, %v1904
    %v1906 = vrot.slane %v1899, %v1905
    %v1908 = vlaneseq
    %vm1909 = vcmp.ge.s32.totalorder %v1908, 0
    %vm1910 = vcmp.lt.s32.totalorder %v1908, 256
    %vm1911 = vmand %vm1909, %vm1910
    %1912 = vst.msk [vmem:[#allocation2] sm:$0x3] %vm1911, %v1906
    %v1913 = vlaneseq
    %v1914 = vshrl.u32 %v1913, 7
    %v1915 = vsub.s32 0, %v1914
    %v1916 = vrot.slane %v1888, %v1915
    %v1917 = vlaneseq
    %v1918 = vshrl.u32 %v1917, 7
    %v1919 = vsub.s32 0, %v1918
    %v1920 = vrot.slane %v1889, %v1919
    %v1923 = vcombine.low %v1916, %v1920
    %v1925 = vunpack.c.l.s4 1983009808
    %v1926 = vunpack.c.0.s8 %v1925
    %v1927 = vlaneseq
    %v1928 = vshrl.u32 %v1927, 7
    %v1929 = vsub.s32 %v1926, %v1928
    %v1930 = vrot.slane %v1923, %v1929
    %v1932 = vmul.f32 %v123, %v1930
    %v1935 = vunpack.c.l.s4 1983009808
    %v1936 = vunpack.c.0.s8 %v1935
    %v1937 = vlaneseq
    %v1938 = vshrl.u32 %v1937, 7
    %v1939 = vsub.s32 %v1936, %v1938
    %v1940 = vrot.slane %v1932, %v1939
    %v1941 = vcombine.high %v1940, %v1940
    %vm1944 = vcmask 1041408
    %v1945 = vsel %vm1944, %v1940, 0.0
    %v1946 = vsel %vm1944, %v1941, 0.0
    %v1947 = vadd.f32 %v1945, %v1946
    %1948 = vadd.xlane.f32.xlu0 %v1947
    %v1949 = vpop.xlane.xlu0 %1948
    %vm1950 = vcmask 1024
    %1951 = vst.msk [vmem:[%s4] sm:$0x3] %vm1950, %v1949
    %s1952 = scalar_lea.vmem %s0, 64
    %v1953 = vld [vmem:[%s1952] sm:$0xff]
    %v1954 = vld [vmem:[%s1952 + $0x8] sm:$0xff]
    %v1955 = vld [vmem:[%s1952 + $0x10] sm:$0xff]
    %v1956 = vld [vmem:[%s1952 + $0x18] sm:$0xff]
    %v1957 = vld [vmem:[%s1952 + $0x20] sm:$0xff]
    %v1958 = vld [vmem:[%s1952 + $0x28] sm:$0xff]
    %v1959 = vld [vmem:[%s1952 + $0x30] sm:$0xff]
    %v1960 = vld [vmem:[%s1952 + $0x38] sm:$0xff]
    %s1961 = scalar_lea.vmem %s1, 4
    %v1962 = vld [vmem:[%s1961] sm:$0xf]
    %1963 = vmatprep.subr.mxu0 %v1954
    %1964 = vmatpush1.msra.mxu0 %v1953
    %1965 = vmatprep.subr.mxu0 %v1956
    %1966 = vmatpush1.msra.mxu0 %v1955
    %1967 = vmatprep.subr.mxu0 %v1958
    %1968 = vmatpush1.msra.mxu0 %v1957
    %1969 = vmatprep.subr.mxu0 %v1960
    %1970 = vmatpush1.msra.mxu0 %v1959
    %1971 = vmatprep.subr.mxu0 0.0
    %1972 = vmatpush1.msra.mxu0 0.0
    %1973 = vmatprep.subr.mxu0 0.0
    %1974 = vmatpush1.msra.mxu0 0.0
    %1975 = vmatprep.subr.mxu0 0.0
    %1976 = vmatpush1.msra.mxu0 0.0
    %1977 = vmatprep.subr.mxu0 0.0
    %1978 = vmatpush1.msra.mxu0 0.0
    %1979 = vmatprep.subr.mxu0 0.0
    %1980 = vmatpush1.msra.mxu0 0.0
    %1981 = vmatprep.subr.mxu0 0.0
    %1982 = vmatpush1.msra.mxu0 0.0
    %1983 = vmatprep.subr.mxu0 0.0
    %1984 = vmatpush1.msra.mxu0 0.0
    %1985 = vmatprep.subr.mxu0 0.0
    %1986 = vmatpush1.msra.mxu0 0.0
    %1987 = vmatprep.subr.mxu0 0.0
    %1988 = vmatpush1.msra.mxu0 0.0
    %1989 = vmatprep.subr.mxu0 0.0
    %1990 = vmatpush1.msra.mxu0 0.0
    %1991 = vmatprep.subr.mxu0 0.0
    %1992 = vmatpush1.msra.mxu0 0.0
    %1993 = vmatprep.subr.mxu0 0.0
    %1994 = vmatpush1.msra.mxu0 0.0
    %1995 = vmatprep.subr.mxu0 0.0
    %1996 = vmatpush1.msra.mxu0 0.0
    %1997 = vmatprep.subr.mxu0 0.0
    %1998 = vmatpush1.msra.mxu0 0.0
    %1999 = vmatprep.subr.mxu0 0.0
    %2000 = vmatpush1.msra.mxu0 0.0
    %2001 = vmatprep.subr.mxu0 0.0
    %2002 = vmatpush1.msra.mxu0 0.0
    %2003 = vmatprep.subr.mxu0 0.0
    %2004 = vmatpush1.msra.mxu0 0.0
    %2005 = vmatprep.subr.mxu0 0.0
    %2006 = vmatpush1.msra.mxu0 0.0
    %2007 = vmatprep.subr.mxu0 0.0
    %2008 = vmatpush1.msra.mxu0 0.0
    %2009 = vmatprep.subr.mxu0 0.0
    %2010 = vmatpush1.msra.mxu0 0.0
    %2011 = vmatprep.subr.mxu0 0.0
    %2012 = vmatpush1.msra.mxu0 0.0
    %2013 = vmatprep.subr.mxu0 0.0
    %2014 = vmatpush1.msra.mxu0 0.0
    %2015 = vmatprep.subr.mxu0 0.0
    %2016 = vmatpush1.msra.mxu0 0.0
    %2017 = vmatprep.subr.mxu0 0.0
    %2018 = vmatpush1.msra.mxu0 0.0
    %2019 = vmatprep.subr.mxu0 0.0
    %2020 = vmatpush1.msra.mxu0 0.0
    %2021 = vmatprep.subr.mxu0 0.0
    %2022 = vmatpush1.msra.mxu0 0.0
    %2023 = vmatprep.subr.mxu0 0.0
    %2024 = vmatpush1.msra.mxu0 0.0
    %2025 = vmatprep.subr.mxu0 0.0
    %2026 = vmatpush1.msra.mxu0 0.0
    %2027 = vmatprep.mubr.f32.mxu0 0.0
    %2028 = vmatmul.mubr.f32.gmra.mrb[0].mxu0 %v126
    %v2029 = vpop.f32.mrb[0].mxu0
    %v2030 = vadd.f32 0.0, %v2029
    %v2031 = vpop.f32.mrb[0].mxu0
    %v2032 = vadd.f32 0.0, %v2031
    %2033 = vmatprep.mubr.f32.mxu0 0.0
    %2034 = vmatmul.mubr.f32.gmra.mrb[0].mxu0 %v129
    %v2035 = vpop.f32.mrb[0].mxu0
    %v2036 = vadd.f32 0.0, %v2035
    %v2037 = vpop.f32.mrb[0].mxu0
    %v2038 = vadd.f32 0.0, %v2037
    %2039 = vmatprep.mubr.f32.mxu0 0.0
    %2040 = vmatmul.mubr.f32.gmra.mrb[0].mxu0 %v132
    %v2041 = vpop.f32.mrb[0].mxu0
    %v2042 = vadd.f32 0.0, %v2041
    %v2043 = vpop.f32.mrb[0].mxu0
    %v2044 = vadd.f32 0.0, %v2043
    %2045 = vmatprep.mubr.f32.mxu0 0.0
    %2046 = vmatmul.mubr.f32.gmra.mrb[0].mxu0 %v135
    %v2047 = vpop.f32.mrb[0].mxu0
    %v2048 = vadd.f32 0.0, %v2047
    %v2049 = vpop.f32.mrb[0].mxu0
    %v2050 = vadd.f32 0.0, %v2049
    %2051 = vdwg.mxu0
    %v2052 = vadd.f32 %v2030, %v2032
    %v2053 = vadd.f32 %v2052, %v2036
    %v2054 = vadd.f32 %v2053, %v2038
    %v2055 = vadd.f32 %v2054, %v2042
    %v2056 = vadd.f32 %v2055, %v2044
    %v2057 = vadd.f32 %v2056, %v2048
    %v2058 = vadd.f32 %v2057, %v2050
    %2059 = vadd.xlane.f32.xlu0 %v2058
    %v2060 = vpop.xlane.xlu0 %2059
    %v2061 = vrot.slane %v2060, 4
    %v2062 = vadd.f32 %v2060, %v2061
    %v2063 = vrot.slane %v2062, 2
    %v2064 = vadd.f32 %v2062, %v2063
    %v2065 = vrot.slane %v2064, 1
    %v2066 = vadd.f32 %v2064, %v2065
    %s2067 = vtos %v2066
    %v2068 = vmul.f32 %v2030, %v2030
    %v2069 = vmul.f32 %v2032, %v2032
    %v2070 = vmul.f32 %v2036, %v2036
    %v2071 = vmul.f32 %v2038, %v2038
    %v2072 = vmul.f32 %v2042, %v2042
    %v2073 = vmul.f32 %v2044, %v2044
    %v2074 = vmul.f32 %v2048, %v2048
    %v2075 = vmul.f32 %v2050, %v2050
    %v2076 = vadd.f32 %v2068, %v2069
    %v2077 = vadd.f32 %v2076, %v2070
    %v2078 = vadd.f32 %v2077, %v2071
    %v2079 = vadd.f32 %v2078, %v2072
    %v2080 = vadd.f32 %v2079, %v2073
    %v2081 = vadd.f32 %v2080, %v2074
    %v2082 = vadd.f32 %v2081, %v2075
    %2083 = vadd.xlane.f32.xlu0 %v2082
    %v2084 = vpop.xlane.xlu0 %2083
    %v2085 = vrot.slane %v2084, 4
    %v2086 = vadd.f32 %v2084, %v2085
    %v2087 = vrot.slane %v2086, 2
    %v2088 = vadd.f32 %v2086, %v2087
    %v2089 = vrot.slane %v2088, 1
    %v2090 = vadd.f32 %v2088, %v2089
    %s2091 = vtos %v2090
    %s2092 = smul.f32 %s2067, 0.00015625
    %s2093 = smul.f32 %s2091, 0.00015625
    %s2094 = smul.f32 %s2092, %s2092
    %s2095 = ssub.f32 %s2093, %s2094
    %s2096 = smax.f32 %s2095, 0.0
    %s2097 = sadd.f32 %s2096, 1e-05
    %v2098 = vstv %s2097
    %v2099 = vrsqrt.pop %v2098
    %s2100 = vtos %v2099
    %v2101 = vstv %s2100
    %v2102 = vmul.f32 %v24, %v2101
    %v2103 = vmul.f32 %v25, %v2101
    %v2104 = vmul.f32 %v26, %v2101
    %v2105 = vmul.f32 %v27, %v2101
    %v2106 = vstv %s2092
    %v2107 = vmul.f32 %v2102, %v2106
    %v2108 = vmul.f32 %v2103, %v2106
    %v2109 = vmul.f32 %v2104, %v2106
    %v2110 = vmul.f32 %v2105, %v2106
    %v2111 = vsub.f32 %v29, %v2107
    %v2112 = vsub.f32 %v30, %v2108
    %v2113 = vsub.f32 %v31, %v2109
    %v2114 = vsub.f32 %v32, %v2110
    %2116 = vset.pattern.permute.xlu0 0
    %2117 = vperm.xlu0 %2116, %v2102
    %v2118 = vpop.permute.xlu0 %2117
    %2121 = vset.pattern.permute.xlu0 0
    %2122 = vperm.xlu0 %2121, %v2103
    %v2123 = vpop.permute.xlu0 %2122
    %2126 = vset.pattern.permute.xlu0 0
    %2127 = vperm.xlu0 %2126, %v2104
    %v2128 = vpop.permute.xlu0 %2127
    %2131 = vset.pattern.permute.xlu0 0
    %2132 = vperm.xlu0 %2131, %v2105
    %v2133 = vpop.permute.xlu0 %2132
    %v2135 = vmul.f32 %v2118, %v2030
    %v2136 = vmul.f32 %v2118, %v2032
    %v2137 = vmul.f32 %v2123, %v2036
    %v2138 = vmul.f32 %v2123, %v2038
    %v2139 = vmul.f32 %v2128, %v2042
    %v2140 = vmul.f32 %v2128, %v2044
    %v2141 = vmul.f32 %v2133, %v2048
    %v2142 = vmul.f32 %v2133, %v2050
    %2144 = vset.pattern.permute.xlu0 0
    %2145 = vperm.xlu0 %2144, %v2111
    %v2146 = vpop.permute.xlu0 %2145
    %2149 = vset.pattern.permute.xlu0 0
    %2150 = vperm.xlu0 %2149, %v2112
    %v2151 = vpop.permute.xlu0 %2150
    %2154 = vset.pattern.permute.xlu0 0
    %2155 = vperm.xlu0 %2154, %v2113
    %v2156 = vpop.permute.xlu0 %2155
    %2159 = vset.pattern.permute.xlu0 0
    %2160 = vperm.xlu0 %2159, %v2114
    %v2161 = vpop.permute.xlu0 %2160
    %v2163 = vadd.f32 %v2135, %v2146
    %v2164 = vadd.f32 %v2136, %v2146
    %v2165 = vadd.f32 %v2137, %v2151
    %v2166 = vadd.f32 %v2138, %v2151
    %v2167 = vadd.f32 %v2139, %v2156
    %v2168 = vadd.f32 %v2140, %v2156
    %v2169 = vadd.f32 %v2141, %v2161
    %v2170 = vadd.f32 %v2142, %v2161
    %v2171 = vmul.f32 %v2163, %v113
    %v2172 = vmul.f32 %v2164, %v114
    %v2173 = vmul.f32 %v2165, %v113
    %v2174 = vmul.f32 %v2166, %v114
    %v2175 = vmul.f32 %v2167, %v113
    %v2176 = vmul.f32 %v2168, %v114
    %v2177 = vmul.f32 %v2169, %v113
    %v2178 = vmul.f32 %v2170, %v114
    %v2179 = vmax.f32 %v2171, 0.0
    %v2180 = vmax.f32 %v2172, 0.0
    %v2181 = vmax.f32 %v2173, 0.0
    %v2182 = vmax.f32 %v2174, 0.0
    %v2183 = vmax.f32 %v2175, 0.0
    %v2184 = vmax.f32 %v2176, 0.0
    %v2185 = vmax.f32 %v2177, 0.0
    %v2186 = vmax.f32 %v2178, 0.0
    %v2187 = vmax.f32 %v2179, %v2183
    %v2188 = vmax.f32 %v2181, %v2185
    %v2189 = vmax.f32 %v2187, %v2188
    %v2190 = vrot.slane %v2189, 4
    %v2191 = vmax.f32 %v2189, %v2190
    %v2192 = vrot.slane %v2191, 2
    %v2193 = vmax.f32 %v2191, %v2192
    %v2194 = vrot.slane %v2193, 1
    %v2195 = vmax.f32 %v2193, %v2194
    %v2196 = vmax.f32 %v2180, %v2184
    %v2197 = vmax.f32 %v2182, %v2186
    %v2198 = vmax.f32 %v2196, %v2197
    %v2199 = vrot.slane %v2198, 4
    %v2200 = vmax.f32 %v2198, %v2199
    %v2201 = vrot.slane %v2200, 2
    %v2202 = vmax.f32 %v2200, %v2201
    %v2203 = vrot.slane %v2202, 1
    %v2204 = vmax.f32 %v2202, %v2203
    %v2205 = vmul.f32 %v382, %v2195
    %v2206 = vmul.f32 %v382, %v2204
    %v2207 = vmul.f32 %v387, %v2195
    %v2208 = vmul.f32 %v387, %v2204
    %v2209 = vmul.f32 %v392, %v2195
    %v2210 = vmul.f32 %v392, %v2204
    %v2211 = vmul.f32 %v397, %v2195
    %v2212 = vmul.f32 %v397, %v2204
    %2213 = vmatprep.subr.mxu0 %v2180
    %2214 = vmatpush1.msra.mxu0 %v2179
    %2215 = vmatprep.subr.mxu0 %v2182
    %2216 = vmatpush1.msra.mxu0 %v2181
    %2217 = vmatprep.subr.mxu0 %v2184
    %2218 = vmatpush1.msra.mxu0 %v2183
    %2219 = vmatprep.subr.mxu0 %v2186
    %2220 = vmatpush1.msra.mxu0 %v2185
    %2221 = vmatprep.subr.mxu0 0.0
    %2222 = vmatpush1.msra.mxu0 0.0
    %2223 = vmatprep.subr.mxu0 0.0
    %2224 = vmatpush1.msra.mxu0 0.0
    %2225 = vmatprep.subr.mxu0 0.0
    %2226 = vmatpush1.msra.mxu0 0.0
    %2227 = vmatprep.subr.mxu0 0.0
    %2228 = vmatpush1.msra.mxu0 0.0
    %2229 = vmatprep.subr.mxu0 0.0
    %2230 = vmatpush1.msra.mxu0 0.0
    %2231 = vmatprep.subr.mxu0 0.0
    %2232 = vmatpush1.msra.mxu0 0.0
    %2233 = vmatprep.subr.mxu0 0.0
    %2234 = vmatpush1.msra.mxu0 0.0
    %2235 = vmatprep.subr.mxu0 0.0
    %2236 = vmatpush1.msra.mxu0 0.0
    %2237 = vmatprep.subr.mxu0 0.0
    %2238 = vmatpush1.msra.mxu0 0.0
    %2239 = vmatprep.subr.mxu0 0.0
    %2240 = vmatpush1.msra.mxu0 0.0
    %2241 = vmatprep.subr.mxu0 0.0
    %2242 = vmatpush1.msra.mxu0 0.0
    %2243 = vmatprep.subr.mxu0 0.0
    %2244 = vmatpush1.msra.mxu0 0.0
    %2245 = vmatprep.subr.mxu0 0.0
    %2246 = vmatpush1.msra.mxu0 0.0
    %2247 = vmatprep.subr.mxu0 0.0
    %2248 = vmatpush1.msra.mxu0 0.0
    %2249 = vmatprep.subr.mxu0 0.0
    %2250 = vmatpush1.msra.mxu0 0.0
    %2251 = vmatprep.subr.mxu0 0.0
    %2252 = vmatpush1.msra.mxu0 0.0
    %2253 = vmatprep.subr.mxu0 0.0
    %2254 = vmatpush1.msra.mxu0 0.0
    %2255 = vmatprep.subr.mxu0 0.0
    %2256 = vmatpush1.msra.mxu0 0.0
    %2257 = vmatprep.subr.mxu0 0.0
    %2258 = vmatpush1.msra.mxu0 0.0
    %2259 = vmatprep.subr.mxu0 0.0
    %2260 = vmatpush1.msra.mxu0 0.0
    %2261 = vmatprep.subr.mxu0 0.0
    %2262 = vmatpush1.msra.mxu0 0.0
    %2263 = vmatprep.subr.mxu0 0.0
    %2264 = vmatpush1.msra.mxu0 0.0
    %2265 = vmatprep.subr.mxu0 0.0
    %2266 = vmatpush1.msra.mxu0 0.0
    %2267 = vmatprep.subr.mxu0 0.0
    %2268 = vmatpush1.msra.mxu0 0.0
    %2269 = vmatprep.subr.mxu0 0.0
    %2270 = vmatpush1.msra.mxu0 0.0
    %2271 = vmatprep.subr.mxu0 0.0
    %2272 = vmatpush1.msra.mxu0 0.0
    %2273 = vmatprep.subr.mxu0 0.0
    %2274 = vmatpush1.msra.mxu0 0.0
    %2275 = vmatprep.subr.mxu0 0.0
    %2276 = vmatpush1.msra.mxu0 0.0
    %2277 = vmatprep.mubr.f32.mxu0 0.0
    %2278 = vmatmul.mubr.f32.gmra.mrb[0].mxu0 %v408
    %v2279 = vpop.f32.mrb[0].mxu0
    %v2280 = vadd.f32 %v2205, %v2279
    %v2281 = vpop.f32.mrb[0].mxu0
    %v2282 = vadd.f32 %v2206, %v2281
    %2283 = vmatprep.mubr.f32.mxu0 0.0
    %2284 = vmatmul.mubr.f32.gmra.mrb[0].mxu0 %v411
    %v2285 = vpop.f32.mrb[0].mxu0
    %v2286 = vadd.f32 %v2207, %v2285
    %v2287 = vpop.f32.mrb[0].mxu0
    %v2288 = vadd.f32 %v2208, %v2287
    %2289 = vmatprep.mubr.f32.mxu0 0.0
    %2290 = vmatmul.mubr.f32.gmra.mrb[0].mxu0 %v414
    %v2291 = vpop.f32.mrb[0].mxu0
    %v2292 = vadd.f32 %v2209, %v2291
    %v2293 = vpop.f32.mrb[0].mxu0
    %v2294 = vadd.f32 %v2210, %v2293
    %2295 = vmatprep.mubr.f32.mxu0 0.0
    %2296 = vmatmul.mubr.f32.gmra.mrb[0].mxu0 %v417
    %v2297 = vpop.f32.mrb[0].mxu0
    %v2298 = vadd.f32 %v2211, %v2297
    %v2299 = vpop.f32.mrb[0].mxu0
    %v2300 = vadd.f32 %v2212, %v2299
    %2301 = vdwg.mxu0
    %v2302 = vadd.f32 %v2280, %v2282
    %v2303 = vadd.f32 %v2302, %v2286
    %v2304 = vadd.f32 %v2303, %v2288
    %v2305 = vadd.f32 %v2304, %v2292
    %v2306 = vadd.f32 %v2305, %v2294
    %v2307 = vadd.f32 %v2306, %v2298
    %v2308 = vadd.f32 %v2307, %v2300
    %2309 = vadd.xlane.f32.xlu0 %v2308
    %v2310 = vpop.xlane.xlu0 %2309
    %v2311 = vrot.slane %v2310, 4
    %v2312 = vadd.f32 %v2310, %v2311
    %v2313 = vrot.slane %v2312, 2
    %v2314 = vadd.f32 %v2312, %v2313
    %v2315 = vrot.slane %v2314, 1
    %v2316 = vadd.f32 %v2314, %v2315
    %s2317 = vtos %v2316
    %v2318 = vmul.f32 %v2280, %v2280
    %v2319 = vmul.f32 %v2282, %v2282
    %v2320 = vmul.f32 %v2286, %v2286
    %v2321 = vmul.f32 %v2288, %v2288
    %v2322 = vmul.f32 %v2292, %v2292
    %v2323 = vmul.f32 %v2294, %v2294
    %v2324 = vmul.f32 %v2298, %v2298
    %v2325 = vmul.f32 %v2300, %v2300
    %v2326 = vadd.f32 %v2318, %v2319
    %v2327 = vadd.f32 %v2326, %v2320
    %v2328 = vadd.f32 %v2327, %v2321
    %v2329 = vadd.f32 %v2328, %v2322
    %v2330 = vadd.f32 %v2329, %v2323
    %v2331 = vadd.f32 %v2330, %v2324
    %v2332 = vadd.f32 %v2331, %v2325
    %2333 = vadd.xlane.f32.xlu0 %v2332
    %v2334 = vpop.xlane.xlu0 %2333
    %v2335 = vrot.slane %v2334, 4
    %v2336 = vadd.f32 %v2334, %v2335
    %v2337 = vrot.slane %v2336, 2
    %v2338 = vadd.f32 %v2336, %v2337
    %v2339 = vrot.slane %v2338, 1
    %v2340 = vadd.f32 %v2338, %v2339
    %s2341 = vtos %v2340
    %s2342 = smul.f32 %s2317, 0.00015625
    %s2343 = smul.f32 %s2341, 0.00015625
    %s2344 = smul.f32 %s2342, %s2342
    %s2345 = ssub.f32 %s2343, %s2344
    %s2346 = smax.f32 %s2345, 0.0
    %s2347 = sadd.f32 %s2346, 1e-05
    %v2348 = vstv %s2347
    %v2349 = vrsqrt.pop %v2348
    %s2350 = vtos %v2349
    %v2351 = vstv %s2350
    %v2352 = vmul.f32 %v39, %v2351
    %v2353 = vmul.f32 %v40, %v2351
    %v2354 = vmul.f32 %v41, %v2351
    %v2355 = vmul.f32 %v42, %v2351
    %v2356 = vstv %s2342
    %v2357 = vmul.f32 %v2352, %v2356
    %v2358 = vmul.f32 %v2353, %v2356
    %v2359 = vmul.f32 %v2354, %v2356
    %v2360 = vmul.f32 %v2355, %v2356
    %v2361 = vsub.f32 %v44, %v2357
    %v2362 = vsub.f32 %v45, %v2358
    %v2363 = vsub.f32 %v46, %v2359
    %v2364 = vsub.f32 %v47, %v2360
    %2366 = vset.pattern.permute.xlu0 0
    %2367 = vperm.xlu0 %2366, %v2352
    %v2368 = vpop.permute.xlu0 %2367
    %2371 = vset.pattern.permute.xlu0 0
    %2372 = vperm.xlu0 %2371, %v2353
    %v2373 = vpop.permute.xlu0 %2372
    %2376 = vset.pattern.permute.xlu0 0
    %2377 = vperm.xlu0 %2376, %v2354
    %v2378 = vpop.permute.xlu0 %2377
    %2381 = vset.pattern.permute.xlu0 0
    %2382 = vperm.xlu0 %2381, %v2355
    %v2383 = vpop.permute.xlu0 %2382
    %v2385 = vmul.f32 %v2368, %v2280
    %v2386 = vmul.f32 %v2368, %v2282
    %v2387 = vmul.f32 %v2373, %v2286
    %v2388 = vmul.f32 %v2373, %v2288
    %v2389 = vmul.f32 %v2378, %v2292
    %v2390 = vmul.f32 %v2378, %v2294
    %v2391 = vmul.f32 %v2383, %v2298
    %v2392 = vmul.f32 %v2383, %v2300
    %2394 = vset.pattern.permute.xlu0 0
    %2395 = vperm.xlu0 %2394, %v2361
    %v2396 = vpop.permute.xlu0 %2395
    %2399 = vset.pattern.permute.xlu0 0
    %2400 = vperm.xlu0 %2399, %v2362
    %v2401 = vpop.permute.xlu0 %2400
    %2404 = vset.pattern.permute.xlu0 0
    %2405 = vperm.xlu0 %2404, %v2363
    %v2406 = vpop.permute.xlu0 %2405
    %2409 = vset.pattern.permute.xlu0 0
    %2410 = vperm.xlu0 %2409, %v2364
    %v2411 = vpop.permute.xlu0 %2410
    %v2413 = vadd.f32 %v2385, %v2396
    %v2414 = vadd.f32 %v2386, %v2396
    %v2415 = vadd.f32 %v2387, %v2401
    %v2416 = vadd.f32 %v2388, %v2401
    %v2417 = vadd.f32 %v2389, %v2406
    %v2418 = vadd.f32 %v2390, %v2406
    %v2419 = vadd.f32 %v2391, %v2411
    %v2420 = vadd.f32 %v2392, %v2411
    %v2421 = vmul.f32 %v2413, %v113
    %v2422 = vmul.f32 %v2414, %v114
    %v2423 = vmul.f32 %v2415, %v113
    %v2424 = vmul.f32 %v2416, %v114
    %v2425 = vmul.f32 %v2417, %v113
    %v2426 = vmul.f32 %v2418, %v114
    %v2427 = vmul.f32 %v2419, %v113
    %v2428 = vmul.f32 %v2420, %v114
    %v2429 = vmax.f32 %v2421, 0.0
    %v2430 = vmax.f32 %v2422, 0.0
    %v2431 = vmax.f32 %v2423, 0.0
    %v2432 = vmax.f32 %v2424, 0.0
    %v2433 = vmax.f32 %v2425, 0.0
    %v2434 = vmax.f32 %v2426, 0.0
    %v2435 = vmax.f32 %v2427, 0.0
    %v2436 = vmax.f32 %v2428, 0.0
    %2437 = vmatprep.subr.mxu0 %v2430
    %2438 = vmatpush1.msra.mxu0 %v2429
    %2439 = vmatprep.subr.mxu0 %v2432
    %2440 = vmatpush1.msra.mxu0 %v2431
    %2441 = vmatprep.subr.mxu0 %v2434
    %2442 = vmatpush1.msra.mxu0 %v2433
    %2443 = vmatprep.subr.mxu0 %v2436
    %2444 = vmatpush1.msra.mxu0 %v2435
    %2445 = vmatprep.subr.mxu0 0.0
    %2446 = vmatpush1.msra.mxu0 0.0
    %2447 = vmatprep.subr.mxu0 0.0
    %2448 = vmatpush1.msra.mxu0 0.0
    %2449 = vmatprep.subr.mxu0 0.0
    %2450 = vmatpush1.msra.mxu0 0.0
    %2451 = vmatprep.subr.mxu0 0.0
    %2452 = vmatpush1.msra.mxu0 0.0
    %2453 = vmatprep.subr.mxu0 0.0
    %2454 = vmatpush1.msra.mxu0 0.0
    %2455 = vmatprep.subr.mxu0 0.0
    %2456 = vmatpush1.msra.mxu0 0.0
    %2457 = vmatprep.subr.mxu0 0.0
    %2458 = vmatpush1.msra.mxu0 0.0
    %2459 = vmatprep.subr.mxu0 0.0
    %2460 = vmatpush1.msra.mxu0 0.0
    %2461 = vmatprep.subr.mxu0 0.0
    %2462 = vmatpush1.msra.mxu0 0.0
    %2463 = vmatprep.subr.mxu0 0.0
    %2464 = vmatpush1.msra.mxu0 0.0
    %2465 = vmatprep.subr.mxu0 0.0
    %2466 = vmatpush1.msra.mxu0 0.0
    %2467 = vmatprep.subr.mxu0 0.0
    %2468 = vmatpush1.msra.mxu0 0.0
    %2469 = vmatprep.subr.mxu0 0.0
    %2470 = vmatpush1.msra.mxu0 0.0
    %2471 = vmatprep.subr.mxu0 0.0
    %2472 = vmatpush1.msra.mxu0 0.0
    %2473 = vmatprep.subr.mxu0 0.0
    %2474 = vmatpush1.msra.mxu0 0.0
    %2475 = vmatprep.subr.mxu0 0.0
    %2476 = vmatpush1.msra.mxu0 0.0
    %2477 = vmatprep.subr.mxu0 0.0
    %2478 = vmatpush1.msra.mxu0 0.0
    %2479 = vmatprep.subr.mxu0 0.0
    %2480 = vmatpush1.msra.mxu0 0.0
    %2481 = vmatprep.subr.mxu0 0.0
    %2482 = vmatpush1.msra.mxu0 0.0
    %2483 = vmatprep.subr.mxu0 0.0
    %2484 = vmatpush1.msra.mxu0 0.0
    %2485 = vmatprep.subr.mxu0 0.0
    %2486 = vmatpush1.msra.mxu0 0.0
    %2487 = vmatprep.subr.mxu0 0.0
    %2488 = vmatpush1.msra.mxu0 0.0
    %2489 = vmatprep.subr.mxu0 0.0
    %2490 = vmatpush1.msra.mxu0 0.0
    %2491 = vmatprep.subr.mxu0 0.0
    %2492 = vmatpush1.msra.mxu0 0.0
    %2493 = vmatprep.subr.mxu0 0.0
    %2494 = vmatpush1.msra.mxu0 0.0
    %2495 = vmatprep.subr.mxu0 0.0
    %2496 = vmatpush1.msra.mxu0 0.0
    %2497 = vmatprep.subr.mxu0 0.0
    %2498 = vmatpush1.msra.mxu0 0.0
    %2499 = vmatprep.subr.mxu0 0.0
    %2500 = vmatpush1.msra.mxu0 0.0
    %2501 = vmatprep.mubr.f32.mxu0 0.0
    %2502 = vmatmul.mubr.f32.gmra.mrb[0].mxu0 %v644
    %v2503 = vpop.f32.mrb[0].mxu0
    %v2504 = vadd.f32 0.0, %v2503
    %v2505 = vpop.f32.mrb[0].mxu0
    %v2506 = vadd.f32 0.0, %v2505
    %2507 = vmatprep.mubr.f32.mxu0 0.0
    %2508 = vmatmul.mubr.f32.gmra.mrb[0].mxu0 %v647
    %v2509 = vpop.f32.mrb[0].mxu0
    %v2510 = vadd.f32 0.0, %v2509
    %v2511 = vpop.f32.mrb[0].mxu0
    %v2512 = vadd.f32 0.0, %v2511
    %2513 = vmatprep.mubr.f32.mxu0 0.0
    %2514 = vmatmul.mubr.f32.gmra.mrb[0].mxu0 %v650
    %v2515 = vpop.f32.mrb[0].mxu0
    %v2516 = vadd.f32 0.0, %v2515
    %v2517 = vpop.f32.mrb[0].mxu0
    %v2518 = vadd.f32 0.0, %v2517
    %2519 = vmatprep.mubr.f32.mxu0 0.0
    %2520 = vmatmul.mubr.f32.gmra.mrb[0].mxu0 %v653
    %v2521 = vpop.f32.mrb[0].mxu0
    %v2522 = vadd.f32 0.0, %v2521
    %v2523 = vpop.f32.mrb[0].mxu0
    %v2524 = vadd.f32 0.0, %v2523
    %2525 = vdwg.mxu0
    %v2526 = vadd.f32 %v2504, %v2506
    %v2527 = vadd.f32 %v2526, %v2510
    %v2528 = vadd.f32 %v2527, %v2512
    %v2529 = vadd.f32 %v2528, %v2516
    %v2530 = vadd.f32 %v2529, %v2518
    %v2531 = vadd.f32 %v2530, %v2522
    %v2532 = vadd.f32 %v2531, %v2524
    %2533 = vadd.xlane.f32.xlu0 %v2532
    %v2534 = vpop.xlane.xlu0 %2533
    %v2535 = vrot.slane %v2534, 4
    %v2536 = vadd.f32 %v2534, %v2535
    %v2537 = vrot.slane %v2536, 2
    %v2538 = vadd.f32 %v2536, %v2537
    %v2539 = vrot.slane %v2538, 1
    %v2540 = vadd.f32 %v2538, %v2539
    %s2541 = vtos %v2540
    %v2542 = vmul.f32 %v2504, %v2504
    %v2543 = vmul.f32 %v2506, %v2506
    %v2544 = vmul.f32 %v2510, %v2510
    %v2545 = vmul.f32 %v2512, %v2512
    %v2546 = vmul.f32 %v2516, %v2516
    %v2547 = vmul.f32 %v2518, %v2518
    %v2548 = vmul.f32 %v2522, %v2522
    %v2549 = vmul.f32 %v2524, %v2524
    %v2550 = vadd.f32 %v2542, %v2543
    %v2551 = vadd.f32 %v2550, %v2544
    %v2552 = vadd.f32 %v2551, %v2545
    %v2553 = vadd.f32 %v2552, %v2546
    %v2554 = vadd.f32 %v2553, %v2547
    %v2555 = vadd.f32 %v2554, %v2548
    %v2556 = vadd.f32 %v2555, %v2549
    %2557 = vadd.xlane.f32.xlu0 %v2556
    %v2558 = vpop.xlane.xlu0 %2557
    %v2559 = vrot.slane %v2558, 4
    %v2560 = vadd.f32 %v2558, %v2559
    %v2561 = vrot.slane %v2560, 2
    %v2562 = vadd.f32 %v2560, %v2561
    %v2563 = vrot.slane %v2562, 1
    %v2564 = vadd.f32 %v2562, %v2563
    %s2565 = vtos %v2564
    %s2566 = smul.f32 %s2541, 0.00015625
    %s2567 = smul.f32 %s2565, 0.00015625
    %s2568 = smul.f32 %s2566, %s2566
    %s2569 = ssub.f32 %s2567, %s2568
    %s2570 = smax.f32 %s2569, 0.0
    %s2571 = sadd.f32 %s2570, 1e-05
    %v2572 = vstv %s2571
    %v2573 = vrsqrt.pop %v2572
    %s2574 = vtos %v2573
    %v2575 = vstv %s2574
    %v2576 = vmul.f32 %v54, %v2575
    %v2577 = vmul.f32 %v55, %v2575
    %v2578 = vmul.f32 %v56, %v2575
    %v2579 = vmul.f32 %v57, %v2575
    %v2580 = vstv %s2566
    %v2581 = vmul.f32 %v2576, %v2580
    %v2582 = vmul.f32 %v2577, %v2580
    %v2583 = vmul.f32 %v2578, %v2580
    %v2584 = vmul.f32 %v2579, %v2580
    %v2585 = vsub.f32 %v59, %v2581
    %v2586 = vsub.f32 %v60, %v2582
    %v2587 = vsub.f32 %v61, %v2583
    %v2588 = vsub.f32 %v62, %v2584
    %2590 = vset.pattern.permute.xlu0 0
    %2591 = vperm.xlu0 %2590, %v2576
    %v2592 = vpop.permute.xlu0 %2591
    %2595 = vset.pattern.permute.xlu0 0
    %2596 = vperm.xlu0 %2595, %v2577
    %v2597 = vpop.permute.xlu0 %2596
    %2600 = vset.pattern.permute.xlu0 0
    %2601 = vperm.xlu0 %2600, %v2578
    %v2602 = vpop.permute.xlu0 %2601
    %2605 = vset.pattern.permute.xlu0 0
    %2606 = vperm.xlu0 %2605, %v2579
    %v2607 = vpop.permute.xlu0 %2606
    %v2609 = vmul.f32 %v2592, %v2504
    %v2610 = vmul.f32 %v2592, %v2506
    %v2611 = vmul.f32 %v2597, %v2510
    %v2612 = vmul.f32 %v2597, %v2512
    %v2613 = vmul.f32 %v2602, %v2516
    %v2614 = vmul.f32 %v2602, %v2518
    %v2615 = vmul.f32 %v2607, %v2522
    %v2616 = vmul.f32 %v2607, %v2524
    %2618 = vset.pattern.permute.xlu0 0
    %2619 = vperm.xlu0 %2618, %v2585
    %v2620 = vpop.permute.xlu0 %2619
    %2623 = vset.pattern.permute.xlu0 0
    %2624 = vperm.xlu0 %2623, %v2586
    %v2625 = vpop.permute.xlu0 %2624
    %2628 = vset.pattern.permute.xlu0 0
    %2629 = vperm.xlu0 %2628, %v2587
    %v2630 = vpop.permute.xlu0 %2629
    %2633 = vset.pattern.permute.xlu0 0
    %2634 = vperm.xlu0 %2633, %v2588
    %v2635 = vpop.permute.xlu0 %2634
    %v2637 = vadd.f32 %v2609, %v2620
    %v2638 = vadd.f32 %v2610, %v2620
    %v2639 = vadd.f32 %v2611, %v2625
    %v2640 = vadd.f32 %v2612, %v2625
    %v2641 = vadd.f32 %v2613, %v2630
    %v2642 = vadd.f32 %v2614, %v2630
    %v2643 = vadd.f32 %v2615, %v2635
    %v2644 = vadd.f32 %v2616, %v2635
    %v2645 = vmul.f32 %v2637, %v113
    %v2646 = vmul.f32 %v2638, %v114
    %v2647 = vmul.f32 %v2639, %v113
    %v2648 = vmul.f32 %v2640, %v114
    %v2649 = vmul.f32 %v2641, %v113
    %v2650 = vmul.f32 %v2642, %v114
    %v2651 = vmul.f32 %v2643, %v113
    %v2652 = vmul.f32 %v2644, %v114
    %v2653 = vadd.f32 %v2645, %v1953
    %v2654 = vadd.f32 %v2646, %v1954
    %v2655 = vadd.f32 %v2647, %v1955
    %v2656 = vadd.f32 %v2648, %v1956
    %v2657 = vadd.f32 %v2649, %v1957
    %v2658 = vadd.f32 %v2650, %v1958
    %v2659 = vadd.f32 %v2651, %v1959
    %v2660 = vadd.f32 %v2652, %v1960
    %v2661 = vmax.f32 %v2653, 0.0
    %v2662 = vmax.f32 %v2654, 0.0
    %v2663 = vmax.f32 %v2655, 0.0
    %v2664 = vmax.f32 %v2656, 0.0
    %v2665 = vmax.f32 %v2657, 0.0
    %v2666 = vmax.f32 %v2658, 0.0
    %v2667 = vmax.f32 %v2659, 0.0
    %v2668 = vmax.f32 %v2660, 0.0
    %2669 = vmatprep.subr.mxu0 %v2662
    %2670 = vmatpush1.msra.mxu0 %v2661
    %2671 = vmatprep.subr.mxu0 %v2664
    %2672 = vmatpush1.msra.mxu0 %v2663
    %2673 = vmatprep.subr.mxu0 %v2666
    %2674 = vmatpush1.msra.mxu0 %v2665
    %2675 = vmatprep.subr.mxu0 %v2668
    %2676 = vmatpush1.msra.mxu0 %v2667
    %2677 = vmatprep.subr.mxu0 0.0
    %2678 = vmatpush1.msra.mxu0 0.0
    %2679 = vmatprep.subr.mxu0 0.0
    %2680 = vmatpush1.msra.mxu0 0.0
    %2681 = vmatprep.subr.mxu0 0.0
    %2682 = vmatpush1.msra.mxu0 0.0
    %2683 = vmatprep.subr.mxu0 0.0
    %2684 = vmatpush1.msra.mxu0 0.0
    %2685 = vmatprep.subr.mxu0 0.0
    %2686 = vmatpush1.msra.mxu0 0.0
    %2687 = vmatprep.subr.mxu0 0.0
    %2688 = vmatpush1.msra.mxu0 0.0
    %2689 = vmatprep.subr.mxu0 0.0
    %2690 = vmatpush1.msra.mxu0 0.0
    %2691 = vmatprep.subr.mxu0 0.0
    %2692 = vmatpush1.msra.mxu0 0.0
    %2693 = vmatprep.subr.mxu0 0.0
    %2694 = vmatpush1.msra.mxu0 0.0
    %2695 = vmatprep.subr.mxu0 0.0
    %2696 = vmatpush1.msra.mxu0 0.0
    %2697 = vmatprep.subr.mxu0 0.0
    %2698 = vmatpush1.msra.mxu0 0.0
    %2699 = vmatprep.subr.mxu0 0.0
    %2700 = vmatpush1.msra.mxu0 0.0
    %2701 = vmatprep.subr.mxu0 0.0
    %2702 = vmatpush1.msra.mxu0 0.0
    %2703 = vmatprep.subr.mxu0 0.0
    %2704 = vmatpush1.msra.mxu0 0.0
    %2705 = vmatprep.subr.mxu0 0.0
    %2706 = vmatpush1.msra.mxu0 0.0
    %2707 = vmatprep.subr.mxu0 0.0
    %2708 = vmatpush1.msra.mxu0 0.0
    %2709 = vmatprep.subr.mxu0 0.0
    %2710 = vmatpush1.msra.mxu0 0.0
    %2711 = vmatprep.subr.mxu0 0.0
    %2712 = vmatpush1.msra.mxu0 0.0
    %2713 = vmatprep.subr.mxu0 0.0
    %2714 = vmatpush1.msra.mxu0 0.0
    %2715 = vmatprep.subr.mxu0 0.0
    %2716 = vmatpush1.msra.mxu0 0.0
    %2717 = vmatprep.subr.mxu0 0.0
    %2718 = vmatpush1.msra.mxu0 0.0
    %2719 = vmatprep.subr.mxu0 0.0
    %2720 = vmatpush1.msra.mxu0 0.0
    %2721 = vmatprep.subr.mxu0 0.0
    %2722 = vmatpush1.msra.mxu0 0.0
    %2723 = vmatprep.subr.mxu0 0.0
    %2724 = vmatpush1.msra.mxu0 0.0
    %2725 = vmatprep.subr.mxu0 0.0
    %2726 = vmatpush1.msra.mxu0 0.0
    %2727 = vmatprep.subr.mxu0 0.0
    %2728 = vmatpush1.msra.mxu0 0.0
    %2729 = vmatprep.subr.mxu0 0.0
    %2730 = vmatpush1.msra.mxu0 0.0
    %2731 = vmatprep.subr.mxu0 0.0
    %2732 = vmatpush1.msra.mxu0 0.0
    %2733 = vmatprep.mubr.f32.mxu0 0.0
    %2734 = vmatmul.mubr.f32.gmra.mrb[0].mxu0 %v888
    %v2735 = vpop.f32.mrb[0].mxu0
    %v2736 = vadd.f32 0.0, %v2735
    %v2737 = vpop.f32.mrb[0].mxu0
    %v2738 = vadd.f32 0.0, %v2737
    %2739 = vdwg.mxu0
    %v2740 = vadd.f32 %v2736, %v2738
    %2741 = vadd.xlane.f32.xlu0 %v2740
    %v2742 = vpop.xlane.xlu0 %2741
    %v2743 = vrot.slane %v2742, 4
    %v2744 = vadd.f32 %v2742, %v2743
    %v2745 = vrot.slane %v2744, 2
    %v2746 = vadd.f32 %v2744, %v2745
    %v2747 = vrot.slane %v2746, 1
    %v2748 = vadd.f32 %v2746, %v2747
    %s2749 = vtos %v2748
    %v2750 = vmul.f32 %v2736, %v2736
    %v2751 = vmul.f32 %v2738, %v2738
    %v2752 = vadd.f32 %v2750, %v2751
    %2753 = vadd.xlane.f32.xlu0 %v2752
    %v2754 = vpop.xlane.xlu0 %2753
    %v2755 = vrot.slane %v2754, 4
    %v2756 = vadd.f32 %v2754, %v2755
    %v2757 = vrot.slane %v2756, 2
    %v2758 = vadd.f32 %v2756, %v2757
    %v2759 = vrot.slane %v2758, 1
    %v2760 = vadd.f32 %v2758, %v2759
    %s2761 = vtos %v2760
    %s2762 = smul.f32 %s2749, 0.000625
    %s2763 = smul.f32 %s2761, 0.000625
    %s2764 = smul.f32 %s2762, %s2762
    %s2765 = ssub.f32 %s2763, %s2764
    %s2766 = smax.f32 %s2765, 0.0
    %s2767 = sadd.f32 %s2766, 1e-05
    %v2768 = vstv %s2767
    %v2769 = vrsqrt.pop %v2768
    %s2770 = vtos %v2769
    %v2771 = vstv %s2770
    %v2772 = vmul.f32 %v66, %v2771
    %v2773 = vstv %s2762
    %v2774 = vmul.f32 %v2772, %v2773
    %v2775 = vsub.f32 %v68, %v2774
    %2777 = vset.pattern.permute.xlu0 0
    %2778 = vperm.xlu0 %2777, %v2772
    %v2779 = vpop.permute.xlu0 %2778
    %v2781 = vmul.f32 %v2779, %v2736
    %v2782 = vmul.f32 %v2779, %v2738
    %2784 = vset.pattern.permute.xlu0 0
    %2785 = vperm.xlu0 %2784, %v2775
    %v2786 = vpop.permute.xlu0 %2785
    %v2788 = vadd.f32 %v2781, %v2786
    %v2789 = vadd.f32 %v2782, %v2786
    %v2790 = vmul.f32 %v2788, %v113
    %v2791 = vmul.f32 %v2789, %v114
    %v2792 = vmax.f32 %v2790, 0.0
    %v2793 = vmax.f32 %v2791, 0.0
    %v2794 = vlaneseq
    %v2795 = vshrl.u32 %v2794, 7
    %v2796 = vsub.s32 0, %v2795
    %v2797 = vrot.slane %v2792, %v2796
    %v2798 = vlaneseq
    %v2799 = vshrl.u32 %v2798, 7
    %v2800 = vsub.s32 0, %v2799
    %v2801 = vrot.slane %v2793, %v2800
    %v2802 = vmul.f32 %v1018, %v2797
    %v2803 = vmul.f32 %v1018, %v2801
    %v2804 = vlaneseq
    %v2805 = vshrl.u32 %v2804, 7
    %v2806 = vsub.s32 1, %v2805
    %v2807 = vrot.slane %v2792, %v2806
    %v2808 = vlaneseq
    %v2809 = vshrl.u32 %v2808, 7
    %v2810 = vsub.s32 1, %v2809
    %v2811 = vrot.slane %v2793, %v2810
    %v2812 = vmul.f32 %v1032, %v2807
    %v2813 = vmul.f32 %v1032, %v2811
    %v2814 = vadd.f32 %v2802, %v2812
    %v2815 = vadd.f32 %v2803, %v2813
    %v2816 = vlaneseq
    %v2817 = vshrl.u32 %v2816, 7
    %v2818 = vsub.s32 2, %v2817
    %v2819 = vrot.slane %v2792, %v2818
    %v2820 = vlaneseq
    %v2821 = vshrl.u32 %v2820, 7
    %v2822 = vsub.s32 2, %v2821
    %v2823 = vrot.slane %v2793, %v2822
    %v2824 = vmul.f32 %v1048, %v2819
    %v2825 = vmul.f32 %v1048, %v2823
    %v2826 = vadd.f32 %v2814, %v2824
    %v2827 = vadd.f32 %v2815, %v2825
    %v2828 = vlaneseq
    %v2829 = vshrl.u32 %v2828, 7
    %v2830 = vsub.s32 3, %v2829
    %v2831 = vrot.slane %v2792, %v2830
    %v2832 = vlaneseq
    %v2833 = vshrl.u32 %v2832, 7
    %v2834 = vsub.s32 3, %v2833
    %v2835 = vrot.slane %v2793, %v2834
    %v2836 = vmul.f32 %v1064, %v2831
    %v2837 = vmul.f32 %v1064, %v2835
    %v2838 = vadd.f32 %v2826, %v2836
    %v2839 = vadd.f32 %v2827, %v2837
    %v2840 = vlaneseq
    %v2841 = vshrl.u32 %v2840, 7
    %v2842 = vsub.s32 4, %v2841
    %v2843 = vrot.slane %v2792, %v2842
    %v2844 = vlaneseq
    %v2845 = vshrl.u32 %v2844, 7
    %v2846 = vsub.s32 4, %v2845
    %v2847 = vrot.slane %v2793, %v2846
    %v2848 = vmul.f32 %v1080, %v2843
    %v2849 = vmul.f32 %v1080, %v2847
    %v2850 = vadd.f32 %v2838, %v2848
    %v2851 = vadd.f32 %v2839, %v2849
    %v2852 = vlaneseq
    %v2853 = vshrl.u32 %v2852, 7
    %v2854 = vsub.s32 5, %v2853
    %v2855 = vrot.slane %v2792, %v2854
    %v2856 = vlaneseq
    %v2857 = vshrl.u32 %v2856, 7
    %v2858 = vsub.s32 5, %v2857
    %v2859 = vrot.slane %v2793, %v2858
    %v2860 = vmul.f32 %v1096, %v2855
    %v2861 = vmul.f32 %v1096, %v2859
    %v2862 = vadd.f32 %v2850, %v2860
    %v2863 = vadd.f32 %v2851, %v2861
    %v2864 = vlaneseq
    %v2865 = vshrl.u32 %v2864, 7
    %v2866 = vsub.s32 6, %v2865
    %v2867 = vrot.slane %v2792, %v2866
    %v2868 = vlaneseq
    %v2869 = vshrl.u32 %v2868, 7
    %v2870 = vsub.s32 6, %v2869
    %v2871 = vrot.slane %v2793, %v2870
    %v2872 = vmul.f32 %v1112, %v2867
    %v2873 = vmul.f32 %v1112, %v2871
    %v2874 = vadd.f32 %v2862, %v2872
    %v2875 = vadd.f32 %v2863, %v2873
    %v2876 = vlaneseq
    %v2877 = vshrl.u32 %v2876, 7
    %v2878 = vsub.s32 7, %v2877
    %v2879 = vrot.slane %v2792, %v2878
    %v2880 = vlaneseq
    %v2881 = vshrl.u32 %v2880, 7
    %v2882 = vsub.s32 7, %v2881
    %v2883 = vrot.slane %v2793, %v2882
    %v2884 = vmul.f32 %v1128, %v2879
    %v2885 = vmul.f32 %v1128, %v2883
    %v2886 = vadd.f32 %v2874, %v2884
    %v2887 = vadd.f32 %v2875, %v2885
    %v2888 = vadd.f32 %v2886, %v2887
    %2889 = vadd.xlane.f32.xlu0 %v2888
    %v2890 = vpop.xlane.xlu0 %2889
    %v2891 = vrot.slane %v2890, 4
    %v2892 = vadd.f32 %v2890, %v2891
    %v2893 = vrot.slane %v2892, 2
    %v2894 = vadd.f32 %v2892, %v2893
    %v2895 = vrot.slane %v2894, 1
    %v2896 = vadd.f32 %v2894, %v2895
    %s2897 = vtos %v2896
    %v2898 = vmul.f32 %v2886, %v2886
    %v2899 = vmul.f32 %v2887, %v2887
    %v2900 = vadd.f32 %v2898, %v2899
    %2901 = vadd.xlane.f32.xlu0 %v2900
    %v2902 = vpop.xlane.xlu0 %2901
    %v2903 = vrot.slane %v2902, 4
    %v2904 = vadd.f32 %v2902, %v2903
    %v2905 = vrot.slane %v2904, 2
    %v2906 = vadd.f32 %v2904, %v2905
    %v2907 = vrot.slane %v2906, 1
    %v2908 = vadd.f32 %v2906, %v2907
    %s2909 = vtos %v2908
    %s2910 = smul.f32 %s2897, 0.000625
    %s2911 = smul.f32 %s2909, 0.000625
    %s2912 = smul.f32 %s2910, %s2910
    %s2913 = ssub.f32 %s2911, %s2912
    %s2914 = smax.f32 %s2913, 0.0
    %s2915 = sadd.f32 %s2914, 1e-05
    %v2916 = vstv %s2915
    %v2917 = vrsqrt.pop %v2916
    %s2918 = vtos %v2917
    %v2919 = vstv %s2918
    %v2920 = vmul.f32 %v72, %v2919
    %v2921 = vstv %s2910
    %v2922 = vmul.f32 %v2920, %v2921
    %v2923 = vsub.f32 %v74, %v2922
    %2925 = vset.pattern.permute.xlu0 0
    %2926 = vperm.xlu0 %2925, %v2920
    %v2927 = vpop.permute.xlu0 %2926
    %v2929 = vmul.f32 %v2927, %v2886
    %v2930 = vmul.f32 %v2927, %v2887
    %2932 = vset.pattern.permute.xlu0 0
    %2933 = vperm.xlu0 %2932, %v2923
    %v2934 = vpop.permute.xlu0 %2933
    %v2936 = vadd.f32 %v2929, %v2934
    %v2937 = vadd.f32 %v2930, %v2934
    %v2938 = vmul.f32 %v2936, %v113
    %v2939 = vmul.f32 %v2937, %v114
    %v2940 = vmax.f32 %v2938, 0.0
    %v2941 = vmax.f32 %v2939, 0.0
    %v2942 = vrot.slane %v2940, 4
    %v2943 = vmax.f32 %v2940, %v2942
    %v2944 = vrot.slane %v2943, 2
    %v2945 = vmax.f32 %v2943, %v2944
    %v2946 = vrot.slane %v2945, 1
    %v2947 = vmax.f32 %v2945, %v2946
    %v2948 = vrot.slane %v2941, 4
    %v2949 = vmax.f32 %v2941, %v2948
    %v2950 = vrot.slane %v2949, 2
    %v2951 = vmax.f32 %v2949, %v2950
    %v2952 = vrot.slane %v2951, 1
    %v2953 = vmax.f32 %v2951, %v2952
    %v2954 = vlaneseq
    %v2955 = vshrl.u32 %v2954, 7
    %v2956 = vsub.s32 0, %v2955
    %v2957 = vrot.slane %v2940, %v2956
    %v2958 = vlaneseq
    %v2959 = vshrl.u32 %v2958, 7
    %v2960 = vsub.s32 0, %v2959
    %v2961 = vrot.slane %v2941, %v2960
    %v2962 = vmul.f32 %v1211, %v2957
    %v2963 = vmul.f32 %v1211, %v2961
    %v2964 = vlaneseq
    %v2965 = vshrl.u32 %v2964, 7
    %v2966 = vsub.s32 1, %v2965
    %v2967 = vrot.slane %v2940, %v2966
    %v2968 = vlaneseq
    %v2969 = vshrl.u32 %v2968, 7
    %v2970 = vsub.s32 1, %v2969
    %v2971 = vrot.slane %v2941, %v2970
    %v2972 = vmul.f32 %v1225, %v2967
    %v2973 = vmul.f32 %v1225, %v2971
    %v2974 = vadd.f32 %v2962, %v2972
    %v2975 = vadd.f32 %v2963, %v2973
    %v2976 = vlaneseq
    %v2977 = vshrl.u32 %v2976, 7
    %v2978 = vsub.s32 2, %v2977
    %v2979 = vrot.slane %v2940, %v2978
    %v2980 = vlaneseq
    %v2981 = vshrl.u32 %v2980, 7
    %v2982 = vsub.s32 2, %v2981
    %v2983 = vrot.slane %v2941, %v2982
    %v2984 = vmul.f32 %v1241, %v2979
    %v2985 = vmul.f32 %v1241, %v2983
    %v2986 = vadd.f32 %v2974, %v2984
    %v2987 = vadd.f32 %v2975, %v2985
    %v2988 = vlaneseq
    %v2989 = vshrl.u32 %v2988, 7
    %v2990 = vsub.s32 3, %v2989
    %v2991 = vrot.slane %v2940, %v2990
    %v2992 = vlaneseq
    %v2993 = vshrl.u32 %v2992, 7
    %v2994 = vsub.s32 3, %v2993
    %v2995 = vrot.slane %v2941, %v2994
    %v2996 = vmul.f32 %v1257, %v2991
    %v2997 = vmul.f32 %v1257, %v2995
    %v2998 = vadd.f32 %v2986, %v2996
    %v2999 = vadd.f32 %v2987, %v2997
    %v3000 = vlaneseq
    %v3001 = vshrl.u32 %v3000, 7
    %v3002 = vsub.s32 4, %v3001
    %v3003 = vrot.slane %v2940, %v3002
    %v3004 = vlaneseq
    %v3005 = vshrl.u32 %v3004, 7
    %v3006 = vsub.s32 4, %v3005
    %v3007 = vrot.slane %v2941, %v3006
    %v3008 = vmul.f32 %v1273, %v3003
    %v3009 = vmul.f32 %v1273, %v3007
    %v3010 = vadd.f32 %v2998, %v3008
    %v3011 = vadd.f32 %v2999, %v3009
    %v3012 = vlaneseq
    %v3013 = vshrl.u32 %v3012, 7
    %v3014 = vsub.s32 5, %v3013
    %v3015 = vrot.slane %v2940, %v3014
    %v3016 = vlaneseq
    %v3017 = vshrl.u32 %v3016, 7
    %v3018 = vsub.s32 5, %v3017
    %v3019 = vrot.slane %v2941, %v3018
    %v3020 = vmul.f32 %v1289, %v3015
    %v3021 = vmul.f32 %v1289, %v3019
    %v3022 = vadd.f32 %v3010, %v3020
    %v3023 = vadd.f32 %v3011, %v3021
    %v3024 = vlaneseq
    %v3025 = vshrl.u32 %v3024, 7
    %v3026 = vsub.s32 6, %v3025
    %v3027 = vrot.slane %v2940, %v3026
    %v3028 = vlaneseq
    %v3029 = vshrl.u32 %v3028, 7
    %v3030 = vsub.s32 6, %v3029
    %v3031 = vrot.slane %v2941, %v3030
    %v3032 = vmul.f32 %v1305, %v3027
    %v3033 = vmul.f32 %v1305, %v3031
    %v3034 = vadd.f32 %v3022, %v3032
    %v3035 = vadd.f32 %v3023, %v3033
    %v3036 = vlaneseq
    %v3037 = vshrl.u32 %v3036, 7
    %v3038 = vsub.s32 7, %v3037
    %v3039 = vrot.slane %v2940, %v3038
    %v3040 = vlaneseq
    %v3041 = vshrl.u32 %v3040, 7
    %v3042 = vsub.s32 7, %v3041
    %v3043 = vrot.slane %v2941, %v3042
    %v3044 = vmul.f32 %v1321, %v3039
    %v3045 = vmul.f32 %v1321, %v3043
    %v3046 = vadd.f32 %v3034, %v3044
    %v3047 = vadd.f32 %v3035, %v3045
    %v3048 = vmul.f32 %v1338, %v2947
    %v3049 = vmul.f32 %v1338, %v2953
    %v3050 = vadd.f32 %v3046, %v3048
    %v3051 = vadd.f32 %v3047, %v3049
    %v3052 = vadd.f32 %v3050, %v3051
    %3053 = vadd.xlane.f32.xlu0 %v3052
    %v3054 = vpop.xlane.xlu0 %3053
    %v3055 = vrot.slane %v3054, 4
    %v3056 = vadd.f32 %v3054, %v3055
    %v3057 = vrot.slane %v3056, 2
    %v3058 = vadd.f32 %v3056, %v3057
    %v3059 = vrot.slane %v3058, 1
    %v3060 = vadd.f32 %v3058, %v3059
    %s3061 = vtos %v3060
    %v3062 = vmul.f32 %v3050, %v3050
    %v3063 = vmul.f32 %v3051, %v3051
    %v3064 = vadd.f32 %v3062, %v3063
    %3065 = vadd.xlane.f32.xlu0 %v3064
    %v3066 = vpop.xlane.xlu0 %3065
    %v3067 = vrot.slane %v3066, 4
    %v3068 = vadd.f32 %v3066, %v3067
    %v3069 = vrot.slane %v3068, 2
    %v3070 = vadd.f32 %v3068, %v3069
    %v3071 = vrot.slane %v3070, 1
    %v3072 = vadd.f32 %v3070, %v3071
    %s3073 = vtos %v3072
    %s3074 = smul.f32 %s3061, 0.000625
    %s3075 = smul.f32 %s3073, 0.000625
    %s3076 = smul.f32 %s3074, %s3074
    %s3077 = ssub.f32 %s3075, %s3076
    %s3078 = smax.f32 %s3077, 0.0
    %s3079 = sadd.f32 %s3078, 1e-05
    %v3080 = vstv %s3079
    %v3081 = vrsqrt.pop %v3080
    %s3082 = vtos %v3081
    %v3083 = vstv %s3082
    %v3084 = vmul.f32 %v78, %v3083
    %v3085 = vstv %s3074
    %v3086 = vmul.f32 %v3084, %v3085
    %v3087 = vsub.f32 %v80, %v3086
    %3089 = vset.pattern.permute.xlu0 0
    %3090 = vperm.xlu0 %3089, %v3084
    %v3091 = vpop.permute.xlu0 %3090
    %v3093 = vmul.f32 %v3091, %v3050
    %v3094 = vmul.f32 %v3091, %v3051
    %3096 = vset.pattern.permute.xlu0 0
    %3097 = vperm.xlu0 %3096, %v3087
    %v3098 = vpop.permute.xlu0 %3097
    %v3100 = vadd.f32 %v3093, %v3098
    %v3101 = vadd.f32 %v3094, %v3098
    %v3102 = vmul.f32 %v3100, %v113
    %v3103 = vmul.f32 %v3101, %v114
    %v3104 = vmax.f32 %v3102, 0.0
    %v3105 = vmax.f32 %v3103, 0.0
    %v3106 = vlaneseq
    %v3107 = vshrl.u32 %v3106, 7
    %v3108 = vsub.s32 0, %v3107
    %v3109 = vrot.slane %v3104, %v3108
    %v3110 = vlaneseq
    %v3111 = vshrl.u32 %v3110, 7
    %v3112 = vsub.s32 0, %v3111
    %v3113 = vrot.slane %v3105, %v3112
    %v3114 = vmul.f32 %v1401, %v3109
    %v3115 = vmul.f32 %v1401, %v3113
    %v3116 = vlaneseq
    %v3117 = vshrl.u32 %v3116, 7
    %v3118 = vsub.s32 1, %v3117
    %v3119 = vrot.slane %v3104, %v3118
    %v3120 = vlaneseq
    %v3121 = vshrl.u32 %v3120, 7
    %v3122 = vsub.s32 1, %v3121
    %v3123 = vrot.slane %v3105, %v3122
    %v3124 = vmul.f32 %v1415, %v3119
    %v3125 = vmul.f32 %v1415, %v3123
    %v3126 = vadd.f32 %v3114, %v3124
    %v3127 = vadd.f32 %v3115, %v3125
    %v3128 = vlaneseq
    %v3129 = vshrl.u32 %v3128, 7
    %v3130 = vsub.s32 2, %v3129
    %v3131 = vrot.slane %v3104, %v3130
    %v3132 = vlaneseq
    %v3133 = vshrl.u32 %v3132, 7
    %v3134 = vsub.s32 2, %v3133
    %v3135 = vrot.slane %v3105, %v3134
    %v3136 = vmul.f32 %v1431, %v3131
    %v3137 = vmul.f32 %v1431, %v3135
    %v3138 = vadd.f32 %v3126, %v3136
    %v3139 = vadd.f32 %v3127, %v3137
    %v3140 = vlaneseq
    %v3141 = vshrl.u32 %v3140, 7
    %v3142 = vsub.s32 3, %v3141
    %v3143 = vrot.slane %v3104, %v3142
    %v3144 = vlaneseq
    %v3145 = vshrl.u32 %v3144, 7
    %v3146 = vsub.s32 3, %v3145
    %v3147 = vrot.slane %v3105, %v3146
    %v3148 = vmul.f32 %v1447, %v3143
    %v3149 = vmul.f32 %v1447, %v3147
    %v3150 = vadd.f32 %v3138, %v3148
    %v3151 = vadd.f32 %v3139, %v3149
    %v3152 = vlaneseq
    %v3153 = vshrl.u32 %v3152, 7
    %v3154 = vsub.s32 4, %v3153
    %v3155 = vrot.slane %v3104, %v3154
    %v3156 = vlaneseq
    %v3157 = vshrl.u32 %v3156, 7
    %v3158 = vsub.s32 4, %v3157
    %v3159 = vrot.slane %v3105, %v3158
    %v3160 = vmul.f32 %v1463, %v3155
    %v3161 = vmul.f32 %v1463, %v3159
    %v3162 = vadd.f32 %v3150, %v3160
    %v3163 = vadd.f32 %v3151, %v3161
    %v3164 = vlaneseq
    %v3165 = vshrl.u32 %v3164, 7
    %v3166 = vsub.s32 5, %v3165
    %v3167 = vrot.slane %v3104, %v3166
    %v3168 = vlaneseq
    %v3169 = vshrl.u32 %v3168, 7
    %v3170 = vsub.s32 5, %v3169
    %v3171 = vrot.slane %v3105, %v3170
    %v3172 = vmul.f32 %v1479, %v3167
    %v3173 = vmul.f32 %v1479, %v3171
    %v3174 = vadd.f32 %v3162, %v3172
    %v3175 = vadd.f32 %v3163, %v3173
    %v3176 = vlaneseq
    %v3177 = vshrl.u32 %v3176, 7
    %v3178 = vsub.s32 6, %v3177
    %v3179 = vrot.slane %v3104, %v3178
    %v3180 = vlaneseq
    %v3181 = vshrl.u32 %v3180, 7
    %v3182 = vsub.s32 6, %v3181
    %v3183 = vrot.slane %v3105, %v3182
    %v3184 = vmul.f32 %v1495, %v3179
    %v3185 = vmul.f32 %v1495, %v3183
    %v3186 = vadd.f32 %v3174, %v3184
    %v3187 = vadd.f32 %v3175, %v3185
    %v3188 = vlaneseq
    %v3189 = vshrl.u32 %v3188, 7
    %v3190 = vsub.s32 7, %v3189
    %v3191 = vrot.slane %v3104, %v3190
    %v3192 = vlaneseq
    %v3193 = vshrl.u32 %v3192, 7
    %v3194 = vsub.s32 7, %v3193
    %v3195 = vrot.slane %v3105, %v3194
    %v3196 = vmul.f32 %v1511, %v3191
    %v3197 = vmul.f32 %v1511, %v3195
    %v3198 = vadd.f32 %v3186, %v3196
    %v3199 = vadd.f32 %v3187, %v3197
    %v3200 = vadd.f32 %v3198, %v3199
    %3201 = vadd.xlane.f32.xlu0 %v3200
    %v3202 = vpop.xlane.xlu0 %3201
    %v3203 = vrot.slane %v3202, 4
    %v3204 = vadd.f32 %v3202, %v3203
    %v3205 = vrot.slane %v3204, 2
    %v3206 = vadd.f32 %v3204, %v3205
    %v3207 = vrot.slane %v3206, 1
    %v3208 = vadd.f32 %v3206, %v3207
    %s3209 = vtos %v3208
    %v3210 = vmul.f32 %v3198, %v3198
    %v3211 = vmul.f32 %v3199, %v3199
    %v3212 = vadd.f32 %v3210, %v3211
    %3213 = vadd.xlane.f32.xlu0 %v3212
    %v3214 = vpop.xlane.xlu0 %3213
    %v3215 = vrot.slane %v3214, 4
    %v3216 = vadd.f32 %v3214, %v3215
    %v3217 = vrot.slane %v3216, 2
    %v3218 = vadd.f32 %v3216, %v3217
    %v3219 = vrot.slane %v3218, 1
    %v3220 = vadd.f32 %v3218, %v3219
    %s3221 = vtos %v3220
    %s3222 = smul.f32 %s3209, 0.000625
    %s3223 = smul.f32 %s3221, 0.000625
    %s3224 = smul.f32 %s3222, %s3222
    %s3225 = ssub.f32 %s3223, %s3224
    %s3226 = smax.f32 %s3225, 0.0
    %s3227 = sadd.f32 %s3226, 1e-05
    %v3228 = vstv %s3227
    %v3229 = vrsqrt.pop %v3228
    %s3230 = vtos %v3229
    %v3231 = vstv %s3230
    %v3232 = vmul.f32 %v84, %v3231
    %v3233 = vstv %s3222
    %v3234 = vmul.f32 %v3232, %v3233
    %v3235 = vsub.f32 %v86, %v3234
    %3237 = vset.pattern.permute.xlu0 0
    %3238 = vperm.xlu0 %3237, %v3232
    %v3239 = vpop.permute.xlu0 %3238
    %v3241 = vmul.f32 %v3239, %v3198
    %v3242 = vmul.f32 %v3239, %v3199
    %3244 = vset.pattern.permute.xlu0 0
    %3245 = vperm.xlu0 %3244, %v3235
    %v3246 = vpop.permute.xlu0 %3245
    %v3248 = vadd.f32 %v3241, %v3246
    %v3249 = vadd.f32 %v3242, %v3246
    %v3250 = vmul.f32 %v3248, %v113
    %v3251 = vmul.f32 %v3249, %v114
    %v3252 = vadd.f32 %v3250, %v2792
    %v3253 = vadd.f32 %v3251, %v2793
    %v3254 = vmax.f32 %v3252, 0.0
    %v3255 = vmax.f32 %v3253, 0.0
    %v3256 = vlaneseq
    %v3257 = vshrl.u32 %v3256, 7
    %v3258 = vsub.s32 0, %v3257
    %v3259 = vrot.slane %v3254, %v3258
    %v3260 = vlaneseq
    %v3261 = vshrl.u32 %v3260, 7
    %v3262 = vsub.s32 0, %v3261
    %v3263 = vrot.slane %v3255, %v3262
    %v3264 = vmul.f32 %v1584, %v3259
    %v3265 = vmul.f32 %v1584, %v3263
    %v3266 = vlaneseq
    %v3267 = vshrl.u32 %v3266, 7
    %v3268 = vsub.s32 1, %v3267
    %v3269 = vrot.slane %v3254, %v3268
    %v3270 = vlaneseq
    %v3271 = vshrl.u32 %v3270, 7
    %v3272 = vsub.s32 1, %v3271
    %v3273 = vrot.slane %v3255, %v3272
    %v3274 = vmul.f32 %v1598, %v3269
    %v3275 = vmul.f32 %v1598, %v3273
    %v3276 = vadd.f32 %v3264, %v3274
    %v3277 = vadd.f32 %v3265, %v3275
    %v3278 = vlaneseq
    %v3279 = vshrl.u32 %v3278, 7
    %v3280 = vsub.s32 2, %v3279
    %v3281 = vrot.slane %v3254, %v3280
    %v3282 = vlaneseq
    %v3283 = vshrl.u32 %v3282, 7
    %v3284 = vsub.s32 2, %v3283
    %v3285 = vrot.slane %v3255, %v3284
    %v3286 = vmul.f32 %v1614, %v3281
    %v3287 = vmul.f32 %v1614, %v3285
    %v3288 = vadd.f32 %v3276, %v3286
    %v3289 = vadd.f32 %v3277, %v3287
    %v3290 = vlaneseq
    %v3291 = vshrl.u32 %v3290, 7
    %v3292 = vsub.s32 3, %v3291
    %v3293 = vrot.slane %v3254, %v3292
    %v3294 = vlaneseq
    %v3295 = vshrl.u32 %v3294, 7
    %v3296 = vsub.s32 3, %v3295
    %v3297 = vrot.slane %v3255, %v3296
    %v3298 = vmul.f32 %v1630, %v3293
    %v3299 = vmul.f32 %v1630, %v3297
    %v3300 = vadd.f32 %v3288, %v3298
    %v3301 = vadd.f32 %v3289, %v3299
    %v3302 = vlaneseq
    %v3303 = vshrl.u32 %v3302, 7
    %v3304 = vsub.s32 4, %v3303
    %v3305 = vrot.slane %v3254, %v3304
    %v3306 = vlaneseq
    %v3307 = vshrl.u32 %v3306, 7
    %v3308 = vsub.s32 4, %v3307
    %v3309 = vrot.slane %v3255, %v3308
    %v3310 = vmul.f32 %v1646, %v3305
    %v3311 = vmul.f32 %v1646, %v3309
    %v3312 = vadd.f32 %v3300, %v3310
    %v3313 = vadd.f32 %v3301, %v3311
    %v3314 = vlaneseq
    %v3315 = vshrl.u32 %v3314, 7
    %v3316 = vsub.s32 5, %v3315
    %v3317 = vrot.slane %v3254, %v3316
    %v3318 = vlaneseq
    %v3319 = vshrl.u32 %v3318, 7
    %v3320 = vsub.s32 5, %v3319
    %v3321 = vrot.slane %v3255, %v3320
    %v3322 = vmul.f32 %v1662, %v3317
    %v3323 = vmul.f32 %v1662, %v3321
    %v3324 = vadd.f32 %v3312, %v3322
    %v3325 = vadd.f32 %v3313, %v3323
    %v3326 = vlaneseq
    %v3327 = vshrl.u32 %v3326, 7
    %v3328 = vsub.s32 6, %v3327
    %v3329 = vrot.slane %v3254, %v3328
    %v3330 = vlaneseq
    %v3331 = vshrl.u32 %v3330, 7
    %v3332 = vsub.s32 6, %v3331
    %v3333 = vrot.slane %v3255, %v3332
    %v3334 = vmul.f32 %v1678, %v3329
    %v3335 = vmul.f32 %v1678, %v3333
    %v3336 = vadd.f32 %v3324, %v3334
    %v3337 = vadd.f32 %v3325, %v3335
    %v3338 = vlaneseq
    %v3339 = vshrl.u32 %v3338, 7
    %v3340 = vsub.s32 7, %v3339
    %v3341 = vrot.slane %v3254, %v3340
    %v3342 = vlaneseq
    %v3343 = vshrl.u32 %v3342, 7
    %v3344 = vsub.s32 7, %v3343
    %v3345 = vrot.slane %v3255, %v3344
    %v3346 = vmul.f32 %v1694, %v3341
    %v3347 = vmul.f32 %v1694, %v3345
    %v3348 = vadd.f32 %v3336, %v3346
    %v3349 = vadd.f32 %v3337, %v3347
    %v3350 = vsel %vm1708, %v3348, 0.0
    %v3351 = vsel %vm1708, %v3349, 0.0
    %v3352 = vadd.f32 %v3350, %v3351
    %3353 = vadd.xlane.f32.xlu0 %v3352
    %v3354 = vpop.xlane.xlu0 %3353
    %v3355 = vrot.slane %v3354, 4
    %v3356 = vadd.f32 %v3354, %v3355
    %v3357 = vrot.slane %v3356, 2
    %v3358 = vadd.f32 %v3356, %v3357
    %v3359 = vrot.slane %v3358, 1
    %v3360 = vadd.f32 %v3358, %v3359
    %s3361 = vtos %v3360
    %v3362 = vmul.f32 %v3348, %v3348
    %v3363 = vmul.f32 %v3349, %v3349
    %v3364 = vsel %vm1708, %v3362, 0.0
    %v3365 = vsel %vm1708, %v3363, 0.0
    %v3366 = vadd.f32 %v3364, %v3365
    %3367 = vadd.xlane.f32.xlu0 %v3366
    %v3368 = vpop.xlane.xlu0 %3367
    %v3369 = vrot.slane %v3368, 4
    %v3370 = vadd.f32 %v3368, %v3369
    %v3371 = vrot.slane %v3370, 2
    %v3372 = vadd.f32 %v3370, %v3371
    %v3373 = vrot.slane %v3372, 1
    %v3374 = vadd.f32 %v3372, %v3373
    %s3375 = vtos %v3374
    %s3376 = smul.f32 %s3361, 0.00125
    %s3377 = smul.f32 %s3375, 0.00125
    %s3378 = smul.f32 %s3376, %s3376
    %s3379 = ssub.f32 %s3377, %s3378
    %s3380 = smax.f32 %s3379, 0.0
    %s3381 = sadd.f32 %s3380, 1e-05
    %v3382 = vstv %s3381
    %v3383 = vrsqrt.pop %v3382
    %s3384 = vtos %v3383
    %v3385 = vstv %s3384
    %v3386 = vmul.f32 %v90, %v3385
    %v3387 = vstv %s3376
    %v3388 = vmul.f32 %v3386, %v3387
    %v3389 = vsub.f32 %v92, %v3388
    %3391 = vset.pattern.permute.xlu0 0
    %3392 = vperm.xlu0 %3391, %v3386
    %v3393 = vpop.permute.xlu0 %3392
    %v3395 = vmul.f32 %v3393, %v3348
    %v3396 = vmul.f32 %v3393, %v3349
    %3398 = vset.pattern.permute.xlu0 0
    %3399 = vperm.xlu0 %3398, %v3389
    %v3400 = vpop.permute.xlu0 %3399
    %v3402 = vadd.f32 %v3395, %v3400
    %v3403 = vadd.f32 %v3396, %v3400
    %v3404 = vmul.f32 %v3402, %v113
    %v3405 = vmul.f32 %v3403, %v114
    %v3406 = vmax.f32 %v3404, 0.0
    %v3407 = vmax.f32 %v3405, 0.0
    %v3408 = vmul.f32 %v1770, %v3406
    %v3409 = vmul.f32 %v1770, %v3407
    %v3412 = vrot.slane %v3406, 1
    %v3413 = vrot.slane %v3407, 1
    %v3416 = vmul.f32 %v1776, %v3412
    %v3417 = vmul.f32 %v1776, %v3413
    %v3418 = vadd.f32 %v3408, %v3416
    %v3419 = vadd.f32 %v3409, %v3417
    %v3420 = vrot.slane %v3406, 2
    %v3421 = vrot.slane %v3407, 2
    %v3424 = vmul.f32 %v1790, %v3420
    %v3425 = vmul.f32 %v1790, %v3421
    %v3426 = vadd.f32 %v3418, %v3424
    %v3427 = vadd.f32 %v3419, %v3425
    %v3428 = vrot.slane %v3406, 3
    %v3429 = vrot.slane %v3407, 3
    %v3432 = vmul.f32 %v1802, %v3428
    %v3433 = vmul.f32 %v1802, %v3429
    %v3434 = vadd.f32 %v3426, %v3432
    %v3435 = vadd.f32 %v3427, %v3433
    %v3436 = vsel %vm1812, %v3434, 0.0
    %v3437 = vsel %vm1812, %v3435, 0.0
    %v3438 = vadd.f32 %v3436, %v3437
    %3439 = vadd.xlane.f32.xlu0 %v3438
    %v3440 = vpop.xlane.xlu0 %3439
    %v3441 = vrot.slane %v3440, 4
    %v3442 = vadd.f32 %v3440, %v3441
    %v3443 = vrot.slane %v3442, 2
    %v3444 = vadd.f32 %v3442, %v3443
    %v3445 = vrot.slane %v3444, 1
    %v3446 = vadd.f32 %v3444, %v3445
    %s3447 = vtos %v3446
    %v3448 = vmul.f32 %v3434, %v3434
    %v3449 = vmul.f32 %v3435, %v3435
    %v3450 = vsel %vm1812, %v3448, 0.0
    %v3451 = vsel %vm1812, %v3449, 0.0
    %v3452 = vadd.f32 %v3450, %v3451
    %3453 = vadd.xlane.f32.xlu0 %v3452
    %v3454 = vpop.xlane.xlu0 %3453
    %v3455 = vrot.slane %v3454, 4
    %v3456 = vadd.f32 %v3454, %v3455
    %v3457 = vrot.slane %v3456, 2
    %v3458 = vadd.f32 %v3456, %v3457
    %v3459 = vrot.slane %v3458, 1
    %v3460 = vadd.f32 %v3458, %v3459
    %s3461 = vtos %v3460
    %s3462 = smul.f32 %s3447, 0.005
    %s3463 = smul.f32 %s3461, 0.005
    %s3464 = smul.f32 %s3462, %s3462
    %s3465 = ssub.f32 %s3463, %s3464
    %s3466 = smax.f32 %s3465, 0.0
    %s3467 = sadd.f32 %s3466, 1e-05
    %v3468 = vstv %s3467
    %v3469 = vrsqrt.pop %v3468
    %s3470 = vtos %v3469
    %v3471 = vstv %s3470
    %v3472 = vmul.f32 %v96, %v3471
    %v3473 = vstv %s3462
    %v3474 = vmul.f32 %v3472, %v3473
    %v3475 = vsub.f32 %v98, %v3474
    %3477 = vset.pattern.permute.xlu0 0
    %3478 = vperm.xlu0 %3477, %v3472
    %v3479 = vpop.permute.xlu0 %3478
    %v3481 = vmul.f32 %v3479, %v3434
    %v3482 = vmul.f32 %v3479, %v3435
    %3484 = vset.pattern.permute.xlu0 0
    %3485 = vperm.xlu0 %3484, %v3475
    %v3486 = vpop.permute.xlu0 %3485
    %v3488 = vadd.f32 %v3481, %v3486
    %v3489 = vadd.f32 %v3482, %v3486
    %v3490 = vmul.f32 %v3488, %v113
    %v3491 = vmul.f32 %v3489, %v114
    %v3492 = vsel %vm109, %v3490, -1e+30
    %v3493 = vsel %vm110, %v3491, -1e+30
    %v3494 = vsel %vm1812, %v3492, -inf
    %v3495 = vsel %vm1812, %v3493, -inf
    %v3496 = vmax.f32 %v3494, %v3495
    %3497 = vmax.xlane.f32.xlu0 %v3496
    %v3498 = vpop.xlane.xlu0 %3497
    %v3499 = vsub.f32 %v3492, %v3498
    %v3500 = vsub.f32 %v3493, %v3498
    %v3501 = vmul.f32 %v3499, 1.442695
    %v3502 = vpow.pop %v3501
    %v3503 = vmul.f32 %v3500, 1.442695
    %v3504 = vpow.pop %v3503
    %v3505 = vsel %vm1812, %v3502, 0.0
    %v3506 = vsel %vm1812, %v3504, 0.0
    %v3507 = vadd.f32 %v3505, %v3506
    %3508 = vadd.xlane.f32.xlu0 %v3507
    %v3509 = vpop.xlane.xlu0 %3508
    %v3510 = vrcp.pop %v3509
    %v3511 = vmul.f32 %v3502, %v3510
    %v3512 = vmul.f32 %v3504, %v3510
    %v3515 = vcombine.low %v3511, %v3512
    %v3517 = vunpack.c.l.s4 1966171168
    %v3518 = vunpack.c.0.s8 %v3517
    %v3519 = vlaneseq
    %v3520 = vshrl.u32 %v3519, 7
    %v3521 = vsub.s32 %v3518, %v3520
    %v3522 = vrot.slane %v3515, %v3521
    %v3524 = vunpack.c.l.s4 1966171168
    %v3525 = vunpack.c.0.s8 %v3524
    %v3526 = vlaneseq
    %v3527 = vshrl.u32 %v3526, 7
    %v3528 = vsub.s32 %v3525, %v3527
    %v3529 = vrot.slane %v3522, %v3528
    %s3531 = scalar_lea.vmem [#allocation2], 2
    %3532 = vst.msk [vmem:[%s3531] sm:$0x3] %vm1911, %v3529
    %v3533 = vlaneseq
    %v3534 = vshrl.u32 %v3533, 7
    %v3535 = vsub.s32 0, %v3534
    %v3536 = vrot.slane %v3511, %v3535
    %v3537 = vlaneseq
    %v3538 = vshrl.u32 %v3537, 7
    %v3539 = vsub.s32 0, %v3538
    %v3540 = vrot.slane %v3512, %v3539
    %v3543 = vcombine.low %v3536, %v3540
    %v3545 = vunpack.c.l.s4 1983009808
    %v3546 = vunpack.c.0.s8 %v3545
    %v3547 = vlaneseq
    %v3548 = vshrl.u32 %v3547, 7
    %v3549 = vsub.s32 %v3546, %v3548
    %v3550 = vrot.slane %v3543, %v3549
    %v3552 = vmul.f32 %v1962, %v3550
    %v3555 = vunpack.c.l.s4 1983009808
    %v3556 = vunpack.c.0.s8 %v3555
    %v3557 = vlaneseq
    %v3558 = vshrl.u32 %v3557, 7
    %v3559 = vsub.s32 %v3556, %v3558
    %v3560 = vrot.slane %v3552, %v3559
    %v3561 = vcombine.high %v3560, %v3560
    %v3564 = vsel %vm1944, %v3560, 0.0
    %v3565 = vsel %vm1944, %v3561, 0.0
    %v3566 = vadd.f32 %v3564, %v3565
    %3567 = vadd.xlane.f32.xlu0 %v3566
    %v3568 = vpop.xlane.xlu0 %3567
    %s3569 = scalar_lea.vmem %s4, 2
    %3570 = vst.msk [vmem:[%s3569] sm:$0x3] %vm1950, %v3568
    // Predicated region
    $region18: #{tpu_custom_call.1} parent=1 // pred_check
      _
    $region19: #{tpu_custom_call.1} parent=1 // pred_check_branch
      %3572 = sbr.rel (0) target = $region21
    $region20: #{tpu_custom_call.1} parent=1 // pred_region
      _
    $region21: #{tpu_custom_call.1} parent=1 // pred_fallthru
      _
    // Predicated region
    $region22: #{tpu_custom_call.1} parent=1 // pred_check
      _
    $region23: #{tpu_custom_call.1} parent=1 // pred_check_branch
      %3574 = sbr.rel (0) target = $region25
    $region24: #{tpu_custom_call.1} parent=1 // pred_region
      %s3576 = ssub.s32 64, 64
      %3577 = vsyncadd [#allocation3], %s3576
      %s3578 = sshll.u32 [#allocation2], 4
      %s3579 = int_to_ptr.vmem [resolvable:$true] %s3578
      %3584 = dma.vmem_to_hbm [thread:$0]  %s3579, 64, %s5, [#allocation3], 32, 32, 2
    $region25: #{tpu_custom_call.1} parent=1 // pred_fallthru
      _
    // Predicated region
    $region26: #{tpu_custom_call.1} parent=1 // pred_check
      _
    $region27: #{tpu_custom_call.1} parent=1 // pred_check_branch
      %3586 = sbr.rel (0) target = $region29
    $region28: #{tpu_custom_call.1} parent=1 // pred_region
      _
    $region29: #{tpu_custom_call.1} parent=1 // pred_fallthru
      _
    // Predicated region
    $region30: #{tpu_custom_call.1} parent=1 // pred_check
      _
    $region31: #{tpu_custom_call.1} parent=1 // pred_check_branch
      %3588 = sbr.rel (0) target = $region33
    $region32: #{tpu_custom_call.1} parent=1 // pred_region
      %3589 = dma.done [#allocation3], 64
    $region33: #{tpu_custom_call.1} parent=1 // pred_fallthru
      _
    %3590 = vsyncpa [#allocation3], 1

</llo_original>
